<compile_context>
chip_gen: v7x
topology: tpu7x:2x2x1
jax: 0.10.0
libtpu: 0.0.40
codegen_flags: <defaults>
</compile_context>

<pallas_src>
import functools

import numpy as np
import jax
import jax.numpy as jnp
from jax.experimental import pallas as pl
from jax.experimental.pallas import tpu as pltpu


# ---------------------------------------------------------------------------
# Fused decoder kernel (one grid step == one batch element)
# ---------------------------------------------------------------------------
def _decoder_kernel(z_ref, wd_ref, bd_ref,
                    p1_ref, w1_ref, b1_ref,
                    p2_ref, w2_ref, b2_ref,
                    p3_ref, w3_ref, b3_ref,
                    p4_ref, w4_ref, b4_ref,
                    pdrop_ref, o_ref, *, s_cols, stage_geom, negative_slope):
    # ---- Linear(n_z -> hidden) + ReLU, produced channel-major (Cin1, S) so
    #      PyTorch's .view(B, C, h, w) is free (f32 path). ----
    zc = z_ref[0]                                              # (n_z, 1) f32
    cols = [jnp.dot(wd_ref[s], zc, preferred_element_type=jnp.float32)
            for s in range(s_cols)]
    x0 = cols[0] if s_cols == 1 else jnp.concatenate(cols, axis=1)
    x0 = jnp.maximum(x0 + bd_ref[...], 0.0)                    # (Cin1, S)
    act = x0.astype(jnp.bfloat16)

    stage_refs = ((p1_ref, w1_ref, b1_ref), (p2_ref, w2_ref, b2_ref),
                  (p3_ref, w3_ref, b3_ref), (p4_ref, w4_ref, b4_ref))
    acc = None
    for si, ((p_ref, w_ref, b_ref), (wp, m_ext)) in enumerate(
            zip(stage_refs, stage_geom)):
        # Nearest-x2 upsample + zero-pad (+ previous-stage junk-column drop)
        # folded into one 0/1 selection matmul; stays in VMEM/vregs.
        xp = jnp.dot(act, p_ref[...],
                     preferred_element_type=jnp.float32)       # (Cin, L) f32
        # 3x3 conv as 9 accumulating per-tap matmuls (no im2col staging).
        acc = None
        for k in range(9):
            off = (k // 3) * wp + (k % 3)
            win = xp[:, off:off + m_ext].astype(jnp.bfloat16)  # (Cin, M_ext)
            part = jnp.dot(w_ref[k], win,
                           preferred_element_type=jnp.float32)  # (Cout, M_ext)
            acc = part if acc is None else acc + part
        acc = acc + b_ref[...]
        if si < 3:                                             # LeakyReLU(0.2)
            acc = jnp.where(acc > 0, acc, negative_slope * acc)
            act = acc.astype(jnp.bfloat16)

    # Drop the 2 junk columns per output row in-VMEM; lane-dense f32 store.
    out = jnp.dot(acc, pdrop_ref[...], preferred_element_type=jnp.float32)
    o_ref[0] = out.astype(o_ref.dtype)


# ---------------------------------------------------------------------------
# Host-side constant 0/1 selection matrices (upsample+pad fold / junk drop)
# ---------------------------------------------------------------------------
def _build_selection_matrices(out_size, size):
    h = w = out_size
    stride = w                      # stage-1 input is the true (h*w) layout
    p_mats, geom = [], []
    for _ in range(4):
        hu, wu = 2 * h, 2 * w
        hp, wp = hu + 2, wu + 2
        length = hp * wp + 2        # +2 slack so the last taps stay in-bounds
        m_prev = h * stride
        p = np.zeros((m_prev, length), np.float32)
        for py in range(1, hu + 1):
            for px in range(1, wu + 1):
                src = ((py - 1) // 2) * stride + (px - 1) // 2
                p[src, py * wp + px] = 1.0
        p_mats.append(p)
        geom.append((wp, hu * wp))
        h, w, stride = hu, wu, wp
    assert h == size and w == size
    # Drop the 2 junk columns per row of the final extended layout.
    pdrop = np.zeros((geom[-1][1], size * size), np.float32)
    for y in range(size):
        for x in range(size):
            pdrop[y * (size + 2) + x, y * size + x] = 1.0
    return p_mats, pdrop, geom


# ---------------------------------------------------------------------------
# Decoder forward (single fused pallas_call)
# ---------------------------------------------------------------------------
def decoder_forward(params, z, *, n_channels, n_filters, size):
    B, n_z = z.shape
    out_size = size // 16
    s_cols = out_size * out_size
    cin1 = n_filters * 8

    p_mats, pdrop, geom = _build_selection_matrices(out_size, size)

    # --- parameter prep (constant-folded under jit) ---
    wd, bd = params["dense"]                        # (n_z, hidden), (hidden,)
    wd_s = jnp.transpose(wd.reshape(n_z, cin1, s_cols), (2, 1, 0))
    wd_s = wd_s.astype(jnp.float32)                 # (S, Cin1, n_z)
    bd_cs = bd.reshape(cin1, s_cols).astype(jnp.float32)

    conv_ops = []
    for name in ("conv1", "conv2", "conv3", "conv4"):
        w, b = params[name]                         # HWIO (3,3,Cin,Cout)
        cout, cin = w.shape[3], w.shape[2]
        wt = jnp.transpose(w, (0, 1, 3, 2)).reshape(9, cout, cin)
        conv_ops.append((wt.astype(jnp.bfloat16),
                         b.reshape(cout, 1).astype(jnp.float32)))

    z3 = z.astype(jnp.float32).reshape(B, n_z, 1)

    operands = [z3, wd_s, bd_cs]
    in_specs = [
        pl.BlockSpec((1, n_z, 1), lambda b: (b, 0, 0)),
        pl.BlockSpec(wd_s.shape, lambda b: (0, 0, 0)),
        pl.BlockSpec(bd_cs.shape, lambda b: (0, 0)),
    ]
    for p_np, (wt, bc) in zip(p_mats, conv_ops):
        pj = jnp.asarray(p_np, jnp.bfloat16)
        operands += [pj, wt, bc]
        in_specs += [
            pl.BlockSpec(pj.shape, lambda b: (0, 0)),
            pl.BlockSpec(wt.shape, lambda b: (0, 0, 0)),
            pl.BlockSpec(bc.shape, lambda b: (0, 0)),
        ]
    pdrop_j = jnp.asarray(pdrop, jnp.float32)
    operands.append(pdrop_j)
    in_specs.append(pl.BlockSpec(pdrop_j.shape, lambda b: (0, 0)))

    out_cols = size * size
    out_specs = pl.BlockSpec((1, n_channels, out_cols), lambda b: (b, 0, 0))

    # VMEM budget derived from the actual operand footprint (v7x-safe cap).
    block_bytes = sum(int(np.prod(op.shape)) * op.dtype.itemsize
                      for op in operands)
    block_bytes += n_channels * out_cols * 4
    vmem_limit = int(min(32 * 1024 * 1024,
                         max(16 * 1024 * 1024, 4 * block_bytes)))

    flops = 2 * B * n_z * cin1 * s_cols
    for p_np, (wt, _), (_, m_ext) in zip(p_mats, conv_ops, geom):
        cout, cin = wt.shape[1], wt.shape[2]
        flops += 2 * B * (p_np.shape[0] * p_np.shape[1] * cin
                          + 9 * cout * cin * m_ext)
    flops += 2 * B * geom[-1][1] * out_cols * n_channels
    bytes_accessed = int(z3.size * 4 + block_bytes
                         + B * n_channels * out_cols * 4)

    kernel = functools.partial(_decoder_kernel, s_cols=s_cols,
                               stage_geom=tuple(geom), negative_slope=0.2)

    out = pl.pallas_call(
        kernel,
        out_shape=jax.ShapeDtypeStruct((B, n_channels, out_cols), jnp.float32),
        grid=(B,),
        in_specs=in_specs,
        out_specs=out_specs,
        compiler_params=pltpu.CompilerParams(
            dimension_semantics=("parallel",),
            vmem_limit_bytes=vmem_limit),
        cost_estimate=pl.CostEstimate(flops=int(flops), transcendentals=0,
                                      bytes_accessed=bytes_accessed),
    )(*operands)

    return out.reshape(B, n_channels, size, size)


# ---------------------------------------------------------------------------
# Pure-JAX reference (for a loose bf16-tolerance check)
# ---------------------------------------------------------------------------
def decoder_reference(params, z, *, n_channels, n_filters, size):
    out_size = size // 16
    B = z.shape[0]
    wd, bd = params["dense"]
    h = jnp.maximum(z @ wd + bd, 0.0)
    x = h.reshape(B, n_filters * 8, out_size, out_size)
    for i, name in enumerate(("conv1", "conv2", "conv3", "conv4")):
        w, b = params[name]
        x = jnp.repeat(jnp.repeat(x, 2, axis=2), 2, axis=3)
        x = jax.lax.conv_general_dilated(
            x, w, window_strides=(1, 1), padding="SAME",
            dimension_numbers=("NCHW", "HWIO", "NCHW"))
        x = x + b.reshape(1, -1, 1, 1)
        if i < 3:
            x = jnp.where(x > 0, x, 0.2 * x)
    return x


# ---------------------------------------------------------------------------
# Parameter init (deterministic, PyTorch-default-like uniform fan-in scaling)
# ---------------------------------------------------------------------------
def init_params(key, n_channels, n_filters, n_z, size):
    out_size = size // 16
    hidden = n_filters * 8 * out_size * out_size
    keys = jax.random.split(key, 5)

    def linear(k, fan_in, fan_out):
        bound = 1.0 / float(fan_in) ** 0.5
        kw, kb = jax.random.split(k)
        w = jax.random.uniform(kw, (fan_in, fan_out), jnp.float32, -bound, bound)
        b = jax.random.uniform(kb, (fan_out,), jnp.float32, -bound, bound)
        return w, b

    def conv(k, cin, cout):
        bound = 1.0 / float(cin * 9) ** 0.5
        kw, kb = jax.random.split(k)
        # stored HWIO (3, 3, Cin, Cout); PyTorch stores (Cout, Cin, 3, 3)
        w = jax.random.uniform(kw, (3, 3, cin, cout), jnp.float32, -bound, bound)
        b = jax.random.uniform(kb, (cout,), jnp.float32, -bound, bound)
        return w, b

    return {
        "dense": linear(keys[0], n_z, hidden),
        "conv1": conv(keys[1], n_filters * 8, n_filters * 4),
        "conv2": conv(keys[2], n_filters * 4, n_filters * 2),
        "conv3": conv(keys[3], n_filters * 2, n_filters),
        "conv4": conv(keys[4], n_filters, n_channels),
    }


# ---------------------------------------------------------------------------
if __name__ == "__main__":
    # small, MNIST-like config
    n_channels, n_filters, n_z, size = 1, 4, 8, 16
    batch = 2

    key = jax.random.PRNGKey(0)
    k_param, k_z = jax.random.split(key)
    params = init_params(k_param, n_channels, n_filters, n_z, size)
    z = jax.random.normal(k_z, (batch, n_z), jnp.float32)

    fwd = jax.jit(functools.partial(decoder_forward, n_channels=n_channels,
                                    n_filters=n_filters, size=size))
    out = jax.block_until_ready(fwd(params, z))

    assert out.shape == (batch, n_channels, size, size), out.shape
    assert out.dtype == jnp.float32

    # Loose check vs the f32 reference (conv path uses bf16 MXU operands).
    ref = jax.jit(functools.partial(decoder_reference, n_channels=n_channels,
                                    n_filters=n_filters, size=size))(params, z)
    ref = jax.block_until_ready(ref)
    err = float(jnp.max(jnp.abs(out - ref)))
    tol = 2e-2 + 2e-2 * float(jnp.max(jnp.abs(ref)))
    assert err <= tol, (err, tol)

    print("KERNEL_OK")
</pallas_src>

<mosaic_0001>
module attributes {stable_mosaic.version = 11 : i64} {
  func.func @_decoder_kernel(%arg0: i32, %arg1: memref<1x8x1xf32, #tpu.memory_space<vmem>>, %arg2: memref<1x32x8xf32, #tpu.memory_space<vmem>>, %arg3: memref<32x1xf32, #tpu.memory_space<vmem>>, %arg4: memref<1x18xbf16, #tpu.memory_space<vmem>>, %arg5: memref<9x16x32xbf16, #tpu.memory_space<vmem>>, %arg6: memref<16x1xf32, #tpu.memory_space<vmem>>, %arg7: memref<8x38xbf16, #tpu.memory_space<vmem>>, %arg8: memref<9x8x16xbf16, #tpu.memory_space<vmem>>, %arg9: memref<8x1xf32, #tpu.memory_space<vmem>>, %arg10: memref<24x102xbf16, #tpu.memory_space<vmem>>, %arg11: memref<9x4x8xbf16, #tpu.memory_space<vmem>>, %arg12: memref<4x1xf32, #tpu.memory_space<vmem>>, %arg13: memref<80x326xbf16, #tpu.memory_space<vmem>>, %arg14: memref<9x1x4xbf16, #tpu.memory_space<vmem>>, %arg15: memref<1x1xf32, #tpu.memory_space<vmem>>, %arg16: memref<288x256xf32, #tpu.memory_space<vmem>>, %arg17: memref<1x1x256xf32, #tpu.memory_space<vmem>>) attributes {dimension_semantics = [#tpu.dimension_semantics<parallel>], iteration_bounds = array<i64: 2>, scalar_prefetch = 0 : i64, scratch_operands = 0 : i64, tpu.core_type = #tpu.core_type<tc>, window_params = [{transform_indices = @transform_0, window_bounds = array<i64: 1, 8, 1>}, {pipeline_mode = #tpu.pipeline_mode<synchronous>, transform_indices = @transform_1, window_bounds = array<i64: 1, 32, 8>}, {pipeline_mode = #tpu.pipeline_mode<synchronous>, transform_indices = @transform_2, window_bounds = array<i64: 32, 1>}, {pipeline_mode = #tpu.pipeline_mode<synchronous>, transform_indices = @transform_3, window_bounds = array<i64: 1, 18>}, {pipeline_mode = #tpu.pipeline_mode<synchronous>, transform_indices = @transform_4, window_bounds = array<i64: 9, 16, 32>}, {pipeline_mode = #tpu.pipeline_mode<synchronous>, transform_indices = @transform_5, window_bounds = array<i64: 16, 1>}, {pipeline_mode = #tpu.pipeline_mode<synchronous>, transform_indices = @transform_6, window_bounds = array<i64: 8, 38>}, {pipeline_mode = #tpu.pipeline_mode<synchronous>, transform_indices = @transform_7, window_bounds = array<i64: 9, 8, 16>}, {pipeline_mode = #tpu.pipeline_mode<synchronous>, transform_indices = @transform_8, window_bounds = array<i64: 8, 1>}, {pipeline_mode = #tpu.pipeline_mode<synchronous>, transform_indices = @transform_9, window_bounds = array<i64: 24, 102>}, {pipeline_mode = #tpu.pipeline_mode<synchronous>, transform_indices = @transform_10, window_bounds = array<i64: 9, 4, 8>}, {pipeline_mode = #tpu.pipeline_mode<synchronous>, transform_indices = @transform_11, window_bounds = array<i64: 4, 1>}, {pipeline_mode = #tpu.pipeline_mode<synchronous>, transform_indices = @transform_12, window_bounds = array<i64: 80, 326>}, {pipeline_mode = #tpu.pipeline_mode<synchronous>, transform_indices = @transform_13, window_bounds = array<i64: 9, 1, 4>}, {pipeline_mode = #tpu.pipeline_mode<synchronous>, transform_indices = @transform_14, window_bounds = array<i64: 1, 1>}, {pipeline_mode = #tpu.pipeline_mode<synchronous>, transform_indices = @transform_15, window_bounds = array<i64: 288, 256>}, {transform_indices = @transform_16, window_bounds = array<i64: 1, 1, 256>}]} {
    %c0 = arith.constant 0 : index
    %c0_0 = arith.constant 0 : index
    %c0_1 = arith.constant 0 : index
    %0 = vector.load %arg1[%c0, %c0_0, %c0_1] : memref<1x8x1xf32, #tpu.memory_space<vmem>>, vector<1x8x1xf32>
    %1 = vector.shape_cast %0 : vector<1x8x1xf32> to vector<8x1xf32>
    %c0_2 = arith.constant 0 : index
    %c0_3 = arith.constant 0 : index
    %c0_4 = arith.constant 0 : index
    %2 = vector.load %arg2[%c0_2, %c0_3, %c0_4] : memref<1x32x8xf32, #tpu.memory_space<vmem>>, vector<1x32x8xf32>
    %3 = vector.shape_cast %2 : vector<1x32x8xf32> to vector<32x8xf32>
    %cst = arith.constant dense<0.000000e+00> : vector<32x1xf32>
    %4 = tpu.matmul %3, %1, %cst {dimension_numbers = #tpu.dot_dimension_numbers<[1], [0], [0], [1], [0, 0, 1, 1], [], []>} : vector<32x8xf32>, vector<8x1xf32>, vector<32x1xf32> -> vector<32x1xf32>
    %c0_5 = arith.constant 0 : index
    %c0_6 = arith.constant 0 : index
    %5 = vector.load %arg3[%c0_5, %c0_6] : memref<32x1xf32, #tpu.memory_space<vmem>>, vector<32x1xf32>
    %6 = arith.addf %4, %5 : vector<32x1xf32>
    %cst_7 = arith.constant 0.000000e+00 : f32
    %7 = vector.broadcast %cst_7 : f32 to vector<32x1xf32>
    %8 = arith.maximumf %6, %7 : vector<32x1xf32>
    %9 = arith.truncf %8 : vector<32x1xf32> to vector<32x1xbf16>
    %c0_8 = arith.constant 0 : index
    %c0_9 = arith.constant 0 : index
    %10 = vector.load %arg4[%c0_8, %c0_9] : memref<1x18xbf16, #tpu.memory_space<vmem>>, vector<1x18xbf16>
    %cst_10 = arith.constant dense<0.000000e+00> : vector<32x18xf32>
    %11 = tpu.matmul %9, %10, %cst_10 {dimension_numbers = #tpu.dot_dimension_numbers<[1], [0], [0], [1], [0, 0, 1, 1], [], []>} : vector<32x1xbf16>, vector<1x18xbf16>, vector<32x18xf32> -> vector<32x18xf32>
    %12 = vector.extract_strided_slice %11 {offsets = [0, 0], sizes = [32, 8], strides = [1, 1]} : vector<32x18xf32> to vector<32x8xf32>
    %13 = arith.truncf %12 : vector<32x8xf32> to vector<32x8xbf16>
    %c0_11 = arith.constant 0 : index
    %c0_12 = arith.constant 0 : index
    %c0_13 = arith.constant 0 : index
    %14 = vector.load %arg5[%c0_11, %c0_12, %c0_13] : memref<9x16x32xbf16, #tpu.memory_space<vmem>>, vector<1x16x32xbf16>
    %15 = vector.shape_cast %14 : vector<1x16x32xbf16> to vector<16x32xbf16>
    %cst_14 = arith.constant dense<0.000000e+00> : vector<16x8xf32>
    %16 = tpu.matmul %15, %13, %cst_14 {dimension_numbers = #tpu.dot_dimension_numbers<[1], [0], [0], [1], [0, 0, 1, 1], [], []>} : vector<16x32xbf16>, vector<32x8xbf16>, vector<16x8xf32> -> vector<16x8xf32>
    %17 = vector.extract_strided_slice %11 {offsets = [0, 1], sizes = [32, 8], strides = [1, 1]} : vector<32x18xf32> to vector<32x8xf32>
    %18 = arith.truncf %17 : vector<32x8xf32> to vector<32x8xbf16>
    %c1 = arith.constant 1 : index
    %c0_15 = arith.constant 0 : index
    %c0_16 = arith.constant 0 : index
    %19 = vector.load %arg5[%c1, %c0_15, %c0_16] : memref<9x16x32xbf16, #tpu.memory_space<vmem>>, vector<1x16x32xbf16>
    %20 = vector.shape_cast %19 : vector<1x16x32xbf16> to vector<16x32xbf16>
    %cst_17 = arith.constant dense<0.000000e+00> : vector<16x8xf32>
    %21 = tpu.matmul %20, %18, %cst_17 {dimension_numbers = #tpu.dot_dimension_numbers<[1], [0], [0], [1], [0, 0, 1, 1], [], []>} : vector<16x32xbf16>, vector<32x8xbf16>, vector<16x8xf32> -> vector<16x8xf32>
    %22 = arith.addf %16, %21 : vector<16x8xf32>
    %23 = vector.extract_strided_slice %11 {offsets = [0, 2], sizes = [32, 8], strides = [1, 1]} : vector<32x18xf32> to vector<32x8xf32>
    %24 = arith.truncf %23 : vector<32x8xf32> to vector<32x8xbf16>
    %c2 = arith.constant 2 : index
    %c0_18 = arith.constant 0 : index
    %c0_19 = arith.constant 0 : index
    %25 = vector.load %arg5[%c2, %c0_18, %c0_19] : memref<9x16x32xbf16, #tpu.memory_space<vmem>>, vector<1x16x32xbf16>
    %26 = vector.shape_cast %25 : vector<1x16x32xbf16> to vector<16x32xbf16>
    %cst_20 = arith.constant dense<0.000000e+00> : vector<16x8xf32>
    %27 = tpu.matmul %26, %24, %cst_20 {dimension_numbers = #tpu.dot_dimension_numbers<[1], [0], [0], [1], [0, 0, 1, 1], [], []>} : vector<16x32xbf16>, vector<32x8xbf16>, vector<16x8xf32> -> vector<16x8xf32>
    %28 = arith.addf %22, %27 : vector<16x8xf32>
    %29 = vector.extract_strided_slice %11 {offsets = [0, 4], sizes = [32, 8], strides = [1, 1]} : vector<32x18xf32> to vector<32x8xf32>
    %30 = arith.truncf %29 : vector<32x8xf32> to vector<32x8xbf16>
    %c3 = arith.constant 3 : index
    %c0_21 = arith.constant 0 : index
    %c0_22 = arith.constant 0 : index
    %31 = vector.load %arg5[%c3, %c0_21, %c0_22] : memref<9x16x32xbf16, #tpu.memory_space<vmem>>, vector<1x16x32xbf16>
    %32 = vector.shape_cast %31 : vector<1x16x32xbf16> to vector<16x32xbf16>
    %cst_23 = arith.constant dense<0.000000e+00> : vector<16x8xf32>
    %33 = tpu.matmul %32, %30, %cst_23 {dimension_numbers = #tpu.dot_dimension_numbers<[1], [0], [0], [1], [0, 0, 1, 1], [], []>} : vector<16x32xbf16>, vector<32x8xbf16>, vector<16x8xf32> -> vector<16x8xf32>
    %34 = arith.addf %28, %33 : vector<16x8xf32>
    %35 = vector.extract_strided_slice %11 {offsets = [0, 5], sizes = [32, 8], strides = [1, 1]} : vector<32x18xf32> to vector<32x8xf32>
    %36 = arith.truncf %35 : vector<32x8xf32> to vector<32x8xbf16>
    %c4 = arith.constant 4 : index
    %c0_24 = arith.constant 0 : index
    %c0_25 = arith.constant 0 : index
    %37 = vector.load %arg5[%c4, %c0_24, %c0_25] : memref<9x16x32xbf16, #tpu.memory_space<vmem>>, vector<1x16x32xbf16>
    %38 = vector.shape_cast %37 : vector<1x16x32xbf16> to vector<16x32xbf16>
    %cst_26 = arith.constant dense<0.000000e+00> : vector<16x8xf32>
    %39 = tpu.matmul %38, %36, %cst_26 {dimension_numbers = #tpu.dot_dimension_numbers<[1], [0], [0], [1], [0, 0, 1, 1], [], []>} : vector<16x32xbf16>, vector<32x8xbf16>, vector<16x8xf32> -> vector<16x8xf32>
    %40 = arith.addf %34, %39 : vector<16x8xf32>
    %41 = vector.extract_strided_slice %11 {offsets = [0, 6], sizes = [32, 8], strides = [1, 1]} : vector<32x18xf32> to vector<32x8xf32>
    %42 = arith.truncf %41 : vector<32x8xf32> to vector<32x8xbf16>
    %c5 = arith.constant 5 : index
    %c0_27 = arith.constant 0 : index
    %c0_28 = arith.constant 0 : index
    %43 = vector.load %arg5[%c5, %c0_27, %c0_28] : memref<9x16x32xbf16, #tpu.memory_space<vmem>>, vector<1x16x32xbf16>
    %44 = vector.shape_cast %43 : vector<1x16x32xbf16> to vector<16x32xbf16>
    %cst_29 = arith.constant dense<0.000000e+00> : vector<16x8xf32>
    %45 = tpu.matmul %44, %42, %cst_29 {dimension_numbers = #tpu.dot_dimension_numbers<[1], [0], [0], [1], [0, 0, 1, 1], [], []>} : vector<16x32xbf16>, vector<32x8xbf16>, vector<16x8xf32> -> vector<16x8xf32>
    %46 = arith.addf %40, %45 : vector<16x8xf32>
    %47 = vector.extract_strided_slice %11 {offsets = [0, 8], sizes = [32, 8], strides = [1, 1]} : vector<32x18xf32> to vector<32x8xf32>
    %48 = arith.truncf %47 : vector<32x8xf32> to vector<32x8xbf16>
    %c6 = arith.constant 6 : index
    %c0_30 = arith.constant 0 : index
    %c0_31 = arith.constant 0 : index
    %49 = vector.load %arg5[%c6, %c0_30, %c0_31] : memref<9x16x32xbf16, #tpu.memory_space<vmem>>, vector<1x16x32xbf16>
    %50 = vector.shape_cast %49 : vector<1x16x32xbf16> to vector<16x32xbf16>
    %cst_32 = arith.constant dense<0.000000e+00> : vector<16x8xf32>
    %51 = tpu.matmul %50, %48, %cst_32 {dimension_numbers = #tpu.dot_dimension_numbers<[1], [0], [0], [1], [0, 0, 1, 1], [], []>} : vector<16x32xbf16>, vector<32x8xbf16>, vector<16x8xf32> -> vector<16x8xf32>
    %52 = arith.addf %46, %51 : vector<16x8xf32>
    %53 = vector.extract_strided_slice %11 {offsets = [0, 9], sizes = [32, 8], strides = [1, 1]} : vector<32x18xf32> to vector<32x8xf32>
    %54 = arith.truncf %53 : vector<32x8xf32> to vector<32x8xbf16>
    %c7 = arith.constant 7 : index
    %c0_33 = arith.constant 0 : index
    %c0_34 = arith.constant 0 : index
    %55 = vector.load %arg5[%c7, %c0_33, %c0_34] : memref<9x16x32xbf16, #tpu.memory_space<vmem>>, vector<1x16x32xbf16>
    %56 = vector.shape_cast %55 : vector<1x16x32xbf16> to vector<16x32xbf16>
    %cst_35 = arith.constant dense<0.000000e+00> : vector<16x8xf32>
    %57 = tpu.matmul %56, %54, %cst_35 {dimension_numbers = #tpu.dot_dimension_numbers<[1], [0], [0], [1], [0, 0, 1, 1], [], []>} : vector<16x32xbf16>, vector<32x8xbf16>, vector<16x8xf32> -> vector<16x8xf32>
    %58 = arith.addf %52, %57 : vector<16x8xf32>
    %59 = vector.extract_strided_slice %11 {offsets = [0, 10], sizes = [32, 8], strides = [1, 1]} : vector<32x18xf32> to vector<32x8xf32>
    %60 = arith.truncf %59 : vector<32x8xf32> to vector<32x8xbf16>
    %c8 = arith.constant 8 : index
    %c0_36 = arith.constant 0 : index
    %c0_37 = arith.constant 0 : index
    %61 = vector.load %arg5[%c8, %c0_36, %c0_37] : memref<9x16x32xbf16, #tpu.memory_space<vmem>>, vector<1x16x32xbf16>
    %62 = vector.shape_cast %61 : vector<1x16x32xbf16> to vector<16x32xbf16>
    %cst_38 = arith.constant dense<0.000000e+00> : vector<16x8xf32>
    %63 = tpu.matmul %62, %60, %cst_38 {dimension_numbers = #tpu.dot_dimension_numbers<[1], [0], [0], [1], [0, 0, 1, 1], [], []>} : vector<16x32xbf16>, vector<32x8xbf16>, vector<16x8xf32> -> vector<16x8xf32>
    %64 = arith.addf %58, %63 : vector<16x8xf32>
    %c0_39 = arith.constant 0 : index
    %c0_40 = arith.constant 0 : index
    %65 = vector.load %arg6[%c0_39, %c0_40] : memref<16x1xf32, #tpu.memory_space<vmem>>, vector<16x1xf32>
    %66 = vector.broadcast %65 : vector<16x1xf32> to vector<16x8xf32>
    %67 = arith.addf %64, %66 : vector<16x8xf32>
    %cst_41 = arith.constant 0.000000e+00 : f32
    %68 = vector.broadcast %cst_41 : f32 to vector<16x8xf32>
    %69 = arith.cmpf ogt, %67, %68 : vector<16x8xf32>
    %cst_42 = arith.constant 2.000000e-01 : f32
    %70 = vector.broadcast %cst_42 : f32 to vector<16x8xf32>
    %71 = arith.mulf %70, %67 : vector<16x8xf32>
    %72 = arith.select %69, %67, %71 : vector<16x8xi1>, vector<16x8xf32>
    %73 = arith.truncf %72 : vector<16x8xf32> to vector<16x8xbf16>
    %c0_43 = arith.constant 0 : index
    %c0_44 = arith.constant 0 : index
    %74 = vector.load %arg7[%c0_43, %c0_44] : memref<8x38xbf16, #tpu.memory_space<vmem>>, vector<8x38xbf16>
    %cst_45 = arith.constant dense<0.000000e+00> : vector<16x38xf32>
    %75 = tpu.matmul %73, %74, %cst_45 {dimension_numbers = #tpu.dot_dimension_numbers<[1], [0], [0], [1], [0, 0, 1, 1], [], []>} : vector<16x8xbf16>, vector<8x38xbf16>, vector<16x38xf32> -> vector<16x38xf32>
    %76 = vector.extract_strided_slice %75 {offsets = [0, 0], sizes = [16, 24], strides = [1, 1]} : vector<16x38xf32> to vector<16x24xf32>
    %77 = arith.truncf %76 : vector<16x24xf32> to vector<16x24xbf16>
    %c0_46 = arith.constant 0 : index
    %c0_47 = arith.constant 0 : index
    %c0_48 = arith.constant 0 : index
    %78 = vector.load %arg8[%c0_46, %c0_47, %c0_48] : memref<9x8x16xbf16, #tpu.memory_space<vmem>>, vector<1x8x16xbf16>
    %79 = vector.shape_cast %78 : vector<1x8x16xbf16> to vector<8x16xbf16>
    %cst_49 = arith.constant dense<0.000000e+00> : vector<8x24xf32>
    %80 = tpu.matmul %79, %77, %cst_49 {dimension_numbers = #tpu.dot_dimension_numbers<[1], [0], [0], [1], [0, 0, 1, 1], [], []>} : vector<8x16xbf16>, vector<16x24xbf16>, vector<8x24xf32> -> vector<8x24xf32>
    %81 = vector.extract_strided_slice %75 {offsets = [0, 1], sizes = [16, 24], strides = [1, 1]} : vector<16x38xf32> to vector<16x24xf32>
    %82 = arith.truncf %81 : vector<16x24xf32> to vector<16x24xbf16>
    %c1_50 = arith.constant 1 : index
    %c0_51 = arith.constant 0 : index
    %c0_52 = arith.constant 0 : index
    %83 = vector.load %arg8[%c1_50, %c0_51, %c0_52] : memref<9x8x16xbf16, #tpu.memory_space<vmem>>, vector<1x8x16xbf16>
    %84 = vector.shape_cast %83 : vector<1x8x16xbf16> to vector<8x16xbf16>
    %cst_53 = arith.constant dense<0.000000e+00> : vector<8x24xf32>
    %85 = tpu.matmul %84, %82, %cst_53 {dimension_numbers = #tpu.dot_dimension_numbers<[1], [0], [0], [1], [0, 0, 1, 1], [], []>} : vector<8x16xbf16>, vector<16x24xbf16>, vector<8x24xf32> -> vector<8x24xf32>
    %86 = arith.addf %80, %85 : vector<8x24xf32>
    %87 = vector.extract_strided_slice %75 {offsets = [0, 2], sizes = [16, 24], strides = [1, 1]} : vector<16x38xf32> to vector<16x24xf32>
    %88 = arith.truncf %87 : vector<16x24xf32> to vector<16x24xbf16>
    %c2_54 = arith.constant 2 : index
    %c0_55 = arith.constant 0 : index
    %c0_56 = arith.constant 0 : index
    %89 = vector.load %arg8[%c2_54, %c0_55, %c0_56] : memref<9x8x16xbf16, #tpu.memory_space<vmem>>, vector<1x8x16xbf16>
    %90 = vector.shape_cast %89 : vector<1x8x16xbf16> to vector<8x16xbf16>
    %cst_57 = arith.constant dense<0.000000e+00> : vector<8x24xf32>
    %91 = tpu.matmul %90, %88, %cst_57 {dimension_numbers = #tpu.dot_dimension_numbers<[1], [0], [0], [1], [0, 0, 1, 1], [], []>} : vector<8x16xbf16>, vector<16x24xbf16>, vector<8x24xf32> -> vector<8x24xf32>
    %92 = arith.addf %86, %91 : vector<8x24xf32>
    %93 = vector.extract_strided_slice %75 {offsets = [0, 6], sizes = [16, 24], strides = [1, 1]} : vector<16x38xf32> to vector<16x24xf32>
    %94 = arith.truncf %93 : vector<16x24xf32> to vector<16x24xbf16>
    %c3_58 = arith.constant 3 : index
    %c0_59 = arith.constant 0 : index
    %c0_60 = arith.constant 0 : index
    %95 = vector.load %arg8[%c3_58, %c0_59, %c0_60] : memref<9x8x16xbf16, #tpu.memory_space<vmem>>, vector<1x8x16xbf16>
    %96 = vector.shape_cast %95 : vector<1x8x16xbf16> to vector<8x16xbf16>
    %cst_61 = arith.constant dense<0.000000e+00> : vector<8x24xf32>
    %97 = tpu.matmul %96, %94, %cst_61 {dimension_numbers = #tpu.dot_dimension_numbers<[1], [0], [0], [1], [0, 0, 1, 1], [], []>} : vector<8x16xbf16>, vector<16x24xbf16>, vector<8x24xf32> -> vector<8x24xf32>
    %98 = arith.addf %92, %97 : vector<8x24xf32>
    %99 = vector.extract_strided_slice %75 {offsets = [0, 7], sizes = [16, 24], strides = [1, 1]} : vector<16x38xf32> to vector<16x24xf32>
    %100 = arith.truncf %99 : vector<16x24xf32> to vector<16x24xbf16>
    %c4_62 = arith.constant 4 : index
    %c0_63 = arith.constant 0 : index
    %c0_64 = arith.constant 0 : index
    %101 = vector.load %arg8[%c4_62, %c0_63, %c0_64] : memref<9x8x16xbf16, #tpu.memory_space<vmem>>, vector<1x8x16xbf16>
    %102 = vector.shape_cast %101 : vector<1x8x16xbf16> to vector<8x16xbf16>
    %cst_65 = arith.constant dense<0.000000e+00> : vector<8x24xf32>
    %103 = tpu.matmul %102, %100, %cst_65 {dimension_numbers = #tpu.dot_dimension_numbers<[1], [0], [0], [1], [0, 0, 1, 1], [], []>} : vector<8x16xbf16>, vector<16x24xbf16>, vector<8x24xf32> -> vector<8x24xf32>
    %104 = arith.addf %98, %103 : vector<8x24xf32>
    %105 = vector.extract_strided_slice %75 {offsets = [0, 8], sizes = [16, 24], strides = [1, 1]} : vector<16x38xf32> to vector<16x24xf32>
    %106 = arith.truncf %105 : vector<16x24xf32> to vector<16x24xbf16>
    %c5_66 = arith.constant 5 : index
    %c0_67 = arith.constant 0 : index
    %c0_68 = arith.constant 0 : index
    %107 = vector.load %arg8[%c5_66, %c0_67, %c0_68] : memref<9x8x16xbf16, #tpu.memory_space<vmem>>, vector<1x8x16xbf16>
    %108 = vector.shape_cast %107 : vector<1x8x16xbf16> to vector<8x16xbf16>
    %cst_69 = arith.constant dense<0.000000e+00> : vector<8x24xf32>
    %109 = tpu.matmul %108, %106, %cst_69 {dimension_numbers = #tpu.dot_dimension_numbers<[1], [0], [0], [1], [0, 0, 1, 1], [], []>} : vector<8x16xbf16>, vector<16x24xbf16>, vector<8x24xf32> -> vector<8x24xf32>
    %110 = arith.addf %104, %109 : vector<8x24xf32>
    %111 = vector.extract_strided_slice %75 {offsets = [0, 12], sizes = [16, 24], strides = [1, 1]} : vector<16x38xf32> to vector<16x24xf32>
    %112 = arith.truncf %111 : vector<16x24xf32> to vector<16x24xbf16>
    %c6_70 = arith.constant 6 : index
    %c0_71 = arith.constant 0 : index
    %c0_72 = arith.constant 0 : index
    %113 = vector.load %arg8[%c6_70, %c0_71, %c0_72] : memref<9x8x16xbf16, #tpu.memory_space<vmem>>, vector<1x8x16xbf16>
    %114 = vector.shape_cast %113 : vector<1x8x16xbf16> to vector<8x16xbf16>
    %cst_73 = arith.constant dense<0.000000e+00> : vector<8x24xf32>
    %115 = tpu.matmul %114, %112, %cst_73 {dimension_numbers = #tpu.dot_dimension_numbers<[1], [0], [0], [1], [0, 0, 1, 1], [], []>} : vector<8x16xbf16>, vector<16x24xbf16>, vector<8x24xf32> -> vector<8x24xf32>
    %116 = arith.addf %110, %115 : vector<8x24xf32>
    %117 = vector.extract_strided_slice %75 {offsets = [0, 13], sizes = [16, 24], strides = [1, 1]} : vector<16x38xf32> to vector<16x24xf32>
    %118 = arith.truncf %117 : vector<16x24xf32> to vector<16x24xbf16>
    %c7_74 = arith.constant 7 : index
    %c0_75 = arith.constant 0 : index
    %c0_76 = arith.constant 0 : index
    %119 = vector.load %arg8[%c7_74, %c0_75, %c0_76] : memref<9x8x16xbf16, #tpu.memory_space<vmem>>, vector<1x8x16xbf16>
    %120 = vector.shape_cast %119 : vector<1x8x16xbf16> to vector<8x16xbf16>
    %cst_77 = arith.constant dense<0.000000e+00> : vector<8x24xf32>
    %121 = tpu.matmul %120, %118, %cst_77 {dimension_numbers = #tpu.dot_dimension_numbers<[1], [0], [0], [1], [0, 0, 1, 1], [], []>} : vector<8x16xbf16>, vector<16x24xbf16>, vector<8x24xf32> -> vector<8x24xf32>
    %122 = arith.addf %116, %121 : vector<8x24xf32>
    %123 = vector.extract_strided_slice %75 {offsets = [0, 14], sizes = [16, 24], strides = [1, 1]} : vector<16x38xf32> to vector<16x24xf32>
    %124 = arith.truncf %123 : vector<16x24xf32> to vector<16x24xbf16>
    %c8_78 = arith.constant 8 : index
    %c0_79 = arith.constant 0 : index
    %c0_80 = arith.constant 0 : index
    %125 = vector.load %arg8[%c8_78, %c0_79, %c0_80] : memref<9x8x16xbf16, #tpu.memory_space<vmem>>, vector<1x8x16xbf16>
    %126 = vector.shape_cast %125 : vector<1x8x16xbf16> to vector<8x16xbf16>
    %cst_81 = arith.constant dense<0.000000e+00> : vector<8x24xf32>
    %127 = tpu.matmul %126, %124, %cst_81 {dimension_numbers = #tpu.dot_dimension_numbers<[1], [0], [0], [1], [0, 0, 1, 1], [], []>} : vector<8x16xbf16>, vector<16x24xbf16>, vector<8x24xf32> -> vector<8x24xf32>
    %128 = arith.addf %122, %127 : vector<8x24xf32>
    %c0_82 = arith.constant 0 : index
    %c0_83 = arith.constant 0 : index
    %129 = vector.load %arg9[%c0_82, %c0_83] : memref<8x1xf32, #tpu.memory_space<vmem>>, vector<8x1xf32>
    %130 = vector.broadcast %129 : vector<8x1xf32> to vector<8x24xf32>
    %131 = arith.addf %128, %130 : vector<8x24xf32>
    %cst_84 = arith.constant 0.000000e+00 : f32
    %132 = vector.broadcast %cst_84 : f32 to vector<8x24xf32>
    %133 = arith.cmpf ogt, %131, %132 : vector<8x24xf32>
    %cst_85 = arith.constant 2.000000e-01 : f32
    %134 = vector.broadcast %cst_85 : f32 to vector<8x24xf32>
    %135 = arith.mulf %134, %131 : vector<8x24xf32>
    %136 = arith.select %133, %131, %135 : vector<8x24xi1>, vector<8x24xf32>
    %137 = arith.truncf %136 : vector<8x24xf32> to vector<8x24xbf16>
    %c0_86 = arith.constant 0 : index
    %c0_87 = arith.constant 0 : index
    %138 = vector.load %arg10[%c0_86, %c0_87] : memref<24x102xbf16, #tpu.memory_space<vmem>>, vector<24x102xbf16>
    %cst_88 = arith.constant dense<0.000000e+00> : vector<8x102xf32>
    %139 = tpu.matmul %137, %138, %cst_88 {dimension_numbers = #tpu.dot_dimension_numbers<[1], [0], [0], [1], [0, 0, 1, 1], [], []>} : vector<8x24xbf16>, vector<24x102xbf16>, vector<8x102xf32> -> vector<8x102xf32>
    %140 = vector.extract_strided_slice %139 {offsets = [0, 0], sizes = [8, 80], strides = [1, 1]} : vector<8x102xf32> to vector<8x80xf32>
    %141 = arith.truncf %140 : vector<8x80xf32> to vector<8x80xbf16>
    %c0_89 = arith.constant 0 : index
    %c0_90 = arith.constant 0 : index
    %c0_91 = arith.constant 0 : index
    %142 = vector.load %arg11[%c0_89, %c0_90, %c0_91] : memref<9x4x8xbf16, #tpu.memory_space<vmem>>, vector<1x4x8xbf16>
    %143 = vector.shape_cast %142 : vector<1x4x8xbf16> to vector<4x8xbf16>
    %cst_92 = arith.constant dense<0.000000e+00> : vector<4x80xf32>
    %144 = tpu.matmul %143, %141, %cst_92 {dimension_numbers = #tpu.dot_dimension_numbers<[1], [0], [0], [1], [0, 0, 1, 1], [], []>} : vector<4x8xbf16>, vector<8x80xbf16>, vector<4x80xf32> -> vector<4x80xf32>
    %145 = vector.extract_strided_slice %139 {offsets = [0, 1], sizes = [8, 80], strides = [1, 1]} : vector<8x102xf32> to vector<8x80xf32>
    %146 = arith.truncf %145 : vector<8x80xf32> to vector<8x80xbf16>
    %c1_93 = arith.constant 1 : index
    %c0_94 = arith.constant 0 : index
    %c0_95 = arith.constant 0 : index
    %147 = vector.load %arg11[%c1_93, %c0_94, %c0_95] : memref<9x4x8xbf16, #tpu.memory_space<vmem>>, vector<1x4x8xbf16>
    %148 = vector.shape_cast %147 : vector<1x4x8xbf16> to vector<4x8xbf16>
    %cst_96 = arith.constant dense<0.000000e+00> : vector<4x80xf32>
    %149 = tpu.matmul %148, %146, %cst_96 {dimension_numbers = #tpu.dot_dimension_numbers<[1], [0], [0], [1], [0, 0, 1, 1], [], []>} : vector<4x8xbf16>, vector<8x80xbf16>, vector<4x80xf32> -> vector<4x80xf32>
    %150 = arith.addf %144, %149 : vector<4x80xf32>
    %151 = vector.extract_strided_slice %139 {offsets = [0, 2], sizes = [8, 80], strides = [1, 1]} : vector<8x102xf32> to vector<8x80xf32>
    %152 = arith.truncf %151 : vector<8x80xf32> to vector<8x80xbf16>
    %c2_97 = arith.constant 2 : index
    %c0_98 = arith.constant 0 : index
    %c0_99 = arith.constant 0 : index
    %153 = vector.load %arg11[%c2_97, %c0_98, %c0_99] : memref<9x4x8xbf16, #tpu.memory_space<vmem>>, vector<1x4x8xbf16>
    %154 = vector.shape_cast %153 : vector<1x4x8xbf16> to vector<4x8xbf16>
    %cst_100 = arith.constant dense<0.000000e+00> : vector<4x80xf32>
    %155 = tpu.matmul %154, %152, %cst_100 {dimension_numbers = #tpu.dot_dimension_numbers<[1], [0], [0], [1], [0, 0, 1, 1], [], []>} : vector<4x8xbf16>, vector<8x80xbf16>, vector<4x80xf32> -> vector<4x80xf32>
    %156 = arith.addf %150, %155 : vector<4x80xf32>
    %157 = vector.extract_strided_slice %139 {offsets = [0, 10], sizes = [8, 80], strides = [1, 1]} : vector<8x102xf32> to vector<8x80xf32>
    %158 = arith.truncf %157 : vector<8x80xf32> to vector<8x80xbf16>
    %c3_101 = arith.constant 3 : index
    %c0_102 = arith.constant 0 : index
    %c0_103 = arith.constant 0 : index
    %159 = vector.load %arg11[%c3_101, %c0_102, %c0_103] : memref<9x4x8xbf16, #tpu.memory_space<vmem>>, vector<1x4x8xbf16>
    %160 = vector.shape_cast %159 : vector<1x4x8xbf16> to vector<4x8xbf16>
    %cst_104 = arith.constant dense<0.000000e+00> : vector<4x80xf32>
    %161 = tpu.matmul %160, %158, %cst_104 {dimension_numbers = #tpu.dot_dimension_numbers<[1], [0], [0], [1], [0, 0, 1, 1], [], []>} : vector<4x8xbf16>, vector<8x80xbf16>, vector<4x80xf32> -> vector<4x80xf32>
    %162 = arith.addf %156, %161 : vector<4x80xf32>
    %163 = vector.extract_strided_slice %139 {offsets = [0, 11], sizes = [8, 80], strides = [1, 1]} : vector<8x102xf32> to vector<8x80xf32>
    %164 = arith.truncf %163 : vector<8x80xf32> to vector<8x80xbf16>
    %c4_105 = arith.constant 4 : index
    %c0_106 = arith.constant 0 : index
    %c0_107 = arith.constant 0 : index
    %165 = vector.load %arg11[%c4_105, %c0_106, %c0_107] : memref<9x4x8xbf16, #tpu.memory_space<vmem>>, vector<1x4x8xbf16>
    %166 = vector.shape_cast %165 : vector<1x4x8xbf16> to vector<4x8xbf16>
    %cst_108 = arith.constant dense<0.000000e+00> : vector<4x80xf32>
    %167 = tpu.matmul %166, %164, %cst_108 {dimension_numbers = #tpu.dot_dimension_numbers<[1], [0], [0], [1], [0, 0, 1, 1], [], []>} : vector<4x8xbf16>, vector<8x80xbf16>, vector<4x80xf32> -> vector<4x80xf32>
    %168 = arith.addf %162, %167 : vector<4x80xf32>
    %169 = vector.extract_strided_slice %139 {offsets = [0, 12], sizes = [8, 80], strides = [1, 1]} : vector<8x102xf32> to vector<8x80xf32>
    %170 = arith.truncf %169 : vector<8x80xf32> to vector<8x80xbf16>
    %c5_109 = arith.constant 5 : index
    %c0_110 = arith.constant 0 : index
    %c0_111 = arith.constant 0 : index
    %171 = vector.load %arg11[%c5_109, %c0_110, %c0_111] : memref<9x4x8xbf16, #tpu.memory_space<vmem>>, vector<1x4x8xbf16>
    %172 = vector.shape_cast %171 : vector<1x4x8xbf16> to vector<4x8xbf16>
    %cst_112 = arith.constant dense<0.000000e+00> : vector<4x80xf32>
    %173 = tpu.matmul %172, %170, %cst_112 {dimension_numbers = #tpu.dot_dimension_numbers<[1], [0], [0], [1], [0, 0, 1, 1], [], []>} : vector<4x8xbf16>, vector<8x80xbf16>, vector<4x80xf32> -> vector<4x80xf32>
    %174 = arith.addf %168, %173 : vector<4x80xf32>
    %175 = vector.extract_strided_slice %139 {offsets = [0, 20], sizes = [8, 80], strides = [1, 1]} : vector<8x102xf32> to vector<8x80xf32>
    %176 = arith.truncf %175 : vector<8x80xf32> to vector<8x80xbf16>
    %c6_113 = arith.constant 6 : index
    %c0_114 = arith.constant 0 : index
    %c0_115 = arith.constant 0 : index
    %177 = vector.load %arg11[%c6_113, %c0_114, %c0_115] : memref<9x4x8xbf16, #tpu.memory_space<vmem>>, vector<1x4x8xbf16>
    %178 = vector.shape_cast %177 : vector<1x4x8xbf16> to vector<4x8xbf16>
    %cst_116 = arith.constant dense<0.000000e+00> : vector<4x80xf32>
    %179 = tpu.matmul %178, %176, %cst_116 {dimension_numbers = #tpu.dot_dimension_numbers<[1], [0], [0], [1], [0, 0, 1, 1], [], []>} : vector<4x8xbf16>, vector<8x80xbf16>, vector<4x80xf32> -> vector<4x80xf32>
    %180 = arith.addf %174, %179 : vector<4x80xf32>
    %181 = vector.extract_strided_slice %139 {offsets = [0, 21], sizes = [8, 80], strides = [1, 1]} : vector<8x102xf32> to vector<8x80xf32>
    %182 = arith.truncf %181 : vector<8x80xf32> to vector<8x80xbf16>
    %c7_117 = arith.constant 7 : index
    %c0_118 = arith.constant 0 : index
    %c0_119 = arith.constant 0 : index
    %183 = vector.load %arg11[%c7_117, %c0_118, %c0_119] : memref<9x4x8xbf16, #tpu.memory_space<vmem>>, vector<1x4x8xbf16>
    %184 = vector.shape_cast %183 : vector<1x4x8xbf16> to vector<4x8xbf16>
    %cst_120 = arith.constant dense<0.000000e+00> : vector<4x80xf32>
    %185 = tpu.matmul %184, %182, %cst_120 {dimension_numbers = #tpu.dot_dimension_numbers<[1], [0], [0], [1], [0, 0, 1, 1], [], []>} : vector<4x8xbf16>, vector<8x80xbf16>, vector<4x80xf32> -> vector<4x80xf32>
    %186 = arith.addf %180, %185 : vector<4x80xf32>
    %187 = vector.extract_strided_slice %139 {offsets = [0, 22], sizes = [8, 80], strides = [1, 1]} : vector<8x102xf32> to vector<8x80xf32>
    %188 = arith.truncf %187 : vector<8x80xf32> to vector<8x80xbf16>
    %c8_121 = arith.constant 8 : index
    %c0_122 = arith.constant 0 : index
    %c0_123 = arith.constant 0 : index
    %189 = vector.load %arg11[%c8_121, %c0_122, %c0_123] : memref<9x4x8xbf16, #tpu.memory_space<vmem>>, vector<1x4x8xbf16>
    %190 = vector.shape_cast %189 : vector<1x4x8xbf16> to vector<4x8xbf16>
    %cst_124 = arith.constant dense<0.000000e+00> : vector<4x80xf32>
    %191 = tpu.matmul %190, %188, %cst_124 {dimension_numbers = #tpu.dot_dimension_numbers<[1], [0], [0], [1], [0, 0, 1, 1], [], []>} : vector<4x8xbf16>, vector<8x80xbf16>, vector<4x80xf32> -> vector<4x80xf32>
    %192 = arith.addf %186, %191 : vector<4x80xf32>
    %c0_125 = arith.constant 0 : index
    %c0_126 = arith.constant 0 : index
    %193 = vector.load %arg12[%c0_125, %c0_126] : memref<4x1xf32, #tpu.memory_space<vmem>>, vector<4x1xf32>
    %194 = vector.broadcast %193 : vector<4x1xf32> to vector<4x80xf32>
    %195 = arith.addf %192, %194 : vector<4x80xf32>
    %cst_127 = arith.constant 0.000000e+00 : f32
    %196 = vector.broadcast %cst_127 : f32 to vector<4x80xf32>
    %197 = arith.cmpf ogt, %195, %196 : vector<4x80xf32>
    %cst_128 = arith.constant 2.000000e-01 : f32
    %198 = vector.broadcast %cst_128 : f32 to vector<4x80xf32>
    %199 = arith.mulf %198, %195 : vector<4x80xf32>
    %200 = arith.select %197, %195, %199 : vector<4x80xi1>, vector<4x80xf32>
    %201 = arith.truncf %200 : vector<4x80xf32> to vector<4x80xbf16>
    %c0_129 = arith.constant 0 : index
    %c0_130 = arith.constant 0 : index
    %202 = vector.load %arg13[%c0_129, %c0_130] : memref<80x326xbf16, #tpu.memory_space<vmem>>, vector<80x326xbf16>
    %cst_131 = arith.constant dense<0.000000e+00> : vector<4x326xf32>
    %203 = tpu.matmul %201, %202, %cst_131 {dimension_numbers = #tpu.dot_dimension_numbers<[1], [0], [0], [1], [0, 0, 1, 1], [], []>} : vector<4x80xbf16>, vector<80x326xbf16>, vector<4x326xf32> -> vector<4x326xf32>
    %204 = vector.extract_strided_slice %203 {offsets = [0, 0], sizes = [4, 288], strides = [1, 1]} : vector<4x326xf32> to vector<4x288xf32>
    %205 = arith.truncf %204 : vector<4x288xf32> to vector<4x288xbf16>
    %c0_132 = arith.constant 0 : index
    %c0_133 = arith.constant 0 : index
    %c0_134 = arith.constant 0 : index
    %206 = vector.load %arg14[%c0_132, %c0_133, %c0_134] : memref<9x1x4xbf16, #tpu.memory_space<vmem>>, vector<1x1x4xbf16>
    %207 = vector.shape_cast %206 : vector<1x1x4xbf16> to vector<1x4xbf16>
    %cst_135 = arith.constant dense<0.000000e+00> : vector<1x288xf32>
    %208 = tpu.matmul %207, %205, %cst_135 {dimension_numbers = #tpu.dot_dimension_numbers<[1], [0], [0], [1], [0, 0, 1, 1], [], []>} : vector<1x4xbf16>, vector<4x288xbf16>, vector<1x288xf32> -> vector<1x288xf32>
    %209 = vector.extract_strided_slice %203 {offsets = [0, 1], sizes = [4, 288], strides = [1, 1]} : vector<4x326xf32> to vector<4x288xf32>
    %210 = arith.truncf %209 : vector<4x288xf32> to vector<4x288xbf16>
    %c1_136 = arith.constant 1 : index
    %c0_137 = arith.constant 0 : index
    %c0_138 = arith.constant 0 : index
    %211 = vector.load %arg14[%c1_136, %c0_137, %c0_138] : memref<9x1x4xbf16, #tpu.memory_space<vmem>>, vector<1x1x4xbf16>
    %212 = vector.shape_cast %211 : vector<1x1x4xbf16> to vector<1x4xbf16>
    %cst_139 = arith.constant dense<0.000000e+00> : vector<1x288xf32>
    %213 = tpu.matmul %212, %210, %cst_139 {dimension_numbers = #tpu.dot_dimension_numbers<[1], [0], [0], [1], [0, 0, 1, 1], [], []>} : vector<1x4xbf16>, vector<4x288xbf16>, vector<1x288xf32> -> vector<1x288xf32>
    %214 = arith.addf %208, %213 : vector<1x288xf32>
    %215 = vector.extract_strided_slice %203 {offsets = [0, 2], sizes = [4, 288], strides = [1, 1]} : vector<4x326xf32> to vector<4x288xf32>
    %216 = arith.truncf %215 : vector<4x288xf32> to vector<4x288xbf16>
    %c2_140 = arith.constant 2 : index
    %c0_141 = arith.constant 0 : index
    %c0_142 = arith.constant 0 : index
    %217 = vector.load %arg14[%c2_140, %c0_141, %c0_142] : memref<9x1x4xbf16, #tpu.memory_space<vmem>>, vector<1x1x4xbf16>
    %218 = vector.shape_cast %217 : vector<1x1x4xbf16> to vector<1x4xbf16>
    %cst_143 = arith.constant dense<0.000000e+00> : vector<1x288xf32>
    %219 = tpu.matmul %218, %216, %cst_143 {dimension_numbers = #tpu.dot_dimension_numbers<[1], [0], [0], [1], [0, 0, 1, 1], [], []>} : vector<1x4xbf16>, vector<4x288xbf16>, vector<1x288xf32> -> vector<1x288xf32>
    %220 = arith.addf %214, %219 : vector<1x288xf32>
    %221 = vector.extract_strided_slice %203 {offsets = [0, 18], sizes = [4, 288], strides = [1, 1]} : vector<4x326xf32> to vector<4x288xf32>
    %222 = arith.truncf %221 : vector<4x288xf32> to vector<4x288xbf16>
    %c3_144 = arith.constant 3 : index
    %c0_145 = arith.constant 0 : index
    %c0_146 = arith.constant 0 : index
    %223 = vector.load %arg14[%c3_144, %c0_145, %c0_146] : memref<9x1x4xbf16, #tpu.memory_space<vmem>>, vector<1x1x4xbf16>
    %224 = vector.shape_cast %223 : vector<1x1x4xbf16> to vector<1x4xbf16>
    %cst_147 = arith.constant dense<0.000000e+00> : vector<1x288xf32>
    %225 = tpu.matmul %224, %222, %cst_147 {dimension_numbers = #tpu.dot_dimension_numbers<[1], [0], [0], [1], [0, 0, 1, 1], [], []>} : vector<1x4xbf16>, vector<4x288xbf16>, vector<1x288xf32> -> vector<1x288xf32>
    %226 = arith.addf %220, %225 : vector<1x288xf32>
    %227 = vector.extract_strided_slice %203 {offsets = [0, 19], sizes = [4, 288], strides = [1, 1]} : vector<4x326xf32> to vector<4x288xf32>
    %228 = arith.truncf %227 : vector<4x288xf32> to vector<4x288xbf16>
    %c4_148 = arith.constant 4 : index
    %c0_149 = arith.constant 0 : index
    %c0_150 = arith.constant 0 : index
    %229 = vector.load %arg14[%c4_148, %c0_149, %c0_150] : memref<9x1x4xbf16, #tpu.memory_space<vmem>>, vector<1x1x4xbf16>
    %230 = vector.shape_cast %229 : vector<1x1x4xbf16> to vector<1x4xbf16>
    %cst_151 = arith.constant dense<0.000000e+00> : vector<1x288xf32>
    %231 = tpu.matmul %230, %228, %cst_151 {dimension_numbers = #tpu.dot_dimension_numbers<[1], [0], [0], [1], [0, 0, 1, 1], [], []>} : vector<1x4xbf16>, vector<4x288xbf16>, vector<1x288xf32> -> vector<1x288xf32>
    %232 = arith.addf %226, %231 : vector<1x288xf32>
    %233 = vector.extract_strided_slice %203 {offsets = [0, 20], sizes = [4, 288], strides = [1, 1]} : vector<4x326xf32> to vector<4x288xf32>
    %234 = arith.truncf %233 : vector<4x288xf32> to vector<4x288xbf16>
    %c5_152 = arith.constant 5 : index
    %c0_153 = arith.constant 0 : index
    %c0_154 = arith.constant 0 : index
    %235 = vector.load %arg14[%c5_152, %c0_153, %c0_154] : memref<9x1x4xbf16, #tpu.memory_space<vmem>>, vector<1x1x4xbf16>
    %236 = vector.shape_cast %235 : vector<1x1x4xbf16> to vector<1x4xbf16>
    %cst_155 = arith.constant dense<0.000000e+00> : vector<1x288xf32>
    %237 = tpu.matmul %236, %234, %cst_155 {dimension_numbers = #tpu.dot_dimension_numbers<[1], [0], [0], [1], [0, 0, 1, 1], [], []>} : vector<1x4xbf16>, vector<4x288xbf16>, vector<1x288xf32> -> vector<1x288xf32>
    %238 = arith.addf %232, %237 : vector<1x288xf32>
    %239 = vector.extract_strided_slice %203 {offsets = [0, 36], sizes = [4, 288], strides = [1, 1]} : vector<4x326xf32> to vector<4x288xf32>
    %240 = arith.truncf %239 : vector<4x288xf32> to vector<4x288xbf16>
    %c6_156 = arith.constant 6 : index
    %c0_157 = arith.constant 0 : index
    %c0_158 = arith.constant 0 : index
    %241 = vector.load %arg14[%c6_156, %c0_157, %c0_158] : memref<9x1x4xbf16, #tpu.memory_space<vmem>>, vector<1x1x4xbf16>
    %242 = vector.shape_cast %241 : vector<1x1x4xbf16> to vector<1x4xbf16>
    %cst_159 = arith.constant dense<0.000000e+00> : vector<1x288xf32>
    %243 = tpu.matmul %242, %240, %cst_159 {dimension_numbers = #tpu.dot_dimension_numbers<[1], [0], [0], [1], [0, 0, 1, 1], [], []>} : vector<1x4xbf16>, vector<4x288xbf16>, vector<1x288xf32> -> vector<1x288xf32>
    %244 = arith.addf %238, %243 : vector<1x288xf32>
    %245 = vector.extract_strided_slice %203 {offsets = [0, 37], sizes = [4, 288], strides = [1, 1]} : vector<4x326xf32> to vector<4x288xf32>
    %246 = arith.truncf %245 : vector<4x288xf32> to vector<4x288xbf16>
    %c7_160 = arith.constant 7 : index
    %c0_161 = arith.constant 0 : index
    %c0_162 = arith.constant 0 : index
    %247 = vector.load %arg14[%c7_160, %c0_161, %c0_162] : memref<9x1x4xbf16, #tpu.memory_space<vmem>>, vector<1x1x4xbf16>
    %248 = vector.shape_cast %247 : vector<1x1x4xbf16> to vector<1x4xbf16>
    %cst_163 = arith.constant dense<0.000000e+00> : vector<1x288xf32>
    %249 = tpu.matmul %248, %246, %cst_163 {dimension_numbers = #tpu.dot_dimension_numbers<[1], [0], [0], [1], [0, 0, 1, 1], [], []>} : vector<1x4xbf16>, vector<4x288xbf16>, vector<1x288xf32> -> vector<1x288xf32>
    %250 = arith.addf %244, %249 : vector<1x288xf32>
    %251 = vector.extract_strided_slice %203 {offsets = [0, 38], sizes = [4, 288], strides = [1, 1]} : vector<4x326xf32> to vector<4x288xf32>
    %252 = arith.truncf %251 : vector<4x288xf32> to vector<4x288xbf16>
    %c8_164 = arith.constant 8 : index
    %c0_165 = arith.constant 0 : index
    %c0_166 = arith.constant 0 : index
    %253 = vector.load %arg14[%c8_164, %c0_165, %c0_166] : memref<9x1x4xbf16, #tpu.memory_space<vmem>>, vector<1x1x4xbf16>
    %254 = vector.shape_cast %253 : vector<1x1x4xbf16> to vector<1x4xbf16>
    %cst_167 = arith.constant dense<0.000000e+00> : vector<1x288xf32>
    %255 = tpu.matmul %254, %252, %cst_167 {dimension_numbers = #tpu.dot_dimension_numbers<[1], [0], [0], [1], [0, 0, 1, 1], [], []>} : vector<1x4xbf16>, vector<4x288xbf16>, vector<1x288xf32> -> vector<1x288xf32>
    %256 = arith.addf %250, %255 : vector<1x288xf32>
    %c0_168 = arith.constant 0 : index
    %c0_169 = arith.constant 0 : index
    %257 = vector.load %arg15[%c0_168, %c0_169] : memref<1x1xf32, #tpu.memory_space<vmem>>, vector<1x1xf32>
    %258 = vector.broadcast %257 : vector<1x1xf32> to vector<1x288xf32>
    %259 = arith.addf %256, %258 : vector<1x288xf32>
    %c0_170 = arith.constant 0 : index
    %c0_171 = arith.constant 0 : index
    %260 = vector.load %arg16[%c0_170, %c0_171] : memref<288x256xf32, #tpu.memory_space<vmem>>, vector<288x256xf32>
    %cst_172 = arith.constant dense<0.000000e+00> : vector<1x256xf32>
    %261 = tpu.matmul %259, %260, %cst_172 {dimension_numbers = #tpu.dot_dimension_numbers<[1], [0], [0], [1], [0, 0, 1, 1], [], []>} : vector<1x288xf32>, vector<288x256xf32>, vector<1x256xf32> -> vector<1x256xf32>
    %c0_173 = arith.constant 0 : index
    %c0_174 = arith.constant 0 : index
    %c0_175 = arith.constant 0 : index
    %262 = vector.load %arg17[%c0_173, %c0_174, %c0_175] : memref<1x1x256xf32, #tpu.memory_space<vmem>>, vector<1x1x256xf32>
    %263 = vector.shape_cast %262 : vector<1x1x256xf32> to vector<1x256xf32>
    %264 = vector.shape_cast %261 : vector<1x256xf32> to vector<1x1x256xf32>
    tpu.vector_store %arg17[%c0_173, %c0_174, %c0_175], %264 {strides = array<i32>} : memref<1x1x256xf32, #tpu.memory_space<vmem>>, vector<1x1x256xf32>,
    return
  }
  func.func @transform_0(%arg0: i32) -> (i32, i32, i32) {
    %c0_i32 = arith.constant 0 : i32
    %c0_i32_0 = arith.constant 0 : i32
    %c0_i32_1 = arith.constant 0 : i32
    return %arg0, %c0_i32, %c0_i32_0 : i32, i32, i32
  }
  func.func @transform_1(%arg0: i32) -> (i32, i32, i32) {
    %c0_i32 = arith.constant 0 : i32
    %c0_i32_0 = arith.constant 0 : i32
    %c0_i32_1 = arith.constant 0 : i32
    %c0_i32_2 = arith.constant 0 : i32
    return %c0_i32, %c0_i32_0, %c0_i32_1 : i32, i32, i32
  }
  func.func @transform_2(%arg0: i32) -> (i32, i32) {
    %c0_i32 = arith.constant 0 : i32
    %c0_i32_0 = arith.constant 0 : i32
    %c0_i32_1 = arith.constant 0 : i32
    return %c0_i32, %c0_i32_0 : i32, i32
  }
  func.func @transform_3(%arg0: i32) -> (i32, i32) {
    %c0_i32 = arith.constant 0 : i32
    %c0_i32_0 = arith.constant 0 : i32
    %c0_i32_1 = arith.constant 0 : i32
    return %c0_i32, %c0_i32_0 : i32, i32
  }
  func.func @transform_4(%arg0: i32) -> (i32, i32, i32) {
    %c0_i32 = arith.constant 0 : i32
    %c0_i32_0 = arith.constant 0 : i32
    %c0_i32_1 = arith.constant 0 : i32
    %c0_i32_2 = arith.constant 0 : i32
    return %c0_i32, %c0_i32_0, %c0_i32_1 : i32, i32, i32
  }
  func.func @transform_5(%arg0: i32) -> (i32, i32) {
    %c0_i32 = arith.constant 0 : i32
    %c0_i32_0 = arith.constant 0 : i32
    %c0_i32_1 = arith.constant 0 : i32
    return %c0_i32, %c0_i32_0 : i32, i32
  }
  func.func @transform_6(%arg0: i32) -> (i32, i32) {
    %c0_i32 = arith.constant 0 : i32
    %c0_i32_0 = arith.constant 0 : i32
    %c0_i32_1 = arith.constant 0 : i32
    return %c0_i32, %c0_i32_0 : i32, i32
  }
  func.func @transform_7(%arg0: i32) -> (i32, i32, i32) {
    %c0_i32 = arith.constant 0 : i32
    %c0_i32_0 = arith.constant 0 : i32
    %c0_i32_1 = arith.constant 0 : i32
    %c0_i32_2 = arith.constant 0 : i32
    return %c0_i32, %c0_i32_0, %c0_i32_1 : i32, i32, i32
  }
  func.func @transform_8(%arg0: i32) -> (i32, i32) {
    %c0_i32 = arith.constant 0 : i32
    %c0_i32_0 = arith.constant 0 : i32
    %c0_i32_1 = arith.constant 0 : i32
    return %c0_i32, %c0_i32_0 : i32, i32
  }
  func.func @transform_9(%arg0: i32) -> (i32, i32) {
    %c0_i32 = arith.constant 0 : i32
    %c0_i32_0 = arith.constant 0 : i32
    %c0_i32_1 = arith.constant 0 : i32
    return %c0_i32, %c0_i32_0 : i32, i32
  }
  func.func @transform_10(%arg0: i32) -> (i32, i32, i32) {
    %c0_i32 = arith.constant 0 : i32
    %c0_i32_0 = arith.constant 0 : i32
    %c0_i32_1 = arith.constant 0 : i32
    %c0_i32_2 = arith.constant 0 : i32
    return %c0_i32, %c0_i32_0, %c0_i32_1 : i32, i32, i32
  }
  func.func @transform_11(%arg0: i32) -> (i32, i32) {
    %c0_i32 = arith.constant 0 : i32
    %c0_i32_0 = arith.constant 0 : i32
    %c0_i32_1 = arith.constant 0 : i32
    return %c0_i32, %c0_i32_0 : i32, i32
  }
  func.func @transform_12(%arg0: i32) -> (i32, i32) {
    %c0_i32 = arith.constant 0 : i32
    %c0_i32_0 = arith.constant 0 : i32
    %c0_i32_1 = arith.constant 0 : i32
    return %c0_i32, %c0_i32_0 : i32, i32
  }
  func.func @transform_13(%arg0: i32) -> (i32, i32, i32) {
    %c0_i32 = arith.constant 0 : i32
    %c0_i32_0 = arith.constant 0 : i32
    %c0_i32_1 = arith.constant 0 : i32
    %c0_i32_2 = arith.constant 0 : i32
    return %c0_i32, %c0_i32_0, %c0_i32_1 : i32, i32, i32
  }
  func.func @transform_14(%arg0: i32) -> (i32, i32) {
    %c0_i32 = arith.constant 0 : i32
    %c0_i32_0 = arith.constant 0 : i32
    %c0_i32_1 = arith.constant 0 : i32
    return %c0_i32, %c0_i32_0 : i32, i32
  }
  func.func @transform_15(%arg0: i32) -> (i32, i32) {
    %c0_i32 = arith.constant 0 : i32
    %c0_i32_0 = arith.constant 0 : i32
    %c0_i32_1 = arith.constant 0 : i32
    return %c0_i32, %c0_i32_0 : i32, i32
  }
  func.func @transform_16(%arg0: i32) -> (i32, i32, i32) {
    %c0_i32 = arith.constant 0 : i32
    %c0_i32_0 = arith.constant 0 : i32
    %c0_i32_1 = arith.constant 0 : i32
    return %arg0, %c0_i32, %c0_i32_0 : i32, i32, i32
  }
}

</mosaic_0001>

<llo_original>
// kernel: decoder_forward.1
$region0: #{decoder_forward.1}
  #allocation0 [shape = 'u32[]', space=smem, size = 0x4, offset = 0x4, fixed_abs, tag = 'smem constant byte address 0x4 - core index']
  #allocation1 [shape = 'u32[144,128]{1,0:T(1,128)}', space=vmem, size = 0x12000, scoped, tag = 'internal scratch']
  #allocation2 [shape = 'f32[1,1]{1,0:T(1,128)S(1)}', space=vmem, size = 0x200, scoped, tag = 'scoped memory for decoder_forward.1']
  %s0 = inlined_call_operand.vmem [shape: f32[2,8,1], index: 0, kind: input, shape index: {}]
  %s1 = inlined_call_operand.vmem [shape: f32[1,32,8], index: 1, kind: input, shape index: {}]
  %s2 = inlined_call_operand.vmem [shape: f32[32,1], index: 2, kind: input, shape index: {}]
  %s3 = inlined_call_operand.vmem [shape: bf16[1,18], index: 3, kind: input, shape index: {}]
  %s4 = inlined_call_operand.vmem [shape: bf16[9,16,32], index: 4, kind: input, shape index: {}]
  %s5 = inlined_call_operand.vmem [shape: f32[16,1], index: 5, kind: input, shape index: {}]
  %s6 = inlined_call_operand.vmem [shape: bf16[8,38], index: 6, kind: input, shape index: {}]
  %s7 = inlined_call_operand.vmem [shape: bf16[9,8,16], index: 7, kind: input, shape index: {}]
  %s8 = inlined_call_operand.vmem [shape: f32[8,1], index: 8, kind: input, shape index: {}]
  %s9 = inlined_call_operand.vmem [shape: bf16[24,102], index: 9, kind: input, shape index: {}]
  %s10 = inlined_call_operand.vmem [shape: bf16[9,4,8], index: 10, kind: input, shape index: {}]
  %s11 = inlined_call_operand.vmem [shape: f32[4,1], index: 11, kind: input, shape index: {}]
  %s12 = inlined_call_operand.vmem [shape: bf16[80,326], index: 12, kind: input, shape index: {}]
  %s13 = inlined_call_operand.vmem [shape: bf16[9,1,4], index: 13, kind: input, shape index: {}]
  %s14 = inlined_call_operand.<no memory space> [shape: f32[1,1], index: 14, kind: input, shape index: {}]
  %s15 = inlined_call_operand.vmem [shape: f32[288,256], index: 15, kind: input, shape index: {}]
  %s16 = inlined_call_operand.vmem [shape: f32[2,1,256], index: 16, kind: output, shape index: {}]
  %s17 = sld [smem:[#allocation0]]
  $region97: #{decoder_forward.1} parent=0
    _
  %s19 = ssub.s32 1, %s17
  %s20 = scalar_select 0, %s19, %s17
  %v21 = vstv %s14
  %22 = vst [vmem:[#allocation2] sm:$0x1] %v21
  loop: start=0, step=1, limit=4
  $region2: #{decoder_forward.1} parent=0 // loop_pre_header
    _
  $region3: #{decoder_forward.1} parent=0 // loop_header
    %s24 = sphi 0, %s28
    %p25 = scmp.ge.s32.totalorder %s24, 4
    %s34 = sphi 0, %s36
    %s37 = sphi 0, %s34
    %s38 = sphi 0, %s37
    %s54 = sphi 0, %s38
    %s58 = sphi 0, %s58
    %s60 = sphi 0, %s58
    %s61 = sphi 0, %s60
    %s75 = sphi 0, %s61
    %s79 = sphi 0, %s79
    %s81 = sphi 0, %s79
    %s82 = sphi 0, %s81
    %s96 = sphi 0, %s82
    %s100 = sphi 0, %s100
    %s102 = sphi 0, %s100
    %s103 = sphi 0, %s102
    %s117 = sphi 0, %s103
    %s121 = sphi 0, %s121
    %s123 = sphi 0, %s121
    %s124 = sphi 0, %s123
    %s138 = sphi 0, %s124
    %s142 = sphi 0, %s142
    %s144 = sphi 0, %s142
    %s145 = sphi 0, %s144
    %s159 = sphi 0, %s145
    %s163 = sphi 0, %s163
    %s165 = sphi 0, %s163
    %s166 = sphi 0, %s165
    %s180 = sphi 0, %s166
    %s184 = sphi 0, %s184
    %s186 = sphi 0, %s184
    %s187 = sphi 0, %s186
    %s201 = sphi 0, %s187
    %s205 = sphi 0, %s205
    %s207 = sphi 0, %s205
    %s208 = sphi 0, %s207
    %s222 = sphi 0, %s208
    %s226 = sphi 0, %s226
    %s228 = sphi 0, %s226
    %s229 = sphi 0, %s228
    %s243 = sphi 0, %s229
    %s247 = sphi 0, %s247
    %s249 = sphi 0, %s247
    %s250 = sphi 0, %s249
    %s264 = sphi 0, %s250
    %s268 = sphi 0, %s268
    %s270 = sphi 0, %s268
    %s271 = sphi 0, %s270
    %s285 = sphi 0, %s271
    %s289 = sphi 0, %s289
    %s291 = sphi 0, %s289
    %s292 = sphi 0, %s291
    %s306 = sphi 0, %s292
    %s310 = sphi 0, %s310
    %s312 = sphi 0, %s310
    %s313 = sphi 0, %s312
    %s327 = sphi 0, %s313
    %s331 = sphi 0, %s331
    %s333 = sphi 0, %s331
    %s334 = sphi 0, %s333
    %s348 = sphi 0, %s334
    %s352 = sphi 0, %s352
    %s354 = sphi 0, %s352
    %s355 = sphi 0, %s354
    %s369 = sphi 0, %s355
    %s375 = sphi 0, %s377
    %s378 = sphi 0, %s375
    %s379 = sphi 0, %s378
    %s395 = sphi 0, %s379
  $region4: #{decoder_forward.1} parent=0 // loop_header_branch
    %27 = sbr.rel (%p25) target = $region8
  $region5: #{decoder_forward.1} parent=0 // loop_body
    %s29 = ssub.s32 %s24, 1
    %s30 = ssub.s32 %s24, 2
    %s31 = sadd.s32 %s24, 1
    %s32 = ssub.s32 %s24, %s31
    %p33 = scmp.eq.s32.totalorder %s32, 0
    %s35 = sadd.s32 %s34, 1
    %s36 = scalar_select %p33, %s34, %s35
    %p39 = pneg %p33
    %p40 = scmp.eq.s32.totalorder %s24, 1
    %p41 = por %p39, %p40
    %p42 = scmp.ne.s32.totalorder %s34, %s37
    %p43 = scmp.eq.s32.totalorder %s24, 0
    %p44 = por %p42, %p43
    %p45 = scmp.ne.s32.totalorder %s34, %s37
    %p46 = scmp.eq.s32.totalorder %s29, 1
    %p47 = por %p45, %p46
    %p48 = scmp.ne.s32.totalorder %s37, %s38
    %p49 = scmp.eq.s32.totalorder %s29, 0
    %p50 = por %p48, %p49
    %p51 = scmp.ne.s32.totalorder %s37, %s38
    %p52 = scmp.eq.s32.totalorder %s30, 1
    %p53 = por %p51, %p52
    %p55 = scmp.ne.s32.totalorder %s38, %s54
    %p56 = scmp.eq.s32.totalorder %s30, 0
    %p57 = por %p55, %p56
    %s59 = sadd.s32 %s58, 1
    %p62 = scmp.eq.s32.totalorder %s24, 1
    %p63 = scmp.ne.s32.totalorder %s58, %s60
    %p64 = scmp.eq.s32.totalorder %s24, 0
    %p65 = por %p63, %p64
    %p66 = scmp.ne.s32.totalorder %s58, %s60
    %p67 = scmp.eq.s32.totalorder %s29, 1
    %p68 = por %p66, %p67
    %p69 = scmp.ne.s32.totalorder %s60, %s61
    %p70 = scmp.eq.s32.totalorder %s29, 0
    %p71 = por %p69, %p70
    %p72 = scmp.ne.s32.totalorder %s60, %s61
    %p73 = scmp.eq.s32.totalorder %s30, 1
    %p74 = por %p72, %p73
    %p76 = scmp.ne.s32.totalorder %s61, %s75
    %p77 = scmp.eq.s32.totalorder %s30, 0
    %p78 = por %p76, %p77
    %s80 = sadd.s32 %s79, 1
    %p83 = scmp.eq.s32.totalorder %s24, 1
    %p84 = scmp.ne.s32.totalorder %s79, %s81
    %p85 = scmp.eq.s32.totalorder %s24, 0
    %p86 = por %p84, %p85
    %p87 = scmp.ne.s32.totalorder %s79, %s81
    %p88 = scmp.eq.s32.totalorder %s29, 1
    %p89 = por %p87, %p88
    %p90 = scmp.ne.s32.totalorder %s81, %s82
    %p91 = scmp.eq.s32.totalorder %s29, 0
    %p92 = por %p90, %p91
    %p93 = scmp.ne.s32.totalorder %s81, %s82
    %p94 = scmp.eq.s32.totalorder %s30, 1
    %p95 = por %p93, %p94
    %p97 = scmp.ne.s32.totalorder %s82, %s96
    %p98 = scmp.eq.s32.totalorder %s30, 0
    %p99 = por %p97, %p98
    %s101 = sadd.s32 %s100, 1
    %p104 = scmp.eq.s32.totalorder %s24, 1
    %p105 = scmp.ne.s32.totalorder %s100, %s102
    %p106 = scmp.eq.s32.totalorder %s24, 0
    %p107 = por %p105, %p106
    %p108 = scmp.ne.s32.totalorder %s100, %s102
    %p109 = scmp.eq.s32.totalorder %s29, 1
    %p110 = por %p108, %p109
    %p111 = scmp.ne.s32.totalorder %s102, %s103
    %p112 = scmp.eq.s32.totalorder %s29, 0
    %p113 = por %p111, %p112
    %p114 = scmp.ne.s32.totalorder %s102, %s103
    %p115 = scmp.eq.s32.totalorder %s30, 1
    %p116 = por %p114, %p115
    %p118 = scmp.ne.s32.totalorder %s103, %s117
    %p119 = scmp.eq.s32.totalorder %s30, 0
    %p120 = por %p118, %p119
    %s122 = sadd.s32 %s121, 1
    %p125 = scmp.eq.s32.totalorder %s24, 1
    %p126 = scmp.ne.s32.totalorder %s121, %s123
    %p127 = scmp.eq.s32.totalorder %s24, 0
    %p128 = por %p126, %p127
    %p129 = scmp.ne.s32.totalorder %s121, %s123
    %p130 = scmp.eq.s32.totalorder %s29, 1
    %p131 = por %p129, %p130
    %p132 = scmp.ne.s32.totalorder %s123, %s124
    %p133 = scmp.eq.s32.totalorder %s29, 0
    %p134 = por %p132, %p133
    %p135 = scmp.ne.s32.totalorder %s123, %s124
    %p136 = scmp.eq.s32.totalorder %s30, 1
    %p137 = por %p135, %p136
    %p139 = scmp.ne.s32.totalorder %s124, %s138
    %p140 = scmp.eq.s32.totalorder %s30, 0
    %p141 = por %p139, %p140
    %s143 = sadd.s32 %s142, 1
    %p146 = scmp.eq.s32.totalorder %s24, 1
    %p147 = scmp.ne.s32.totalorder %s142, %s144
    %p148 = scmp.eq.s32.totalorder %s24, 0
    %p149 = por %p147, %p148
    %p150 = scmp.ne.s32.totalorder %s142, %s144
    %p151 = scmp.eq.s32.totalorder %s29, 1
    %p152 = por %p150, %p151
    %p153 = scmp.ne.s32.totalorder %s144, %s145
    %p154 = scmp.eq.s32.totalorder %s29, 0
    %p155 = por %p153, %p154
    %p156 = scmp.ne.s32.totalorder %s144, %s145
    %p157 = scmp.eq.s32.totalorder %s30, 1
    %p158 = por %p156, %p157
    %p160 = scmp.ne.s32.totalorder %s145, %s159
    %p161 = scmp.eq.s32.totalorder %s30, 0
    %p162 = por %p160, %p161
    %s164 = sadd.s32 %s163, 1
    %p167 = scmp.eq.s32.totalorder %s24, 1
    %p168 = scmp.ne.s32.totalorder %s163, %s165
    %p169 = scmp.eq.s32.totalorder %s24, 0
    %p170 = por %p168, %p169
    %p171 = scmp.ne.s32.totalorder %s163, %s165
    %p172 = scmp.eq.s32.totalorder %s29, 1
    %p173 = por %p171, %p172
    %p174 = scmp.ne.s32.totalorder %s165, %s166
    %p175 = scmp.eq.s32.totalorder %s29, 0
    %p176 = por %p174, %p175
    %p177 = scmp.ne.s32.totalorder %s165, %s166
    %p178 = scmp.eq.s32.totalorder %s30, 1
    %p179 = por %p177, %p178
    %p181 = scmp.ne.s32.totalorder %s166, %s180
    %p182 = scmp.eq.s32.totalorder %s30, 0
    %p183 = por %p181, %p182
    %s185 = sadd.s32 %s184, 1
    %p188 = scmp.eq.s32.totalorder %s24, 1
    %p189 = scmp.ne.s32.totalorder %s184, %s186
    %p190 = scmp.eq.s32.totalorder %s24, 0
    %p191 = por %p189, %p190
    %p192 = scmp.ne.s32.totalorder %s184, %s186
    %p193 = scmp.eq.s32.totalorder %s29, 1
    %p194 = por %p192, %p193
    %p195 = scmp.ne.s32.totalorder %s186, %s187
    %p196 = scmp.eq.s32.totalorder %s29, 0
    %p197 = por %p195, %p196
    %p198 = scmp.ne.s32.totalorder %s186, %s187
    %p199 = scmp.eq.s32.totalorder %s30, 1
    %p200 = por %p198, %p199
    %p202 = scmp.ne.s32.totalorder %s187, %s201
    %p203 = scmp.eq.s32.totalorder %s30, 0
    %p204 = por %p202, %p203
    %s206 = sadd.s32 %s205, 1
    %p209 = scmp.eq.s32.totalorder %s24, 1
    %p210 = scmp.ne.s32.totalorder %s205, %s207
    %p211 = scmp.eq.s32.totalorder %s24, 0
    %p212 = por %p210, %p211
    %p213 = scmp.ne.s32.totalorder %s205, %s207
    %p214 = scmp.eq.s32.totalorder %s29, 1
    %p215 = por %p213, %p214
    %p216 = scmp.ne.s32.totalorder %s207, %s208
    %p217 = scmp.eq.s32.totalorder %s29, 0
    %p218 = por %p216, %p217
    %p219 = scmp.ne.s32.totalorder %s207, %s208
    %p220 = scmp.eq.s32.totalorder %s30, 1
    %p221 = por %p219, %p220
    %p223 = scmp.ne.s32.totalorder %s208, %s222
    %p224 = scmp.eq.s32.totalorder %s30, 0
    %p225 = por %p223, %p224
    %s227 = sadd.s32 %s226, 1
    %p230 = scmp.eq.s32.totalorder %s24, 1
    %p231 = scmp.ne.s32.totalorder %s226, %s228
    %p232 = scmp.eq.s32.totalorder %s24, 0
    %p233 = por %p231, %p232
    %p234 = scmp.ne.s32.totalorder %s226, %s228
    %p235 = scmp.eq.s32.totalorder %s29, 1
    %p236 = por %p234, %p235
    %p237 = scmp.ne.s32.totalorder %s228, %s229
    %p238 = scmp.eq.s32.totalorder %s29, 0
    %p239 = por %p237, %p238
    %p240 = scmp.ne.s32.totalorder %s228, %s229
    %p241 = scmp.eq.s32.totalorder %s30, 1
    %p242 = por %p240, %p241
    %p244 = scmp.ne.s32.totalorder %s229, %s243
    %p245 = scmp.eq.s32.totalorder %s30, 0
    %p246 = por %p244, %p245
    %s248 = sadd.s32 %s247, 1
    %p251 = scmp.eq.s32.totalorder %s24, 1
    %p252 = scmp.ne.s32.totalorder %s247, %s249
    %p253 = scmp.eq.s32.totalorder %s24, 0
    %p254 = por %p252, %p253
    %p255 = scmp.ne.s32.totalorder %s247, %s249
    %p256 = scmp.eq.s32.totalorder %s29, 1
    %p257 = por %p255, %p256
    %p258 = scmp.ne.s32.totalorder %s249, %s250
    %p259 = scmp.eq.s32.totalorder %s29, 0
    %p260 = por %p258, %p259
    %p261 = scmp.ne.s32.totalorder %s249, %s250
    %p262 = scmp.eq.s32.totalorder %s30, 1
    %p263 = por %p261, %p262
    %p265 = scmp.ne.s32.totalorder %s250, %s264
    %p266 = scmp.eq.s32.totalorder %s30, 0
    %p267 = por %p265, %p266
    %s269 = sadd.s32 %s268, 1
    %p272 = scmp.eq.s32.totalorder %s24, 1
    %p273 = scmp.ne.s32.totalorder %s268, %s270
    %p274 = scmp.eq.s32.totalorder %s24, 0
    %p275 = por %p273, %p274
    %p276 = scmp.ne.s32.totalorder %s268, %s270
    %p277 = scmp.eq.s32.totalorder %s29, 1
    %p278 = por %p276, %p277
    %p279 = scmp.ne.s32.totalorder %s270, %s271
    %p280 = scmp.eq.s32.totalorder %s29, 0
    %p281 = por %p279, %p280
    %p282 = scmp.ne.s32.totalorder %s270, %s271
    %p283 = scmp.eq.s32.totalorder %s30, 1
    %p284 = por %p282, %p283
    %p286 = scmp.ne.s32.totalorder %s271, %s285
    %p287 = scmp.eq.s32.totalorder %s30, 0
    %p288 = por %p286, %p287
    %s290 = sadd.s32 %s289, 1
    %p293 = scmp.eq.s32.totalorder %s24, 1
    %p294 = scmp.ne.s32.totalorder %s289, %s291
    %p295 = scmp.eq.s32.totalorder %s24, 0
    %p296 = por %p294, %p295
    %p297 = scmp.ne.s32.totalorder %s289, %s291
    %p298 = scmp.eq.s32.totalorder %s29, 1
    %p299 = por %p297, %p298
    %p300 = scmp.ne.s32.totalorder %s291, %s292
    %p301 = scmp.eq.s32.totalorder %s29, 0
    %p302 = por %p300, %p301
    %p303 = scmp.ne.s32.totalorder %s291, %s292
    %p304 = scmp.eq.s32.totalorder %s30, 1
    %p305 = por %p303, %p304
    %p307 = scmp.ne.s32.totalorder %s292, %s306
    %p308 = scmp.eq.s32.totalorder %s30, 0
    %p309 = por %p307, %p308
    %s311 = sadd.s32 %s310, 1
    %p314 = scmp.eq.s32.totalorder %s24, 1
    %p315 = scmp.ne.s32.totalorder %s310, %s312
    %p316 = scmp.eq.s32.totalorder %s24, 0
    %p317 = por %p315, %p316
    %p318 = scmp.ne.s32.totalorder %s310, %s312
    %p319 = scmp.eq.s32.totalorder %s29, 1
    %p320 = por %p318, %p319
    %p321 = scmp.ne.s32.totalorder %s312, %s313
    %p322 = scmp.eq.s32.totalorder %s29, 0
    %p323 = por %p321, %p322
    %p324 = scmp.ne.s32.totalorder %s312, %s313
    %p325 = scmp.eq.s32.totalorder %s30, 1
    %p326 = por %p324, %p325
    %p328 = scmp.ne.s32.totalorder %s313, %s327
    %p329 = scmp.eq.s32.totalorder %s30, 0
    %p330 = por %p328, %p329
    %s332 = sadd.s32 %s331, 1
    %p335 = scmp.eq.s32.totalorder %s24, 1
    %p336 = scmp.ne.s32.totalorder %s331, %s333
    %p337 = scmp.eq.s32.totalorder %s24, 0
    %p338 = por %p336, %p337
    %p339 = scmp.ne.s32.totalorder %s331, %s333
    %p340 = scmp.eq.s32.totalorder %s29, 1
    %p341 = por %p339, %p340
    %p342 = scmp.ne.s32.totalorder %s333, %s334
    %p343 = scmp.eq.s32.totalorder %s29, 0
    %p344 = por %p342, %p343
    %p345 = scmp.ne.s32.totalorder %s333, %s334
    %p346 = scmp.eq.s32.totalorder %s30, 1
    %p347 = por %p345, %p346
    %p349 = scmp.ne.s32.totalorder %s334, %s348
    %p350 = scmp.eq.s32.totalorder %s30, 0
    %p351 = por %p349, %p350
    %s353 = sadd.s32 %s352, 1
    %p356 = scmp.eq.s32.totalorder %s24, 1
    %p357 = scmp.ne.s32.totalorder %s352, %s354
    %p358 = scmp.eq.s32.totalorder %s24, 0
    %p359 = por %p357, %p358
    %p360 = scmp.ne.s32.totalorder %s352, %s354
    %p361 = scmp.eq.s32.totalorder %s29, 1
    %p362 = por %p360, %p361
    %p363 = scmp.ne.s32.totalorder %s354, %s355
    %p364 = scmp.eq.s32.totalorder %s29, 0
    %p365 = por %p363, %p364
    %p366 = scmp.ne.s32.totalorder %s354, %s355
    %p367 = scmp.eq.s32.totalorder %s30, 1
    %p368 = por %p366, %p367
    %p370 = scmp.ne.s32.totalorder %s355, %s369
    %p371 = scmp.eq.s32.totalorder %s30, 0
    %p372 = por %p370, %p371
    %s373 = ssub.s32 %s24, %s31
    %p374 = scmp.eq.s32.totalorder %s373, 0
    %s376 = sadd.s32 %s375, 1
    %s377 = scalar_select %p374, %s375, %s376
    %p380 = pneg %p374
    %p381 = scmp.eq.s32.totalorder %s24, 1
    %p382 = por %p380, %p381
    %p383 = scmp.ne.s32.totalorder %s375, %s378
    %p384 = scmp.eq.s32.totalorder %s24, 0
    %p385 = por %p383, %p384
    %p386 = scmp.ne.s32.totalorder %s375, %s378
    %p387 = scmp.eq.s32.totalorder %s29, 1
    %p388 = por %p386, %p387
    %p389 = scmp.ne.s32.totalorder %s378, %s379
    %p390 = scmp.eq.s32.totalorder %s29, 0
    %p391 = por %p389, %p390
    %p392 = scmp.ne.s32.totalorder %s378, %s379
    %p393 = scmp.eq.s32.totalorder %s30, 1
    %p394 = por %p392, %p393
    %p396 = scmp.ne.s32.totalorder %s379, %s395
    %p397 = scmp.eq.s32.totalorder %s30, 0
    %p398 = por %p396, %p397
    %p399 = scmp.le.s32.totalorder 1, %s24
    %p400 = scmp.lt.s32.totalorder %s24, 3
    %p401 = pnand %p399, %p400
    %p402 = pneg %p401
    // Predicated region
    $region9: #{decoder_forward.1} parent=5 // pred_check
      _
    $region10: #{decoder_forward.1} parent=5 // pred_check_branch
      %404 = sbr.rel (%p401) target = $region12
    $region11: #{decoder_forward.1} parent=5 // pred_region
      %s405 = ssub.s32 %s24, 1
      // Predicated region
      $region13: #{decoder_forward.1} parent=11 // pred_check
        %p406 = pneg %p71
      $region14: #{decoder_forward.1} parent=11 // pred_check_branch
        %408 = sbr.rel (%p406) target = $region16
      $region15: #{decoder_forward.1} parent=11 // pred_region
        _
      $region16: #{decoder_forward.1} parent=11 // pred_fallthru
        _
      // Predicated region
      $region17: #{decoder_forward.1} parent=11 // pred_check
        %p409 = pneg %p92
      $region18: #{decoder_forward.1} parent=11 // pred_check_branch
        %411 = sbr.rel (%p409) target = $region20
      $region19: #{decoder_forward.1} parent=11 // pred_region
        _
      $region20: #{decoder_forward.1} parent=11 // pred_fallthru
        _
      // Predicated region
      $region21: #{decoder_forward.1} parent=11 // pred_check
        %p412 = pneg %p113
      $region22: #{decoder_forward.1} parent=11 // pred_check_branch
        %414 = sbr.rel (%p412) target = $region24
      $region23: #{decoder_forward.1} parent=11 // pred_region
        _
      $region24: #{decoder_forward.1} parent=11 // pred_fallthru
        _
      // Predicated region
      $region25: #{decoder_forward.1} parent=11 // pred_check
        %p415 = pneg %p134
      $region26: #{decoder_forward.1} parent=11 // pred_check_branch
        %417 = sbr.rel (%p415) target = $region28
      $region27: #{decoder_forward.1} parent=11 // pred_region
        _
      $region28: #{decoder_forward.1} parent=11 // pred_fallthru
        _
      // Predicated region
      $region29: #{decoder_forward.1} parent=11 // pred_check
        %p418 = pneg %p155
      $region30: #{decoder_forward.1} parent=11 // pred_check_branch
        %420 = sbr.rel (%p418) target = $region32
      $region31: #{decoder_forward.1} parent=11 // pred_region
        _
      $region32: #{decoder_forward.1} parent=11 // pred_fallthru
        _
      // Predicated region
      $region33: #{decoder_forward.1} parent=11 // pred_check
        %p421 = pneg %p176
      $region34: #{decoder_forward.1} parent=11 // pred_check_branch
        %423 = sbr.rel (%p421) target = $region36
      $region35: #{decoder_forward.1} parent=11 // pred_region
        _
      $region36: #{decoder_forward.1} parent=11 // pred_fallthru
        _
      // Predicated region
      $region37: #{decoder_forward.1} parent=11 // pred_check
        %p424 = pneg %p197
      $region38: #{decoder_forward.1} parent=11 // pred_check_branch
        %426 = sbr.rel (%p424) target = $region40
      $region39: #{decoder_forward.1} parent=11 // pred_region
        _
      $region40: #{decoder_forward.1} parent=11 // pred_fallthru
        _
      // Predicated region
      $region41: #{decoder_forward.1} parent=11 // pred_check
        %p427 = pneg %p218
      $region42: #{decoder_forward.1} parent=11 // pred_check_branch
        %429 = sbr.rel (%p427) target = $region44
      $region43: #{decoder_forward.1} parent=11 // pred_region
        _
      $region44: #{decoder_forward.1} parent=11 // pred_fallthru
        _
      // Predicated region
      $region45: #{decoder_forward.1} parent=11 // pred_check
        %p430 = pneg %p239
      $region46: #{decoder_forward.1} parent=11 // pred_check_branch
        %432 = sbr.rel (%p430) target = $region48
      $region47: #{decoder_forward.1} parent=11 // pred_region
        _
      $region48: #{decoder_forward.1} parent=11 // pred_fallthru
        _
      // Predicated region
      $region49: #{decoder_forward.1} parent=11 // pred_check
        %p433 = pneg %p260
      $region50: #{decoder_forward.1} parent=11 // pred_check_branch
        %435 = sbr.rel (%p433) target = $region52
      $region51: #{decoder_forward.1} parent=11 // pred_region
        _
      $region52: #{decoder_forward.1} parent=11 // pred_fallthru
        _
      // Predicated region
      $region53: #{decoder_forward.1} parent=11 // pred_check
        %p436 = pneg %p281
      $region54: #{decoder_forward.1} parent=11 // pred_check_branch
        %438 = sbr.rel (%p436) target = $region56
      $region55: #{decoder_forward.1} parent=11 // pred_region
        _
      $region56: #{decoder_forward.1} parent=11 // pred_fallthru
        _
      // Predicated region
      $region57: #{decoder_forward.1} parent=11 // pred_check
        %p439 = pneg %p302
      $region58: #{decoder_forward.1} parent=11 // pred_check_branch
        %441 = sbr.rel (%p439) target = $region60
      $region59: #{decoder_forward.1} parent=11 // pred_region
        _
      $region60: #{decoder_forward.1} parent=11 // pred_fallthru
        _
      // Predicated region
      $region61: #{decoder_forward.1} parent=11 // pred_check
        %p442 = pneg %p323
      $region62: #{decoder_forward.1} parent=11 // pred_check_branch
        %444 = sbr.rel (%p442) target = $region64
      $region63: #{decoder_forward.1} parent=11 // pred_region
        _
      $region64: #{decoder_forward.1} parent=11 // pred_fallthru
        _
      // Predicated region
      $region65: #{decoder_forward.1} parent=11 // pred_check
        %p445 = pneg %p344
      $region66: #{decoder_forward.1} parent=11 // pred_check_branch
        %447 = sbr.rel (%p445) target = $region68
      $region67: #{decoder_forward.1} parent=11 // pred_region
        _
      $region68: #{decoder_forward.1} parent=11 // pred_fallthru
        _
      // Predicated region
      $region69: #{decoder_forward.1} parent=11 // pred_check
        %p448 = pneg %p365
      $region70: #{decoder_forward.1} parent=11 // pred_check_branch
        %450 = sbr.rel (%p448) target = $region72
      $region71: #{decoder_forward.1} parent=11 // pred_region
        _
      $region72: #{decoder_forward.1} parent=11 // pred_fallthru
        _
    $region12: #{decoder_forward.1} parent=5 // pred_fallthru
      _
    %p451 = scmp.lt.s32.totalorder %s24, 2
    // Predicated region
    $region73: #{decoder_forward.1} parent=5 // pred_check
      %p452 = pneg %p451
    $region74: #{decoder_forward.1} parent=5 // pred_check_branch
      %454 = sbr.rel (%p452) target = $region76
    $region75: #{decoder_forward.1} parent=5 // pred_region
      // Predicated region
      $region77: #{decoder_forward.1} parent=75 // pred_check
        %p455 = pneg %p44
      $region78: #{decoder_forward.1} parent=75 // pred_check_branch
        %457 = sbr.rel (%p455) target = $region80
      $region79: #{decoder_forward.1} parent=75 // pred_region
        %p458 = scmp.lt.s32.totalorder %s24, 1
        %s459 = scalar_select %p458, %s24, 1
        %s460 = smul.addr %s459, 8
        %s461 = scalar_lea.vmem %s0, %s460
      $region80: #{decoder_forward.1} parent=75 // pred_fallthru
        _
    $region76: #{decoder_forward.1} parent=5 // pred_fallthru
      _
    %p462 = scmp.le.s32.totalorder 1, %s24
    %p463 = scmp.lt.s32.totalorder %s24, 3
    %p464 = pnand %p462, %p463
    %p465 = pneg %p464
    // Predicated region
    $region81: #{decoder_forward.1} parent=5 // pred_check
      _
    $region82: #{decoder_forward.1} parent=5 // pred_check_branch
      %467 = sbr.rel (%p464) target = $region84
    $region83: #{decoder_forward.1} parent=5 // pred_region
      %s468 = ssub.s32 %s24, 1
      %p469 = scmp.lt.s32.totalorder %s29, 1
      %s470 = scalar_select %p469, %s29, 1
      %s471 = smul.addr %s470, 8
      %s472 = scalar_lea.vmem %s0, %s471
      %p473 = pneg %p50
      %p474 = pneg %p47
      %p475 = pneg %p71
      %p476 = pneg %p68
      %p477 = pneg %p92
      %p478 = pneg %p89
      %p479 = pneg %p113
      %p480 = pneg %p110
      %p481 = pneg %p134
      %p482 = pneg %p131
      %p483 = pneg %p155
      %p484 = pneg %p152
      %p485 = pneg %p176
      %p486 = pneg %p173
      %p487 = pneg %p197
      %p488 = pneg %p194
      %p489 = pneg %p218
      %p490 = pneg %p215
      %p491 = pneg %p239
      %p492 = pneg %p236
      %p493 = pneg %p260
      %p494 = pneg %p257
      %p495 = pneg %p281
      %p496 = pneg %p278
      %p497 = pneg %p302
      %p498 = pneg %p299
      %p499 = pneg %p323
      %p500 = pneg %p320
      %p501 = pneg %p344
      %p502 = pneg %p341
      %p503 = pneg %p365
      %p504 = pneg %p362
      %p505 = pneg %p391
      %p506 = pneg %p388
      %p507 = scmp.lt.s32.totalorder %s29, 1
      %s508 = scalar_select %p507, %s29, 1
      %s509 = smul.addr %s508, 2
      %s510 = scalar_lea.vmem %s16, %s509
      %p511 = scmp.lt.s32.totalorder %s29, 1
      %s512 = scalar_select %p511, %s29, 1
      %s513 = smul.addr %s512, 8
      %s514 = scalar_lea.vmem %s0, %s513
      %p515 = scmp.lt.s32.totalorder %s29, 1
      %s516 = scalar_select %p515, %s29, 1
      %s517 = smul.addr %s516, 2
      %s518 = scalar_lea.vmem %s16, %s517
      %v520 = vld [vmem:[%s514] sm:$0xff]
      %v521 = vld [vmem:[%s1] sm:$0xff]
      %v522 = vld [vmem:[%s1 + $0x8] sm:$0xff]
      %v523 = vld [vmem:[%s1 + $0x10] sm:$0xff]
      %v524 = vld [vmem:[%s1 + $0x18] sm:$0xff]
      %v525 = vld [vmem:[%s2] sm:$0xff]
      %v526 = vld [vmem:[%s2 + $0x8] sm:$0xff]
      %v527 = vld [vmem:[%s2 + $0x10] sm:$0xff]
      %v528 = vld [vmem:[%s2 + $0x18] sm:$0xff]
      %vm529 = vcmask 64512
      %v531 = vsel %vm529, %v521, 0
      %v534 = vsel %vm529, %v522, 0
      %v537 = vsel %vm529, %v523, 0
      %v540 = vsel %vm529, %v524, 0
      %542 = vmatprep.subr.mxu0 0.0
      %543 = vmatpush1.msra.mxu0 %v520
      %544 = vmatprep.subr.mxu0 0.0
      %545 = vmatpush1.msra.mxu0 0.0
      %546 = vmatprep.subr.mxu0 0.0
      %547 = vmatpush1.msra.mxu0 0.0
      %548 = vmatprep.subr.mxu0 0.0
      %549 = vmatpush1.msra.mxu0 0.0
      %550 = vmatprep.subr.mxu0 0.0
      %551 = vmatpush1.msra.mxu0 0.0
      %552 = vmatprep.subr.mxu0 0.0
      %553 = vmatpush1.msra.mxu0 0.0
      %554 = vmatprep.subr.mxu0 0.0
      %555 = vmatpush1.msra.mxu0 0.0
      %556 = vmatprep.subr.mxu0 0.0
      %557 = vmatpush1.msra.mxu0 0.0
      %558 = vmatprep.subr.mxu0 0.0
      %559 = vmatpush1.msra.mxu0 0.0
      %560 = vmatprep.subr.mxu0 0.0
      %561 = vmatpush1.msra.mxu0 0.0
      %562 = vmatprep.subr.mxu0 0.0
      %563 = vmatpush1.msra.mxu0 0.0
      %564 = vmatprep.subr.mxu0 0.0
      %565 = vmatpush1.msra.mxu0 0.0
      %566 = vmatprep.subr.mxu0 0.0
      %567 = vmatpush1.msra.mxu0 0.0
      %568 = vmatprep.subr.mxu0 0.0
      %569 = vmatpush1.msra.mxu0 0.0
      %570 = vmatprep.subr.mxu0 0.0
      %571 = vmatpush1.msra.mxu0 0.0
      %572 = vmatprep.subr.mxu0 0.0
      %573 = vmatpush1.msra.mxu0 0.0
      %574 = vmatprep.subr.mxu0 0.0
      %575 = vmatpush1.msra.mxu0 0.0
      %576 = vmatprep.subr.mxu0 0.0
      %577 = vmatpush1.msra.mxu0 0.0
      %578 = vmatprep.subr.mxu0 0.0
      %579 = vmatpush1.msra.mxu0 0.0
      %580 = vmatprep.subr.mxu0 0.0
      %581 = vmatpush1.msra.mxu0 0.0
      %582 = vmatprep.subr.mxu0 0.0
      %583 = vmatpush1.msra.mxu0 0.0
      %584 = vmatprep.subr.mxu0 0.0
      %585 = vmatpush1.msra.mxu0 0.0
      %586 = vmatprep.subr.mxu0 0.0
      %587 = vmatpush1.msra.mxu0 0.0
      %588 = vmatprep.subr.mxu0 0.0
      %589 = vmatpush1.msra.mxu0 0.0
      %590 = vmatprep.subr.mxu0 0.0
      %591 = vmatpush1.msra.mxu0 0.0
      %592 = vmatprep.subr.mxu0 0.0
      %593 = vmatpush1.msra.mxu0 0.0
      %594 = vmatprep.subr.mxu0 0.0
      %595 = vmatpush1.msra.mxu0 0.0
      %596 = vmatprep.subr.mxu0 0.0
      %597 = vmatpush1.msra.mxu0 0.0
      %598 = vmatprep.subr.mxu0 0.0
      %599 = vmatpush1.msra.mxu0 0.0
      %600 = vmatprep.subr.mxu0 0.0
      %601 = vmatpush1.msra.mxu0 0.0
      %602 = vmatprep.subr.mxu0 0.0
      %603 = vmatpush1.msra.mxu0 0.0
      %604 = vmatprep.subr.mxu0 0.0
      %605 = vmatpush1.msra.mxu0 0.0
      %606 = vmatprep.mubr.f32.mxu0 0.0
      %607 = vmatmul.mubr.f32.gmra.mrb[0].mxu0 %v531
      %v608 = vpop.f32.mrb[0].mxu0
      %v609 = vadd.f32 %v525, %v608
      %v610 = vpop.f32.mrb[0].mxu0
      %611 = vmatprep.mubr.f32.mxu0 0.0
      %612 = vmatmul.mubr.f32.gmra.mrb[0].mxu0 %v534
      %v613 = vpop.f32.mrb[0].mxu0
      %v614 = vadd.f32 %v526, %v613
      %v615 = vpop.f32.mrb[0].mxu0
      %616 = vmatprep.mubr.f32.mxu0 0.0
      %617 = vmatmul.mubr.f32.gmra.mrb[0].mxu0 %v537
      %v618 = vpop.f32.mrb[0].mxu0
      %v619 = vadd.f32 %v527, %v618
      %v620 = vpop.f32.mrb[0].mxu0
      %621 = vmatprep.mubr.f32.mxu0 0.0
      %622 = vmatmul.mubr.f32.gmra.mrb[0].mxu0 %v540
      %v623 = vpop.f32.mrb[0].mxu0
      %v624 = vadd.f32 %v528, %v623
      %v625 = vpop.f32.mrb[0].mxu0
      %626 = vdwg.mxu0
      %v627 = vmax.f32 %v609, 0.0
      %v628 = vmax.f32 %v614, 0.0
      %v629 = vmax.f32 %v619, 0.0
      %v630 = vmax.f32 %v624, 0.0
      %v631 = vpack.c.bf16 %v628, %v627
      %v632 = vpack.c.bf16 %v630, %v629
      %v633 = vld [vmem:[%s3] sm:$0x1]
      %vm634 = vcmask 7168
      %v636 = vsel %vm634, %v631, 0
      %v639 = vsel %vm634, %v632, 0
      %vm641 = vcmask 1040384
      %v642 = vsel 0, 4294967295, 65535
      %v643 = vsel %vm641, %v642, 0
      %v645 = vand.u32 %v633, %v643
      %647 = vmatprep.subr.bf16.mxu0 0
      %648 = vmatpush1.bf16.msra.mxu0 %v645
      %649 = vmatprep.subr.bf16.mxu0 0
      %650 = vmatpush1.bf16.msra.mxu0 0
      %651 = vmatprep.subr.bf16.mxu0 0
      %652 = vmatpush1.bf16.msra.mxu0 0
      %653 = vmatprep.subr.bf16.mxu0 0
      %654 = vmatpush1.bf16.msra.mxu0 0
      %655 = vmatprep.subr.bf16.mxu0 0
      %656 = vmatpush1.bf16.msra.mxu0 0
      %657 = vmatprep.subr.bf16.mxu0 0
      %658 = vmatpush1.bf16.msra.mxu0 0
      %659 = vmatprep.subr.bf16.mxu0 0
      %660 = vmatpush1.bf16.msra.mxu0 0
      %661 = vmatprep.subr.bf16.mxu0 0
      %662 = vmatpush1.bf16.msra.mxu0 0
      %663 = vmatprep.subr.bf16.mxu0 0
      %664 = vmatpush1.bf16.msra.mxu0 0
      %665 = vmatprep.subr.bf16.mxu0 0
      %666 = vmatpush1.bf16.msra.mxu0 0
      %667 = vmatprep.subr.bf16.mxu0 0
      %668 = vmatpush1.bf16.msra.mxu0 0
      %669 = vmatprep.subr.bf16.mxu0 0
      %670 = vmatpush1.bf16.msra.mxu0 0
      %671 = vmatprep.subr.bf16.mxu0 0
      %672 = vmatpush1.bf16.msra.mxu0 0
      %673 = vmatprep.subr.bf16.mxu0 0
      %674 = vmatpush1.bf16.msra.mxu0 0
      %675 = vmatprep.subr.bf16.mxu0 0
      %676 = vmatpush1.bf16.msra.mxu0 0
      %677 = vmatprep.subr.bf16.mxu0 0
      %678 = vmatpush1.bf16.msra.mxu0 0
      %679 = vmatprep.mubr.bf16.mxu0 0
      %680 = vmatmul.mubr.bf16.gmra.mrb[0].mxu0 %v636
      %v681 = vpop.f32.mrb[0].mxu0
      %v682 = vadd.f32 0.0, %v681
      %v683 = vpop.f32.mrb[0].mxu0
      %v684 = vpop.f32.mrb[0].mxu0
      %v685 = vadd.f32 0.0, %v684
      %v686 = vpop.f32.mrb[0].mxu0
      %687 = vmatprep.mubr.bf16.mxu0 0
      %688 = vmatmul.mubr.bf16.gmra.mrb[0].mxu0 %v639
      %v689 = vpop.f32.mrb[0].mxu0
      %v690 = vadd.f32 0.0, %v689
      %v691 = vpop.f32.mrb[0].mxu0
      %v692 = vpop.f32.mrb[0].mxu0
      %v693 = vadd.f32 0.0, %v692
      %v694 = vpop.f32.mrb[0].mxu0
      %695 = vdwg.mxu0
      %v696 = vpack.c.bf16 %v685, %v682
      %v697 = vpack.c.bf16 %v693, %v690
      %v698 = vld [vmem:[%s4] sm:$0xf]
      %v699 = vld [vmem:[%s4 + $0x4] sm:$0xf]
      %s700 = scalar_lea.vmem %s4, 8
      %v701 = vld [vmem:[%s700] sm:$0xf]
      %v702 = vld [vmem:[%s700 + $0x4] sm:$0xf]
      %v705 = vunpack.c.l.b16 %v701
      %v706 = vunpack.c.l.b16 %v702
      %v707 = vpack.c.b16 %v706, %v705
      %710 = vrot.lane.b32.xlu0 %v696, 127
      %v711 = vpop.permute.xlu0 %710
      %712 = vrot.lane.b32.xlu0 %v697, 127
      %v713 = vpop.permute.xlu0 %712
      %vm716 = vcmask 261120
      %v718 = vsel %vm716, %v707, 0
      %720 = vmatprep.subr.bf16.mxu0 0
      %721 = vmatpush1.bf16.msra.mxu0 %v711
      %722 = vmatprep.subr.bf16.mxu0 0
      %723 = vmatpush1.bf16.msra.mxu0 %v713
      %724 = vmatprep.subr.bf16.mxu0 0
      %725 = vmatpush1.bf16.msra.mxu0 0
      %726 = vmatprep.subr.bf16.mxu0 0
      %727 = vmatpush1.bf16.msra.mxu0 0
      %728 = vmatprep.subr.bf16.mxu0 0
      %729 = vmatpush1.bf16.msra.mxu0 0
      %730 = vmatprep.subr.bf16.mxu0 0
      %731 = vmatpush1.bf16.msra.mxu0 0
      %732 = vmatprep.subr.bf16.mxu0 0
      %733 = vmatpush1.bf16.msra.mxu0 0
      %734 = vmatprep.subr.bf16.mxu0 0
      %735 = vmatpush1.bf16.msra.mxu0 0
      %736 = vmatprep.subr.bf16.mxu0 0
      %737 = vmatpush1.bf16.msra.mxu0 0
      %738 = vmatprep.subr.bf16.mxu0 0
      %739 = vmatpush1.bf16.msra.mxu0 0
      %740 = vmatprep.subr.bf16.mxu0 0
      %741 = vmatpush1.bf16.msra.mxu0 0
      %742 = vmatprep.subr.bf16.mxu0 0
      %743 = vmatpush1.bf16.msra.mxu0 0
      %744 = vmatprep.subr.bf16.mxu0 0
      %745 = vmatpush1.bf16.msra.mxu0 0
      %746 = vmatprep.subr.bf16.mxu0 0
      %747 = vmatpush1.bf16.msra.mxu0 0
      %748 = vmatprep.subr.bf16.mxu0 0
      %749 = vmatpush1.bf16.msra.mxu0 0
      %750 = vmatprep.subr.bf16.mxu0 0
      %751 = vmatpush1.bf16.msra.mxu0 0
      %752 = vmatprep.mubr.bf16.mxu0 0
      %753 = vmatmul.mubr.bf16.gmra.mrb[0].mxu0 %v718
      %v754 = vpop.f32.mrb[0].mxu0
      %v755 = vadd.f32 0.0, %v754
      %v756 = vpop.f32.mrb[0].mxu0
      %v757 = vpop.f32.mrb[0].mxu0
      %v758 = vadd.f32 0.0, %v757
      %v759 = vpop.f32.mrb[0].mxu0
      %760 = vdwg.mxu0
      %v763 = vunpack.c.l.b16 %v698
      %v764 = vunpack.c.l.b16 %v699
      %v765 = vpack.c.b16 %v764, %v763
      %v767 = vsel %vm716, %v765, 0
      %769 = vmatprep.subr.bf16.mxu0 0
      %770 = vmatpush1.bf16.msra.mxu0 %v696
      %771 = vmatprep.subr.bf16.mxu0 0
      %772 = vmatpush1.bf16.msra.mxu0 %v697
      %773 = vmatprep.subr.bf16.mxu0 0
      %774 = vmatpush1.bf16.msra.mxu0 0
      %775 = vmatprep.subr.bf16.mxu0 0
      %776 = vmatpush1.bf16.msra.mxu0 0
      %777 = vmatprep.subr.bf16.mxu0 0
      %778 = vmatpush1.bf16.msra.mxu0 0
      %779 = vmatprep.subr.bf16.mxu0 0
      %780 = vmatpush1.bf16.msra.mxu0 0
      %781 = vmatprep.subr.bf16.mxu0 0
      %782 = vmatpush1.bf16.msra.mxu0 0
      %783 = vmatprep.subr.bf16.mxu0 0
      %784 = vmatpush1.bf16.msra.mxu0 0
      %785 = vmatprep.subr.bf16.mxu0 0
      %786 = vmatpush1.bf16.msra.mxu0 0
      %787 = vmatprep.subr.bf16.mxu0 0
      %788 = vmatpush1.bf16.msra.mxu0 0
      %789 = vmatprep.subr.bf16.mxu0 0
      %790 = vmatpush1.bf16.msra.mxu0 0
      %791 = vmatprep.subr.bf16.mxu0 0
      %792 = vmatpush1.bf16.msra.mxu0 0
      %793 = vmatprep.subr.bf16.mxu0 0
      %794 = vmatpush1.bf16.msra.mxu0 0
      %795 = vmatprep.subr.bf16.mxu0 0
      %796 = vmatpush1.bf16.msra.mxu0 0
      %797 = vmatprep.subr.bf16.mxu0 0
      %798 = vmatpush1.bf16.msra.mxu0 0
      %799 = vmatprep.subr.bf16.mxu0 0
      %800 = vmatpush1.bf16.msra.mxu0 0
      %801 = vmatprep.mubr.bf16.mxu0 0
      %802 = vmatmul.mubr.bf16.gmra.mrb[0].mxu0 %v767
      %v803 = vpop.f32.mrb[0].mxu0
      %v804 = vadd.f32 %v755, %v803
      %v805 = vpop.f32.mrb[0].mxu0
      %v806 = vpop.f32.mrb[0].mxu0
      %v807 = vadd.f32 %v758, %v806
      %v808 = vpop.f32.mrb[0].mxu0
      %809 = vdwg.mxu0
      %s810 = scalar_lea.vmem %s4, 16
      %v811 = vld [vmem:[%s810] sm:$0xf]
      %v812 = vld [vmem:[%s810 + $0x4] sm:$0xf]
      %v815 = vunpack.c.l.b16 %v811
      %v816 = vunpack.c.l.b16 %v812
      %v817 = vpack.c.b16 %v816, %v815
      %818 = vrot.lane.b32.xlu0 %v696, 126
      %v819 = vpop.permute.xlu0 %818
      %820 = vrot.lane.b32.xlu0 %v697, 126
      %v821 = vpop.permute.xlu0 %820
      %v825 = vsel %vm716, %v817, 0
      %827 = vmatprep.subr.bf16.mxu0 0
      %828 = vmatpush1.bf16.msra.mxu0 %v819
      %829 = vmatprep.subr.bf16.mxu0 0
      %830 = vmatpush1.bf16.msra.mxu0 %v821
      %831 = vmatprep.subr.bf16.mxu0 0
      %832 = vmatpush1.bf16.msra.mxu0 0
      %833 = vmatprep.subr.bf16.mxu0 0
      %834 = vmatpush1.bf16.msra.mxu0 0
      %835 = vmatprep.subr.bf16.mxu0 0
      %836 = vmatpush1.bf16.msra.mxu0 0
      %837 = vmatprep.subr.bf16.mxu0 0
      %838 = vmatpush1.bf16.msra.mxu0 0
      %839 = vmatprep.subr.bf16.mxu0 0
      %840 = vmatpush1.bf16.msra.mxu0 0
      %841 = vmatprep.subr.bf16.mxu0 0
      %842 = vmatpush1.bf16.msra.mxu0 0
      %843 = vmatprep.subr.bf16.mxu0 0
      %844 = vmatpush1.bf16.msra.mxu0 0
      %845 = vmatprep.subr.bf16.mxu0 0
      %846 = vmatpush1.bf16.msra.mxu0 0
      %847 = vmatprep.subr.bf16.mxu0 0
      %848 = vmatpush1.bf16.msra.mxu0 0
      %849 = vmatprep.subr.bf16.mxu0 0
      %850 = vmatpush1.bf16.msra.mxu0 0
      %851 = vmatprep.subr.bf16.mxu0 0
      %852 = vmatpush1.bf16.msra.mxu0 0
      %853 = vmatprep.subr.bf16.mxu0 0
      %854 = vmatpush1.bf16.msra.mxu0 0
      %855 = vmatprep.subr.bf16.mxu0 0
      %856 = vmatpush1.bf16.msra.mxu0 0
      %857 = vmatprep.subr.bf16.mxu0 0
      %858 = vmatpush1.bf16.msra.mxu0 0
      %859 = vmatprep.mubr.bf16.mxu0 0
      %860 = vmatmul.mubr.bf16.gmra.mrb[0].mxu0 %v825
      %v861 = vpop.f32.mrb[0].mxu0
      %v862 = vadd.f32 0.0, %v861
      %v863 = vpop.f32.mrb[0].mxu0
      %v864 = vpop.f32.mrb[0].mxu0
      %v865 = vadd.f32 0.0, %v864
      %v866 = vpop.f32.mrb[0].mxu0
      %867 = vdwg.mxu0
      %v868 = vadd.f32 %v804, %v862
      %v869 = vadd.f32 %v807, %v865
      %s870 = scalar_lea.vmem %s4, 24
      %v871 = vld [vmem:[%s870] sm:$0xf]
      %v872 = vld [vmem:[%s870 + $0x4] sm:$0xf]
      %v875 = vunpack.c.l.b16 %v871
      %v876 = vunpack.c.l.b16 %v872
      %v877 = vpack.c.b16 %v876, %v875
      %878 = vrot.lane.b32.xlu0 %v696, 124
      %v879 = vpop.permute.xlu0 %878
      %880 = vrot.lane.b32.xlu0 %v697, 124
      %v881 = vpop.permute.xlu0 %880
      %v885 = vsel %vm716, %v877, 0
      %887 = vmatprep.subr.bf16.mxu0 0
      %888 = vmatpush1.bf16.msra.mxu0 %v879
      %889 = vmatprep.subr.bf16.mxu0 0
      %890 = vmatpush1.bf16.msra.mxu0 %v881
      %891 = vmatprep.subr.bf16.mxu0 0
      %892 = vmatpush1.bf16.msra.mxu0 0
      %893 = vmatprep.subr.bf16.mxu0 0
      %894 = vmatpush1.bf16.msra.mxu0 0
      %895 = vmatprep.subr.bf16.mxu0 0
      %896 = vmatpush1.bf16.msra.mxu0 0
      %897 = vmatprep.subr.bf16.mxu0 0
      %898 = vmatpush1.bf16.msra.mxu0 0
      %899 = vmatprep.subr.bf16.mxu0 0
      %900 = vmatpush1.bf16.msra.mxu0 0
      %901 = vmatprep.subr.bf16.mxu0 0
      %902 = vmatpush1.bf16.msra.mxu0 0
      %903 = vmatprep.subr.bf16.mxu0 0
      %904 = vmatpush1.bf16.msra.mxu0 0
      %905 = vmatprep.subr.bf16.mxu0 0
      %906 = vmatpush1.bf16.msra.mxu0 0
      %907 = vmatprep.subr.bf16.mxu0 0
      %908 = vmatpush1.bf16.msra.mxu0 0
      %909 = vmatprep.subr.bf16.mxu0 0
      %910 = vmatpush1.bf16.msra.mxu0 0
      %911 = vmatprep.subr.bf16.mxu0 0
      %912 = vmatpush1.bf16.msra.mxu0 0
      %913 = vmatprep.subr.bf16.mxu0 0
      %914 = vmatpush1.bf16.msra.mxu0 0
      %915 = vmatprep.subr.bf16.mxu0 0
      %916 = vmatpush1.bf16.msra.mxu0 0
      %917 = vmatprep.subr.bf16.mxu0 0
      %918 = vmatpush1.bf16.msra.mxu0 0
      %919 = vmatprep.mubr.bf16.mxu0 0
      %920 = vmatmul.mubr.bf16.gmra.mrb[0].mxu0 %v885
      %v921 = vpop.f32.mrb[0].mxu0
      %v922 = vadd.f32 0.0, %v921
      %v923 = vpop.f32.mrb[0].mxu0
      %v924 = vpop.f32.mrb[0].mxu0
      %v925 = vadd.f32 0.0, %v924
      %v926 = vpop.f32.mrb[0].mxu0
      %927 = vdwg.mxu0
      %v928 = vadd.f32 %v868, %v922
      %v929 = vadd.f32 %v869, %v925
      %s930 = scalar_lea.vmem %s4, 32
      %v931 = vld [vmem:[%s930] sm:$0xf]
      %v932 = vld [vmem:[%s930 + $0x4] sm:$0xf]
      %v935 = vunpack.c.l.b16 %v931
      %v936 = vunpack.c.l.b16 %v932
      %v937 = vpack.c.b16 %v936, %v935
      %938 = vrot.lane.b32.xlu0 %v696, 123
      %v939 = vpop.permute.xlu0 %938
      %940 = vrot.lane.b32.xlu0 %v697, 123
      %v941 = vpop.permute.xlu0 %940
      %v945 = vsel %vm716, %v937, 0
      %947 = vmatprep.subr.bf16.mxu0 0
      %948 = vmatpush1.bf16.msra.mxu0 %v939
      %949 = vmatprep.subr.bf16.mxu0 0
      %950 = vmatpush1.bf16.msra.mxu0 %v941
      %951 = vmatprep.subr.bf16.mxu0 0
      %952 = vmatpush1.bf16.msra.mxu0 0
      %953 = vmatprep.subr.bf16.mxu0 0
      %954 = vmatpush1.bf16.msra.mxu0 0
      %955 = vmatprep.subr.bf16.mxu0 0
      %956 = vmatpush1.bf16.msra.mxu0 0
      %957 = vmatprep.subr.bf16.mxu0 0
      %958 = vmatpush1.bf16.msra.mxu0 0
      %959 = vmatprep.subr.bf16.mxu0 0
      %960 = vmatpush1.bf16.msra.mxu0 0
      %961 = vmatprep.subr.bf16.mxu0 0
      %962 = vmatpush1.bf16.msra.mxu0 0
      %963 = vmatprep.subr.bf16.mxu0 0
      %964 = vmatpush1.bf16.msra.mxu0 0
      %965 = vmatprep.subr.bf16.mxu0 0
      %966 = vmatpush1.bf16.msra.mxu0 0
      %967 = vmatprep.subr.bf16.mxu0 0
      %968 = vmatpush1.bf16.msra.mxu0 0
      %969 = vmatprep.subr.bf16.mxu0 0
      %970 = vmatpush1.bf16.msra.mxu0 0
      %971 = vmatprep.subr.bf16.mxu0 0
      %972 = vmatpush1.bf16.msra.mxu0 0
      %973 = vmatprep.subr.bf16.mxu0 0
      %974 = vmatpush1.bf16.msra.mxu0 0
      %975 = vmatprep.subr.bf16.mxu0 0
      %976 = vmatpush1.bf16.msra.mxu0 0
      %977 = vmatprep.subr.bf16.mxu0 0
      %978 = vmatpush1.bf16.msra.mxu0 0
      %979 = vmatprep.mubr.bf16.mxu0 0
      %980 = vmatmul.mubr.bf16.gmra.mrb[0].mxu0 %v945
      %v981 = vpop.f32.mrb[0].mxu0
      %v982 = vadd.f32 0.0, %v981
      %v983 = vpop.f32.mrb[0].mxu0
      %v984 = vpop.f32.mrb[0].mxu0
      %v985 = vadd.f32 0.0, %v984
      %v986 = vpop.f32.mrb[0].mxu0
      %987 = vdwg.mxu0
      %v988 = vadd.f32 %v928, %v982
      %v989 = vadd.f32 %v929, %v985
      %s990 = scalar_lea.vmem %s4, 40
      %v991 = vld [vmem:[%s990] sm:$0xf]
      %v992 = vld [vmem:[%s990 + $0x4] sm:$0xf]
      %v995 = vunpack.c.l.b16 %v991
      %v996 = vunpack.c.l.b16 %v992
      %v997 = vpack.c.b16 %v996, %v995
      %998 = vrot.lane.b32.xlu0 %v696, 122
      %v999 = vpop.permute.xlu0 %998
      %1000 = vrot.lane.b32.xlu0 %v697, 122
      %v1001 = vpop.permute.xlu0 %1000
      %v1005 = vsel %vm716, %v997, 0
      %1007 = vmatprep.subr.bf16.mxu0 0
      %1008 = vmatpush1.bf16.msra.mxu0 %v999
      %1009 = vmatprep.subr.bf16.mxu0 0
      %1010 = vmatpush1.bf16.msra.mxu0 %v1001
      %1011 = vmatprep.subr.bf16.mxu0 0
      %1012 = vmatpush1.bf16.msra.mxu0 0
      %1013 = vmatprep.subr.bf16.mxu0 0
      %1014 = vmatpush1.bf16.msra.mxu0 0
      %1015 = vmatprep.subr.bf16.mxu0 0
      %1016 = vmatpush1.bf16.msra.mxu0 0
      %1017 = vmatprep.subr.bf16.mxu0 0
      %1018 = vmatpush1.bf16.msra.mxu0 0
      %1019 = vmatprep.subr.bf16.mxu0 0
      %1020 = vmatpush1.bf16.msra.mxu0 0
      %1021 = vmatprep.subr.bf16.mxu0 0
      %1022 = vmatpush1.bf16.msra.mxu0 0
      %1023 = vmatprep.subr.bf16.mxu0 0
      %1024 = vmatpush1.bf16.msra.mxu0 0
      %1025 = vmatprep.subr.bf16.mxu0 0
      %1026 = vmatpush1.bf16.msra.mxu0 0
      %1027 = vmatprep.subr.bf16.mxu0 0
      %1028 = vmatpush1.bf16.msra.mxu0 0
      %1029 = vmatprep.subr.bf16.mxu0 0
      %1030 = vmatpush1.bf16.msra.mxu0 0
      %1031 = vmatprep.subr.bf16.mxu0 0
      %1032 = vmatpush1.bf16.msra.mxu0 0
      %1033 = vmatprep.subr.bf16.mxu0 0
      %1034 = vmatpush1.bf16.msra.mxu0 0
      %1035 = vmatprep.subr.bf16.mxu0 0
      %1036 = vmatpush1.bf16.msra.mxu0 0
      %1037 = vmatprep.subr.bf16.mxu0 0
      %1038 = vmatpush1.bf16.msra.mxu0 0
      %1039 = vmatprep.mubr.bf16.mxu0 0
      %1040 = vmatmul.mubr.bf16.gmra.mrb[0].mxu0 %v1005
      %v1041 = vpop.f32.mrb[0].mxu0
      %v1042 = vadd.f32 0.0, %v1041
      %v1043 = vpop.f32.mrb[0].mxu0
      %v1044 = vpop.f32.mrb[0].mxu0
      %v1045 = vadd.f32 0.0, %v1044
      %v1046 = vpop.f32.mrb[0].mxu0
      %1047 = vdwg.mxu0
      %v1048 = vadd.f32 %v988, %v1042
      %v1049 = vadd.f32 %v989, %v1045
      %s1050 = scalar_lea.vmem %s4, 48
      %v1051 = vld [vmem:[%s1050] sm:$0xf]
      %v1052 = vld [vmem:[%s1050 + $0x4] sm:$0xf]
      %v1055 = vunpack.c.l.b16 %v1051
      %v1056 = vunpack.c.l.b16 %v1052
      %v1057 = vpack.c.b16 %v1056, %v1055
      %1058 = vrot.lane.b32.xlu0 %v696, 120
      %v1059 = vpop.permute.xlu0 %1058
      %1060 = vrot.lane.b32.xlu0 %v697, 120
      %v1061 = vpop.permute.xlu0 %1060
      %v1065 = vsel %vm716, %v1057, 0
      %1067 = vmatprep.subr.bf16.mxu0 0
      %1068 = vmatpush1.bf16.msra.mxu0 %v1059
      %1069 = vmatprep.subr.bf16.mxu0 0
      %1070 = vmatpush1.bf16.msra.mxu0 %v1061
      %1071 = vmatprep.subr.bf16.mxu0 0
      %1072 = vmatpush1.bf16.msra.mxu0 0
      %1073 = vmatprep.subr.bf16.mxu0 0
      %1074 = vmatpush1.bf16.msra.mxu0 0
      %1075 = vmatprep.subr.bf16.mxu0 0
      %1076 = vmatpush1.bf16.msra.mxu0 0
      %1077 = vmatprep.subr.bf16.mxu0 0
      %1078 = vmatpush1.bf16.msra.mxu0 0
      %1079 = vmatprep.subr.bf16.mxu0 0
      %1080 = vmatpush1.bf16.msra.mxu0 0
      %1081 = vmatprep.subr.bf16.mxu0 0
      %1082 = vmatpush1.bf16.msra.mxu0 0
      %1083 = vmatprep.subr.bf16.mxu0 0
      %1084 = vmatpush1.bf16.msra.mxu0 0
      %1085 = vmatprep.subr.bf16.mxu0 0
      %1086 = vmatpush1.bf16.msra.mxu0 0
      %1087 = vmatprep.subr.bf16.mxu0 0
      %1088 = vmatpush1.bf16.msra.mxu0 0
      %1089 = vmatprep.subr.bf16.mxu0 0
      %1090 = vmatpush1.bf16.msra.mxu0 0
      %1091 = vmatprep.subr.bf16.mxu0 0
      %1092 = vmatpush1.bf16.msra.mxu0 0
      %1093 = vmatprep.subr.bf16.mxu0 0
      %1094 = vmatpush1.bf16.msra.mxu0 0
      %1095 = vmatprep.subr.bf16.mxu0 0
      %1096 = vmatpush1.bf16.msra.mxu0 0
      %1097 = vmatprep.subr.bf16.mxu0 0
      %1098 = vmatpush1.bf16.msra.mxu0 0
      %1099 = vmatprep.mubr.bf16.mxu0 0
      %1100 = vmatmul.mubr.bf16.gmra.mrb[0].mxu0 %v1065
      %v1101 = vpop.f32.mrb[0].mxu0
      %v1102 = vadd.f32 0.0, %v1101
      %v1103 = vpop.f32.mrb[0].mxu0
      %v1104 = vpop.f32.mrb[0].mxu0
      %v1105 = vadd.f32 0.0, %v1104
      %v1106 = vpop.f32.mrb[0].mxu0
      %1107 = vdwg.mxu0
      %v1108 = vadd.f32 %v1048, %v1102
      %v1109 = vadd.f32 %v1049, %v1105
      %s1110 = scalar_lea.vmem %s4, 56
      %v1111 = vld [vmem:[%s1110] sm:$0xf]
      %v1112 = vld [vmem:[%s1110 + $0x4] sm:$0xf]
      %v1115 = vunpack.c.l.b16 %v1111
      %v1116 = vunpack.c.l.b16 %v1112
      %v1117 = vpack.c.b16 %v1116, %v1115
      %1118 = vrot.lane.b32.xlu0 %v696, 119
      %v1119 = vpop.permute.xlu0 %1118
      %1120 = vrot.lane.b32.xlu0 %v697, 119
      %v1121 = vpop.permute.xlu0 %1120
      %v1125 = vsel %vm716, %v1117, 0
      %1127 = vmatprep.subr.bf16.mxu0 0
      %1128 = vmatpush1.bf16.msra.mxu0 %v1119
      %1129 = vmatprep.subr.bf16.mxu0 0
      %1130 = vmatpush1.bf16.msra.mxu0 %v1121
      %1131 = vmatprep.subr.bf16.mxu0 0
      %1132 = vmatpush1.bf16.msra.mxu0 0
      %1133 = vmatprep.subr.bf16.mxu0 0
      %1134 = vmatpush1.bf16.msra.mxu0 0
      %1135 = vmatprep.subr.bf16.mxu0 0
      %1136 = vmatpush1.bf16.msra.mxu0 0
      %1137 = vmatprep.subr.bf16.mxu0 0
      %1138 = vmatpush1.bf16.msra.mxu0 0
      %1139 = vmatprep.subr.bf16.mxu0 0
      %1140 = vmatpush1.bf16.msra.mxu0 0
      %1141 = vmatprep.subr.bf16.mxu0 0
      %1142 = vmatpush1.bf16.msra.mxu0 0
      %1143 = vmatprep.subr.bf16.mxu0 0
      %1144 = vmatpush1.bf16.msra.mxu0 0
      %1145 = vmatprep.subr.bf16.mxu0 0
      %1146 = vmatpush1.bf16.msra.mxu0 0
      %1147 = vmatprep.subr.bf16.mxu0 0
      %1148 = vmatpush1.bf16.msra.mxu0 0
      %1149 = vmatprep.subr.bf16.mxu0 0
      %1150 = vmatpush1.bf16.msra.mxu0 0
      %1151 = vmatprep.subr.bf16.mxu0 0
      %1152 = vmatpush1.bf16.msra.mxu0 0
      %1153 = vmatprep.subr.bf16.mxu0 0
      %1154 = vmatpush1.bf16.msra.mxu0 0
      %1155 = vmatprep.subr.bf16.mxu0 0
      %1156 = vmatpush1.bf16.msra.mxu0 0
      %1157 = vmatprep.subr.bf16.mxu0 0
      %1158 = vmatpush1.bf16.msra.mxu0 0
      %1159 = vmatprep.mubr.bf16.mxu0 0
      %1160 = vmatmul.mubr.bf16.gmra.mrb[0].mxu0 %v1125
      %v1161 = vpop.f32.mrb[0].mxu0
      %v1162 = vadd.f32 0.0, %v1161
      %v1163 = vpop.f32.mrb[0].mxu0
      %v1164 = vpop.f32.mrb[0].mxu0
      %v1165 = vadd.f32 0.0, %v1164
      %v1166 = vpop.f32.mrb[0].mxu0
      %1167 = vdwg.mxu0
      %v1168 = vadd.f32 %v1108, %v1162
      %v1169 = vadd.f32 %v1109, %v1165
      %s1170 = scalar_lea.vmem %s4, 64
      %v1171 = vld [vmem:[%s1170] sm:$0xf]
      %v1172 = vld [vmem:[%s1170 + $0x4] sm:$0xf]
      %v1175 = vunpack.c.l.b16 %v1171
      %v1176 = vunpack.c.l.b16 %v1172
      %v1177 = vpack.c.b16 %v1176, %v1175
      %1178 = vrot.lane.b32.xlu0 %v696, 118
      %v1179 = vpop.permute.xlu0 %1178
      %1180 = vrot.lane.b32.xlu0 %v697, 118
      %v1181 = vpop.permute.xlu0 %1180
      %v1185 = vsel %vm716, %v1177, 0
      %1187 = vmatprep.subr.bf16.mxu0 0
      %1188 = vmatpush1.bf16.msra.mxu0 %v1179
      %1189 = vmatprep.subr.bf16.mxu0 0
      %1190 = vmatpush1.bf16.msra.mxu0 %v1181
      %1191 = vmatprep.subr.bf16.mxu0 0
      %1192 = vmatpush1.bf16.msra.mxu0 0
      %1193 = vmatprep.subr.bf16.mxu0 0
      %1194 = vmatpush1.bf16.msra.mxu0 0
      %1195 = vmatprep.subr.bf16.mxu0 0
      %1196 = vmatpush1.bf16.msra.mxu0 0
      %1197 = vmatprep.subr.bf16.mxu0 0
      %1198 = vmatpush1.bf16.msra.mxu0 0
      %1199 = vmatprep.subr.bf16.mxu0 0
      %1200 = vmatpush1.bf16.msra.mxu0 0
      %1201 = vmatprep.subr.bf16.mxu0 0
      %1202 = vmatpush1.bf16.msra.mxu0 0
      %1203 = vmatprep.subr.bf16.mxu0 0
      %1204 = vmatpush1.bf16.msra.mxu0 0
      %1205 = vmatprep.subr.bf16.mxu0 0
      %1206 = vmatpush1.bf16.msra.mxu0 0
      %1207 = vmatprep.subr.bf16.mxu0 0
      %1208 = vmatpush1.bf16.msra.mxu0 0
      %1209 = vmatprep.subr.bf16.mxu0 0
      %1210 = vmatpush1.bf16.msra.mxu0 0
      %1211 = vmatprep.subr.bf16.mxu0 0
      %1212 = vmatpush1.bf16.msra.mxu0 0
      %1213 = vmatprep.subr.bf16.mxu0 0
      %1214 = vmatpush1.bf16.msra.mxu0 0
      %1215 = vmatprep.subr.bf16.mxu0 0
      %1216 = vmatpush1.bf16.msra.mxu0 0
      %1217 = vmatprep.subr.bf16.mxu0 0
      %1218 = vmatpush1.bf16.msra.mxu0 0
      %1219 = vmatprep.mubr.bf16.mxu0 0
      %1220 = vmatmul.mubr.bf16.gmra.mrb[0].mxu0 %v1185
      %v1221 = vpop.f32.mrb[0].mxu0
      %v1222 = vadd.f32 0.0, %v1221
      %v1223 = vpop.f32.mrb[0].mxu0
      %v1224 = vpop.f32.mrb[0].mxu0
      %v1225 = vadd.f32 0.0, %v1224
      %v1226 = vpop.f32.mrb[0].mxu0
      %1227 = vdwg.mxu0
      %v1228 = vadd.f32 %v1168, %v1222
      %v1229 = vadd.f32 %v1169, %v1225
      %v1230 = vld [vmem:[%s5] sm:$0xff]
      %v1231 = vld [vmem:[%s5 + $0x8] sm:$0xff]
      %1233 = vset.pattern.permute.xlu0 0
      %1234 = vperm.xlu0 %1233, %v1230
      %v1235 = vpop.permute.xlu0 %1234
      %1238 = vset.pattern.permute.xlu0 0
      %1239 = vperm.xlu0 %1238, %v1231
      %v1240 = vpop.permute.xlu0 %1239
      %v1242 = vadd.f32 %v1228, %v1235
      %v1243 = vadd.f32 %v1229, %v1240
      %vm1244 = vcmp.gt.f32.partialorder %v1242, 0.0
      %vm1245 = vcmp.gt.f32.partialorder %v1243, 0.0
      %v1246 = vmul.f32 %v1242, 0.2
      %v1247 = vmul.f32 %v1243, 0.2
      %v1248 = vsel %vm1244, %v1242, %v1246
      %v1249 = vsel %vm1245, %v1243, %v1247
      %v1250 = vpack.c.bf16 %v1249, %v1248
      %v1251 = vld [vmem:[%s6] sm:$0xf]
      %v1253 = vsel %vm529, %v1250, 0
      %vm1255 = vcmask 1043456
      %v1257 = vsel %vm1255, %v1251, 0
      %1259 = vmatprep.subr.bf16.mxu0 0
      %1260 = vmatpush1.bf16.msra.mxu0 %v1257
      %1261 = vmatprep.subr.bf16.mxu0 0
      %1262 = vmatpush1.bf16.msra.mxu0 0
      %1263 = vmatprep.subr.bf16.mxu0 0
      %1264 = vmatpush1.bf16.msra.mxu0 0
      %1265 = vmatprep.subr.bf16.mxu0 0
      %1266 = vmatpush1.bf16.msra.mxu0 0
      %1267 = vmatprep.subr.bf16.mxu0 0
      %1268 = vmatpush1.bf16.msra.mxu0 0
      %1269 = vmatprep.subr.bf16.mxu0 0
      %1270 = vmatpush1.bf16.msra.mxu0 0
      %1271 = vmatprep.subr.bf16.mxu0 0
      %1272 = vmatpush1.bf16.msra.mxu0 0
      %1273 = vmatprep.subr.bf16.mxu0 0
      %1274 = vmatpush1.bf16.msra.mxu0 0
      %1275 = vmatprep.subr.bf16.mxu0 0
      %1276 = vmatpush1.bf16.msra.mxu0 0
      %1277 = vmatprep.subr.bf16.mxu0 0
      %1278 = vmatpush1.bf16.msra.mxu0 0
      %1279 = vmatprep.subr.bf16.mxu0 0
      %1280 = vmatpush1.bf16.msra.mxu0 0
      %1281 = vmatprep.subr.bf16.mxu0 0
      %1282 = vmatpush1.bf16.msra.mxu0 0
      %1283 = vmatprep.subr.bf16.mxu0 0
      %1284 = vmatpush1.bf16.msra.mxu0 0
      %1285 = vmatprep.subr.bf16.mxu0 0
      %1286 = vmatpush1.bf16.msra.mxu0 0
      %1287 = vmatprep.subr.bf16.mxu0 0
      %1288 = vmatpush1.bf16.msra.mxu0 0
      %1289 = vmatprep.subr.bf16.mxu0 0
      %1290 = vmatpush1.bf16.msra.mxu0 0
      %1291 = vmatprep.mubr.bf16.mxu0 0
      %1292 = vmatmul.mubr.bf16.gmra.mrb[0].mxu0 %v1253
      %v1293 = vpop.f32.mrb[0].mxu0
      %v1294 = vadd.f32 0.0, %v1293
      %v1295 = vpop.f32.mrb[0].mxu0
      %v1296 = vpop.f32.mrb[0].mxu0
      %v1297 = vadd.f32 0.0, %v1296
      %v1298 = vpop.f32.mrb[0].mxu0
      %1299 = vdwg.mxu0
      %v1300 = vpack.c.bf16 %v1297, %v1294
      %v1301 = vld [vmem:[%s7] sm:$0xf]
      %s1302 = scalar_lea.vmem %s7, 4
      %v1303 = vld [vmem:[%s1302] sm:$0xf]
      %1305 = vrot.lane.b32.xlu0 %v1300, 127
      %v1306 = vpop.permute.xlu0 %1305
      %vm1308 = vcmask 130048
      %v1310 = vsel %vm1308, %v1303, 0
      %1312 = vmatprep.subr.bf16.mxu0 0
      %1313 = vmatpush1.bf16.msra.mxu0 %v1306
      %1314 = vmatprep.subr.bf16.mxu0 0
      %1315 = vmatpush1.bf16.msra.mxu0 0
      %1316 = vmatprep.subr.bf16.mxu0 0
      %1317 = vmatpush1.bf16.msra.mxu0 0
      %1318 = vmatprep.subr.bf16.mxu0 0
      %1319 = vmatpush1.bf16.msra.mxu0 0
      %1320 = vmatprep.subr.bf16.mxu0 0
      %1321 = vmatpush1.bf16.msra.mxu0 0
      %1322 = vmatprep.subr.bf16.mxu0 0
      %1323 = vmatpush1.bf16.msra.mxu0 0
      %1324 = vmatprep.subr.bf16.mxu0 0
      %1325 = vmatpush1.bf16.msra.mxu0 0
      %1326 = vmatprep.subr.bf16.mxu0 0
      %1327 = vmatpush1.bf16.msra.mxu0 0
      %1328 = vmatprep.subr.bf16.mxu0 0
      %1329 = vmatpush1.bf16.msra.mxu0 0
      %1330 = vmatprep.subr.bf16.mxu0 0
      %1331 = vmatpush1.bf16.msra.mxu0 0
      %1332 = vmatprep.subr.bf16.mxu0 0
      %1333 = vmatpush1.bf16.msra.mxu0 0
      %1334 = vmatprep.subr.bf16.mxu0 0
      %1335 = vmatpush1.bf16.msra.mxu0 0
      %1336 = vmatprep.subr.bf16.mxu0 0
      %1337 = vmatpush1.bf16.msra.mxu0 0
      %1338 = vmatprep.subr.bf16.mxu0 0
      %1339 = vmatpush1.bf16.msra.mxu0 0
      %1340 = vmatprep.subr.bf16.mxu0 0
      %1341 = vmatpush1.bf16.msra.mxu0 0
      %1342 = vmatprep.subr.bf16.mxu0 0
      %1343 = vmatpush1.bf16.msra.mxu0 0
      %1344 = vmatprep.mubr.bf16.mxu0 0
      %1345 = vmatmul.mubr.bf16.gmra.mrb[0].mxu0 %v1310
      %v1346 = vpop.f32.mrb[0].mxu0
      %v1347 = vadd.f32 0.0, %v1346
      %v1348 = vpop.f32.mrb[0].mxu0
      %v1349 = vpop.f32.mrb[0].mxu0
      %v1350 = vpop.f32.mrb[0].mxu0
      %1351 = vdwg.mxu0
      %v1353 = vsel %vm1308, %v1301, 0
      %1355 = vmatprep.subr.bf16.mxu0 0
      %1356 = vmatpush1.bf16.msra.mxu0 %v1300
      %1357 = vmatprep.subr.bf16.mxu0 0
      %1358 = vmatpush1.bf16.msra.mxu0 0
      %1359 = vmatprep.subr.bf16.mxu0 0
      %1360 = vmatpush1.bf16.msra.mxu0 0
      %1361 = vmatprep.subr.bf16.mxu0 0
      %1362 = vmatpush1.bf16.msra.mxu0 0
      %1363 = vmatprep.subr.bf16.mxu0 0
      %1364 = vmatpush1.bf16.msra.mxu0 0
      %1365 = vmatprep.subr.bf16.mxu0 0
      %1366 = vmatpush1.bf16.msra.mxu0 0
      %1367 = vmatprep.subr.bf16.mxu0 0
      %1368 = vmatpush1.bf16.msra.mxu0 0
      %1369 = vmatprep.subr.bf16.mxu0 0
      %1370 = vmatpush1.bf16.msra.mxu0 0
      %1371 = vmatprep.subr.bf16.mxu0 0
      %1372 = vmatpush1.bf16.msra.mxu0 0
      %1373 = vmatprep.subr.bf16.mxu0 0
      %1374 = vmatpush1.bf16.msra.mxu0 0
      %1375 = vmatprep.subr.bf16.mxu0 0
      %1376 = vmatpush1.bf16.msra.mxu0 0
      %1377 = vmatprep.subr.bf16.mxu0 0
      %1378 = vmatpush1.bf16.msra.mxu0 0
      %1379 = vmatprep.subr.bf16.mxu0 0
      %1380 = vmatpush1.bf16.msra.mxu0 0
      %1381 = vmatprep.subr.bf16.mxu0 0
      %1382 = vmatpush1.bf16.msra.mxu0 0
      %1383 = vmatprep.subr.bf16.mxu0 0
      %1384 = vmatpush1.bf16.msra.mxu0 0
      %1385 = vmatprep.subr.bf16.mxu0 0
      %1386 = vmatpush1.bf16.msra.mxu0 0
      %1387 = vmatprep.mubr.bf16.mxu0 0
      %1388 = vmatmul.mubr.bf16.gmra.mrb[0].mxu0 %v1353
      %v1389 = vpop.f32.mrb[0].mxu0
      %v1390 = vadd.f32 %v1347, %v1389
      %v1391 = vpop.f32.mrb[0].mxu0
      %v1392 = vpop.f32.mrb[0].mxu0
      %v1393 = vpop.f32.mrb[0].mxu0
      %1394 = vdwg.mxu0
      %s1395 = scalar_lea.vmem %s7, 8
      %v1396 = vld [vmem:[%s1395] sm:$0xf]
      %1397 = vrot.lane.b32.xlu0 %v1300, 126
      %v1398 = vpop.permute.xlu0 %1397
      %v1401 = vsel %vm1308, %v1396, 0
      %1403 = vmatprep.subr.bf16.mxu0 0
      %1404 = vmatpush1.bf16.msra.mxu0 %v1398
      %1405 = vmatprep.subr.bf16.mxu0 0
      %1406 = vmatpush1.bf16.msra.mxu0 0
      %1407 = vmatprep.subr.bf16.mxu0 0
      %1408 = vmatpush1.bf16.msra.mxu0 0
      %1409 = vmatprep.subr.bf16.mxu0 0
      %1410 = vmatpush1.bf16.msra.mxu0 0
      %1411 = vmatprep.subr.bf16.mxu0 0
      %1412 = vmatpush1.bf16.msra.mxu0 0
      %1413 = vmatprep.subr.bf16.mxu0 0
      %1414 = vmatpush1.bf16.msra.mxu0 0
      %1415 = vmatprep.subr.bf16.mxu0 0
      %1416 = vmatpush1.bf16.msra.mxu0 0
      %1417 = vmatprep.subr.bf16.mxu0 0
      %1418 = vmatpush1.bf16.msra.mxu0 0
      %1419 = vmatprep.subr.bf16.mxu0 0
      %1420 = vmatpush1.bf16.msra.mxu0 0
      %1421 = vmatprep.subr.bf16.mxu0 0
      %1422 = vmatpush1.bf16.msra.mxu0 0
      %1423 = vmatprep.subr.bf16.mxu0 0
      %1424 = vmatpush1.bf16.msra.mxu0 0
      %1425 = vmatprep.subr.bf16.mxu0 0
      %1426 = vmatpush1.bf16.msra.mxu0 0
      %1427 = vmatprep.subr.bf16.mxu0 0
      %1428 = vmatpush1.bf16.msra.mxu0 0
      %1429 = vmatprep.subr.bf16.mxu0 0
      %1430 = vmatpush1.bf16.msra.mxu0 0
      %1431 = vmatprep.subr.bf16.mxu0 0
      %1432 = vmatpush1.bf16.msra.mxu0 0
      %1433 = vmatprep.subr.bf16.mxu0 0
      %1434 = vmatpush1.bf16.msra.mxu0 0
      %1435 = vmatprep.mubr.bf16.mxu0 0
      %1436 = vmatmul.mubr.bf16.gmra.mrb[0].mxu0 %v1401
      %v1437 = vpop.f32.mrb[0].mxu0
      %v1438 = vadd.f32 0.0, %v1437
      %v1439 = vpop.f32.mrb[0].mxu0
      %v1440 = vpop.f32.mrb[0].mxu0
      %v1441 = vpop.f32.mrb[0].mxu0
      %1442 = vdwg.mxu0
      %v1443 = vadd.f32 %v1390, %v1438
      %s1444 = scalar_lea.vmem %s7, 12
      %v1445 = vld [vmem:[%s1444] sm:$0xf]
      %1446 = vrot.lane.b32.xlu0 %v1300, 122
      %v1447 = vpop.permute.xlu0 %1446
      %v1450 = vsel %vm1308, %v1445, 0
      %1452 = vmatprep.subr.bf16.mxu0 0
      %1453 = vmatpush1.bf16.msra.mxu0 %v1447
      %1454 = vmatprep.subr.bf16.mxu0 0
      %1455 = vmatpush1.bf16.msra.mxu0 0
      %1456 = vmatprep.subr.bf16.mxu0 0
      %1457 = vmatpush1.bf16.msra.mxu0 0
      %1458 = vmatprep.subr.bf16.mxu0 0
      %1459 = vmatpush1.bf16.msra.mxu0 0
      %1460 = vmatprep.subr.bf16.mxu0 0
      %1461 = vmatpush1.bf16.msra.mxu0 0
      %1462 = vmatprep.subr.bf16.mxu0 0
      %1463 = vmatpush1.bf16.msra.mxu0 0
      %1464 = vmatprep.subr.bf16.mxu0 0
      %1465 = vmatpush1.bf16.msra.mxu0 0
      %1466 = vmatprep.subr.bf16.mxu0 0
      %1467 = vmatpush1.bf16.msra.mxu0 0
      %1468 = vmatprep.subr.bf16.mxu0 0
      %1469 = vmatpush1.bf16.msra.mxu0 0
      %1470 = vmatprep.subr.bf16.mxu0 0
      %1471 = vmatpush1.bf16.msra.mxu0 0
      %1472 = vmatprep.subr.bf16.mxu0 0
      %1473 = vmatpush1.bf16.msra.mxu0 0
      %1474 = vmatprep.subr.bf16.mxu0 0
      %1475 = vmatpush1.bf16.msra.mxu0 0
      %1476 = vmatprep.subr.bf16.mxu0 0
      %1477 = vmatpush1.bf16.msra.mxu0 0
      %1478 = vmatprep.subr.bf16.mxu0 0
      %1479 = vmatpush1.bf16.msra.mxu0 0
      %1480 = vmatprep.subr.bf16.mxu0 0
      %1481 = vmatpush1.bf16.msra.mxu0 0
      %1482 = vmatprep.subr.bf16.mxu0 0
      %1483 = vmatpush1.bf16.msra.mxu0 0
      %1484 = vmatprep.mubr.bf16.mxu0 0
      %1485 = vmatmul.mubr.bf16.gmra.mrb[0].mxu0 %v1450
      %v1486 = vpop.f32.mrb[0].mxu0
      %v1487 = vadd.f32 0.0, %v1486
      %v1488 = vpop.f32.mrb[0].mxu0
      %v1489 = vpop.f32.mrb[0].mxu0
      %v1490 = vpop.f32.mrb[0].mxu0
      %1491 = vdwg.mxu0
      %v1492 = vadd.f32 %v1443, %v1487
      %s1493 = scalar_lea.vmem %s7, 16
      %v1494 = vld [vmem:[%s1493] sm:$0xf]
      %1495 = vrot.lane.b32.xlu0 %v1300, 121
      %v1496 = vpop.permute.xlu0 %1495
      %v1499 = vsel %vm1308, %v1494, 0
      %1501 = vmatprep.subr.bf16.mxu0 0
      %1502 = vmatpush1.bf16.msra.mxu0 %v1496
      %1503 = vmatprep.subr.bf16.mxu0 0
      %1504 = vmatpush1.bf16.msra.mxu0 0
      %1505 = vmatprep.subr.bf16.mxu0 0
      %1506 = vmatpush1.bf16.msra.mxu0 0
      %1507 = vmatprep.subr.bf16.mxu0 0
      %1508 = vmatpush1.bf16.msra.mxu0 0
      %1509 = vmatprep.subr.bf16.mxu0 0
      %1510 = vmatpush1.bf16.msra.mxu0 0
      %1511 = vmatprep.subr.bf16.mxu0 0
      %1512 = vmatpush1.bf16.msra.mxu0 0
      %1513 = vmatprep.subr.bf16.mxu0 0
      %1514 = vmatpush1.bf16.msra.mxu0 0
      %1515 = vmatprep.subr.bf16.mxu0 0
      %1516 = vmatpush1.bf16.msra.mxu0 0
      %1517 = vmatprep.subr.bf16.mxu0 0
      %1518 = vmatpush1.bf16.msra.mxu0 0
      %1519 = vmatprep.subr.bf16.mxu0 0
      %1520 = vmatpush1.bf16.msra.mxu0 0
      %1521 = vmatprep.subr.bf16.mxu0 0
      %1522 = vmatpush1.bf16.msra.mxu0 0
      %1523 = vmatprep.subr.bf16.mxu0 0
      %1524 = vmatpush1.bf16.msra.mxu0 0
      %1525 = vmatprep.subr.bf16.mxu0 0
      %1526 = vmatpush1.bf16.msra.mxu0 0
      %1527 = vmatprep.subr.bf16.mxu0 0
      %1528 = vmatpush1.bf16.msra.mxu0 0
      %1529 = vmatprep.subr.bf16.mxu0 0
      %1530 = vmatpush1.bf16.msra.mxu0 0
      %1531 = vmatprep.subr.bf16.mxu0 0
      %1532 = vmatpush1.bf16.msra.mxu0 0
      %1533 = vmatprep.mubr.bf16.mxu0 0
      %1534 = vmatmul.mubr.bf16.gmra.mrb[0].mxu0 %v1499
      %v1535 = vpop.f32.mrb[0].mxu0
      %v1536 = vadd.f32 0.0, %v1535
      %v1537 = vpop.f32.mrb[0].mxu0
      %v1538 = vpop.f32.mrb[0].mxu0
      %v1539 = vpop.f32.mrb[0].mxu0
      %1540 = vdwg.mxu0
      %v1541 = vadd.f32 %v1492, %v1536
      %s1542 = scalar_lea.vmem %s7, 20
      %v1543 = vld [vmem:[%s1542] sm:$0xf]
      %1544 = vrot.lane.b32.xlu0 %v1300, 120
      %v1545 = vpop.permute.xlu0 %1544
      %v1548 = vsel %vm1308, %v1543, 0
      %1550 = vmatprep.subr.bf16.mxu0 0
      %1551 = vmatpush1.bf16.msra.mxu0 %v1545
      %1552 = vmatprep.subr.bf16.mxu0 0
      %1553 = vmatpush1.bf16.msra.mxu0 0
      %1554 = vmatprep.subr.bf16.mxu0 0
      %1555 = vmatpush1.bf16.msra.mxu0 0
      %1556 = vmatprep.subr.bf16.mxu0 0
      %1557 = vmatpush1.bf16.msra.mxu0 0
      %1558 = vmatprep.subr.bf16.mxu0 0
      %1559 = vmatpush1.bf16.msra.mxu0 0
      %1560 = vmatprep.subr.bf16.mxu0 0
      %1561 = vmatpush1.bf16.msra.mxu0 0
      %1562 = vmatprep.subr.bf16.mxu0 0
      %1563 = vmatpush1.bf16.msra.mxu0 0
      %1564 = vmatprep.subr.bf16.mxu0 0
      %1565 = vmatpush1.bf16.msra.mxu0 0
      %1566 = vmatprep.subr.bf16.mxu0 0
      %1567 = vmatpush1.bf16.msra.mxu0 0
      %1568 = vmatprep.subr.bf16.mxu0 0
      %1569 = vmatpush1.bf16.msra.mxu0 0
      %1570 = vmatprep.subr.bf16.mxu0 0
      %1571 = vmatpush1.bf16.msra.mxu0 0
      %1572 = vmatprep.subr.bf16.mxu0 0
      %1573 = vmatpush1.bf16.msra.mxu0 0
      %1574 = vmatprep.subr.bf16.mxu0 0
      %1575 = vmatpush1.bf16.msra.mxu0 0
      %1576 = vmatprep.subr.bf16.mxu0 0
      %1577 = vmatpush1.bf16.msra.mxu0 0
      %1578 = vmatprep.subr.bf16.mxu0 0
      %1579 = vmatpush1.bf16.msra.mxu0 0
      %1580 = vmatprep.subr.bf16.mxu0 0
      %1581 = vmatpush1.bf16.msra.mxu0 0
      %1582 = vmatprep.mubr.bf16.mxu0 0
      %1583 = vmatmul.mubr.bf16.gmra.mrb[0].mxu0 %v1548
      %v1584 = vpop.f32.mrb[0].mxu0
      %v1585 = vadd.f32 0.0, %v1584
      %v1586 = vpop.f32.mrb[0].mxu0
      %v1587 = vpop.f32.mrb[0].mxu0
      %v1588 = vpop.f32.mrb[0].mxu0
      %1589 = vdwg.mxu0
      %v1590 = vadd.f32 %v1541, %v1585
      %s1591 = scalar_lea.vmem %s7, 24
      %v1592 = vld [vmem:[%s1591] sm:$0xf]
      %1593 = vrot.lane.b32.xlu0 %v1300, 116
      %v1594 = vpop.permute.xlu0 %1593
      %v1597 = vsel %vm1308, %v1592, 0
      %1599 = vmatprep.subr.bf16.mxu0 0
      %1600 = vmatpush1.bf16.msra.mxu0 %v1594
      %1601 = vmatprep.subr.bf16.mxu0 0
      %1602 = vmatpush1.bf16.msra.mxu0 0
      %1603 = vmatprep.subr.bf16.mxu0 0
      %1604 = vmatpush1.bf16.msra.mxu0 0
      %1605 = vmatprep.subr.bf16.mxu0 0
      %1606 = vmatpush1.bf16.msra.mxu0 0
      %1607 = vmatprep.subr.bf16.mxu0 0
      %1608 = vmatpush1.bf16.msra.mxu0 0
      %1609 = vmatprep.subr.bf16.mxu0 0
      %1610 = vmatpush1.bf16.msra.mxu0 0
      %1611 = vmatprep.subr.bf16.mxu0 0
      %1612 = vmatpush1.bf16.msra.mxu0 0
      %1613 = vmatprep.subr.bf16.mxu0 0
      %1614 = vmatpush1.bf16.msra.mxu0 0
      %1615 = vmatprep.subr.bf16.mxu0 0
      %1616 = vmatpush1.bf16.msra.mxu0 0
      %1617 = vmatprep.subr.bf16.mxu0 0
      %1618 = vmatpush1.bf16.msra.mxu0 0
      %1619 = vmatprep.subr.bf16.mxu0 0
      %1620 = vmatpush1.bf16.msra.mxu0 0
      %1621 = vmatprep.subr.bf16.mxu0 0
      %1622 = vmatpush1.bf16.msra.mxu0 0
      %1623 = vmatprep.subr.bf16.mxu0 0
      %1624 = vmatpush1.bf16.msra.mxu0 0
      %1625 = vmatprep.subr.bf16.mxu0 0
      %1626 = vmatpush1.bf16.msra.mxu0 0
      %1627 = vmatprep.subr.bf16.mxu0 0
      %1628 = vmatpush1.bf16.msra.mxu0 0
      %1629 = vmatprep.subr.bf16.mxu0 0
      %1630 = vmatpush1.bf16.msra.mxu0 0
      %1631 = vmatprep.mubr.bf16.mxu0 0
      %1632 = vmatmul.mubr.bf16.gmra.mrb[0].mxu0 %v1597
      %v1633 = vpop.f32.mrb[0].mxu0
      %v1634 = vadd.f32 0.0, %v1633
      %v1635 = vpop.f32.mrb[0].mxu0
      %v1636 = vpop.f32.mrb[0].mxu0
      %v1637 = vpop.f32.mrb[0].mxu0
      %1638 = vdwg.mxu0
      %v1639 = vadd.f32 %v1590, %v1634
      %s1640 = scalar_lea.vmem %s7, 28
      %v1641 = vld [vmem:[%s1640] sm:$0xf]
      %1642 = vrot.lane.b32.xlu0 %v1300, 115
      %v1643 = vpop.permute.xlu0 %1642
      %v1646 = vsel %vm1308, %v1641, 0
      %1648 = vmatprep.subr.bf16.mxu0 0
      %1649 = vmatpush1.bf16.msra.mxu0 %v1643
      %1650 = vmatprep.subr.bf16.mxu0 0
      %1651 = vmatpush1.bf16.msra.mxu0 0
      %1652 = vmatprep.subr.bf16.mxu0 0
      %1653 = vmatpush1.bf16.msra.mxu0 0
      %1654 = vmatprep.subr.bf16.mxu0 0
      %1655 = vmatpush1.bf16.msra.mxu0 0
      %1656 = vmatprep.subr.bf16.mxu0 0
      %1657 = vmatpush1.bf16.msra.mxu0 0
      %1658 = vmatprep.subr.bf16.mxu0 0
      %1659 = vmatpush1.bf16.msra.mxu0 0
      %1660 = vmatprep.subr.bf16.mxu0 0
      %1661 = vmatpush1.bf16.msra.mxu0 0
      %1662 = vmatprep.subr.bf16.mxu0 0
      %1663 = vmatpush1.bf16.msra.mxu0 0
      %1664 = vmatprep.subr.bf16.mxu0 0
      %1665 = vmatpush1.bf16.msra.mxu0 0
      %1666 = vmatprep.subr.bf16.mxu0 0
      %1667 = vmatpush1.bf16.msra.mxu0 0
      %1668 = vmatprep.subr.bf16.mxu0 0
      %1669 = vmatpush1.bf16.msra.mxu0 0
      %1670 = vmatprep.subr.bf16.mxu0 0
      %1671 = vmatpush1.bf16.msra.mxu0 0
      %1672 = vmatprep.subr.bf16.mxu0 0
      %1673 = vmatpush1.bf16.msra.mxu0 0
      %1674 = vmatprep.subr.bf16.mxu0 0
      %1675 = vmatpush1.bf16.msra.mxu0 0
      %1676 = vmatprep.subr.bf16.mxu0 0
      %1677 = vmatpush1.bf16.msra.mxu0 0
      %1678 = vmatprep.subr.bf16.mxu0 0
      %1679 = vmatpush1.bf16.msra.mxu0 0
      %1680 = vmatprep.mubr.bf16.mxu0 0
      %1681 = vmatmul.mubr.bf16.gmra.mrb[0].mxu0 %v1646
      %v1682 = vpop.f32.mrb[0].mxu0
      %v1683 = vadd.f32 0.0, %v1682
      %v1684 = vpop.f32.mrb[0].mxu0
      %v1685 = vpop.f32.mrb[0].mxu0
      %v1686 = vpop.f32.mrb[0].mxu0
      %1687 = vdwg.mxu0
      %v1688 = vadd.f32 %v1639, %v1683
      %s1689 = scalar_lea.vmem %s7, 32
      %v1690 = vld [vmem:[%s1689] sm:$0xf]
      %1691 = vrot.lane.b32.xlu0 %v1300, 114
      %v1692 = vpop.permute.xlu0 %1691
      %v1695 = vsel %vm1308, %v1690, 0
      %1697 = vmatprep.subr.bf16.mxu0 0
      %1698 = vmatpush1.bf16.msra.mxu0 %v1692
      %1699 = vmatprep.subr.bf16.mxu0 0
      %1700 = vmatpush1.bf16.msra.mxu0 0
      %1701 = vmatprep.subr.bf16.mxu0 0
      %1702 = vmatpush1.bf16.msra.mxu0 0
      %1703 = vmatprep.subr.bf16.mxu0 0
      %1704 = vmatpush1.bf16.msra.mxu0 0
      %1705 = vmatprep.subr.bf16.mxu0 0
      %1706 = vmatpush1.bf16.msra.mxu0 0
      %1707 = vmatprep.subr.bf16.mxu0 0
      %1708 = vmatpush1.bf16.msra.mxu0 0
      %1709 = vmatprep.subr.bf16.mxu0 0
      %1710 = vmatpush1.bf16.msra.mxu0 0
      %1711 = vmatprep.subr.bf16.mxu0 0
      %1712 = vmatpush1.bf16.msra.mxu0 0
      %1713 = vmatprep.subr.bf16.mxu0 0
      %1714 = vmatpush1.bf16.msra.mxu0 0
      %1715 = vmatprep.subr.bf16.mxu0 0
      %1716 = vmatpush1.bf16.msra.mxu0 0
      %1717 = vmatprep.subr.bf16.mxu0 0
      %1718 = vmatpush1.bf16.msra.mxu0 0
      %1719 = vmatprep.subr.bf16.mxu0 0
      %1720 = vmatpush1.bf16.msra.mxu0 0
      %1721 = vmatprep.subr.bf16.mxu0 0
      %1722 = vmatpush1.bf16.msra.mxu0 0
      %1723 = vmatprep.subr.bf16.mxu0 0
      %1724 = vmatpush1.bf16.msra.mxu0 0
      %1725 = vmatprep.subr.bf16.mxu0 0
      %1726 = vmatpush1.bf16.msra.mxu0 0
      %1727 = vmatprep.subr.bf16.mxu0 0
      %1728 = vmatpush1.bf16.msra.mxu0 0
      %1729 = vmatprep.mubr.bf16.mxu0 0
      %1730 = vmatmul.mubr.bf16.gmra.mrb[0].mxu0 %v1695
      %v1731 = vpop.f32.mrb[0].mxu0
      %v1732 = vadd.f32 0.0, %v1731
      %v1733 = vpop.f32.mrb[0].mxu0
      %v1734 = vpop.f32.mrb[0].mxu0
      %v1735 = vpop.f32.mrb[0].mxu0
      %1736 = vdwg.mxu0
      %v1737 = vadd.f32 %v1688, %v1732
      %v1738 = vld [vmem:[%s8] sm:$0xff]
      %1740 = vset.pattern.permute.xlu0 0
      %1741 = vperm.xlu0 %1740, %v1738
      %v1742 = vpop.permute.xlu0 %1741
      %v1744 = vadd.f32 %v1737, %v1742
      %vm1745 = vcmp.gt.f32.partialorder %v1744, 0.0
      %v1746 = vmul.f32 %v1744, 0.2
      %v1747 = vsel %vm1745, %v1744, %v1746
      %v1748 = vpack.c.bf16 %v1747, %v1747
      %v1749 = vld [vmem:[%s9] sm:$0xf]
      %v1750 = vld [vmem:[%s9 + $0x4] sm:$0xf]
      %v1751 = vld [vmem:[%s9 + $0x8] sm:$0xf]
      %v1755 = vunpack.c.l.b16 %v1749
      %v1756 = vunpack.c.l.b16 %v1750
      %v1757 = vunpack.c.l.b16 %v1751
      %v1758 = vpack.c.b16 %v1756, %v1755
      %v1759 = vpack.c.b16 %v1757, %v1757
      %vm1761 = vcmask 195584
      %v1763 = vsel %vm1761, %v1748, 0
      %v1766 = vsel %vm1255, %v1759, 0
      %1768 = vmatprep.subr.bf16.mxu0 0
      %1769 = vmatpush1.bf16.msra.mxu0 %v1758
      %1770 = vmatprep.subr.bf16.mxu0 0
      %1771 = vmatpush1.bf16.msra.mxu0 %v1766
      %1772 = vmatprep.subr.bf16.mxu0 0
      %1773 = vmatpush1.bf16.msra.mxu0 0
      %1774 = vmatprep.subr.bf16.mxu0 0
      %1775 = vmatpush1.bf16.msra.mxu0 0
      %1776 = vmatprep.subr.bf16.mxu0 0
      %1777 = vmatpush1.bf16.msra.mxu0 0
      %1778 = vmatprep.subr.bf16.mxu0 0
      %1779 = vmatpush1.bf16.msra.mxu0 0
      %1780 = vmatprep.subr.bf16.mxu0 0
      %1781 = vmatpush1.bf16.msra.mxu0 0
      %1782 = vmatprep.subr.bf16.mxu0 0
      %1783 = vmatpush1.bf16.msra.mxu0 0
      %1784 = vmatprep.subr.bf16.mxu0 0
      %1785 = vmatpush1.bf16.msra.mxu0 0
      %1786 = vmatprep.subr.bf16.mxu0 0
      %1787 = vmatpush1.bf16.msra.mxu0 0
      %1788 = vmatprep.subr.bf16.mxu0 0
      %1789 = vmatpush1.bf16.msra.mxu0 0
      %1790 = vmatprep.subr.bf16.mxu0 0
      %1791 = vmatpush1.bf16.msra.mxu0 0
      %1792 = vmatprep.subr.bf16.mxu0 0
      %1793 = vmatpush1.bf16.msra.mxu0 0
      %1794 = vmatprep.subr.bf16.mxu0 0
      %1795 = vmatpush1.bf16.msra.mxu0 0
      %1796 = vmatprep.subr.bf16.mxu0 0
      %1797 = vmatpush1.bf16.msra.mxu0 0
      %1798 = vmatprep.subr.bf16.mxu0 0
      %1799 = vmatpush1.bf16.msra.mxu0 0
      %1800 = vmatprep.mubr.bf16.mxu0 0
      %1801 = vmatmul.mubr.bf16.gmra.mrb[0].mxu0 %v1763
      %v1802 = vpop.f32.mrb[0].mxu0
      %v1803 = vadd.f32 0.0, %v1802
      %v1804 = vpop.f32.mrb[0].mxu0
      %v1805 = vpop.f32.mrb[0].mxu0
      %v1806 = vpop.f32.mrb[0].mxu0
      %1807 = vdwg.mxu0
      %v1808 = vpack.c.bf16 %v1803, %v1803
      %v1809 = vld [vmem:[%s10] sm:$0x3]
      %s1810 = scalar_lea.vmem %s10, 2
      %v1811 = vld [vmem:[%s1810] sm:$0x3]
      %1813 = vrot.lane.b32.xlu0 %v1808, 127
      %v1814 = vpop.permute.xlu0 %1813
      %v1816 = vsel %vm529, %v1811, 0
      %v1819 = vsel %vm1255, %v1814, 0
      %1821 = vmatprep.subr.bf16.mxu0 0
      %1822 = vmatpush1.bf16.msra.mxu0 %v1819
      %1823 = vmatprep.subr.bf16.mxu0 0
      %1824 = vmatpush1.bf16.msra.mxu0 0
      %1825 = vmatprep.subr.bf16.mxu0 0
      %1826 = vmatpush1.bf16.msra.mxu0 0
      %1827 = vmatprep.subr.bf16.mxu0 0
      %1828 = vmatpush1.bf16.msra.mxu0 0
      %1829 = vmatprep.subr.bf16.mxu0 0
      %1830 = vmatpush1.bf16.msra.mxu0 0
      %1831 = vmatprep.subr.bf16.mxu0 0
      %1832 = vmatpush1.bf16.msra.mxu0 0
      %1833 = vmatprep.subr.bf16.mxu0 0
      %1834 = vmatpush1.bf16.msra.mxu0 0
      %1835 = vmatprep.subr.bf16.mxu0 0
      %1836 = vmatpush1.bf16.msra.mxu0 0
      %1837 = vmatprep.subr.bf16.mxu0 0
      %1838 = vmatpush1.bf16.msra.mxu0 0
      %1839 = vmatprep.subr.bf16.mxu0 0
      %1840 = vmatpush1.bf16.msra.mxu0 0
      %1841 = vmatprep.subr.bf16.mxu0 0
      %1842 = vmatpush1.bf16.msra.mxu0 0
      %1843 = vmatprep.subr.bf16.mxu0 0
      %1844 = vmatpush1.bf16.msra.mxu0 0
      %1845 = vmatprep.subr.bf16.mxu0 0
      %1846 = vmatpush1.bf16.msra.mxu0 0
      %1847 = vmatprep.subr.bf16.mxu0 0
      %1848 = vmatpush1.bf16.msra.mxu0 0
      %1849 = vmatprep.subr.bf16.mxu0 0
      %1850 = vmatpush1.bf16.msra.mxu0 0
      %1851 = vmatprep.subr.bf16.mxu0 0
      %1852 = vmatpush1.bf16.msra.mxu0 0
      %1853 = vmatprep.mubr.bf16.mxu0 0
      %1854 = vmatmul.mubr.bf16.gmra.mrb[0].mxu0 %v1816
      %v1855 = vpop.f32.mrb[0].mxu0
      %v1856 = vadd.f32 0.0, %v1855
      %v1857 = vpop.f32.mrb[0].mxu0
      %v1858 = vpop.f32.mrb[0].mxu0
      %v1859 = vpop.f32.mrb[0].mxu0
      %1860 = vdwg.mxu0
      %v1862 = vsel %vm529, %v1809, 0
      %v1865 = vsel %vm1255, %v1808, 0
      %1867 = vmatprep.subr.bf16.mxu0 0
      %1868 = vmatpush1.bf16.msra.mxu0 %v1865
      %1869 = vmatprep.subr.bf16.mxu0 0
      %1870 = vmatpush1.bf16.msra.mxu0 0
      %1871 = vmatprep.subr.bf16.mxu0 0
      %1872 = vmatpush1.bf16.msra.mxu0 0
      %1873 = vmatprep.subr.bf16.mxu0 0
      %1874 = vmatpush1.bf16.msra.mxu0 0
      %1875 = vmatprep.subr.bf16.mxu0 0
      %1876 = vmatpush1.bf16.msra.mxu0 0
      %1877 = vmatprep.subr.bf16.mxu0 0
      %1878 = vmatpush1.bf16.msra.mxu0 0
      %1879 = vmatprep.subr.bf16.mxu0 0
      %1880 = vmatpush1.bf16.msra.mxu0 0
      %1881 = vmatprep.subr.bf16.mxu0 0
      %1882 = vmatpush1.bf16.msra.mxu0 0
      %1883 = vmatprep.subr.bf16.mxu0 0
      %1884 = vmatpush1.bf16.msra.mxu0 0
      %1885 = vmatprep.subr.bf16.mxu0 0
      %1886 = vmatpush1.bf16.msra.mxu0 0
      %1887 = vmatprep.subr.bf16.mxu0 0
      %1888 = vmatpush1.bf16.msra.mxu0 0
      %1889 = vmatprep.subr.bf16.mxu0 0
      %1890 = vmatpush1.bf16.msra.mxu0 0
      %1891 = vmatprep.subr.bf16.mxu0 0
      %1892 = vmatpush1.bf16.msra.mxu0 0
      %1893 = vmatprep.subr.bf16.mxu0 0
      %1894 = vmatpush1.bf16.msra.mxu0 0
      %1895 = vmatprep.subr.bf16.mxu0 0
      %1896 = vmatpush1.bf16.msra.mxu0 0
      %1897 = vmatprep.subr.bf16.mxu0 0
      %1898 = vmatpush1.bf16.msra.mxu0 0
      %1899 = vmatprep.mubr.bf16.mxu0 0
      %1900 = vmatmul.mubr.bf16.gmra.mrb[0].mxu0 %v1862
      %v1901 = vpop.f32.mrb[0].mxu0
      %v1902 = vadd.f32 %v1856, %v1901
      %v1903 = vpop.f32.mrb[0].mxu0
      %v1904 = vpop.f32.mrb[0].mxu0
      %v1905 = vpop.f32.mrb[0].mxu0
      %1906 = vdwg.mxu0
      %s1907 = scalar_lea.vmem %s10, 4
      %v1908 = vld [vmem:[%s1907] sm:$0x3]
      %1909 = vrot.lane.b32.xlu0 %v1808, 126
      %v1910 = vpop.permute.xlu0 %1909
      %v1912 = vsel %vm529, %v1908, 0
      %v1915 = vsel %vm1255, %v1910, 0
      %1917 = vmatprep.subr.bf16.mxu0 0
      %1918 = vmatpush1.bf16.msra.mxu0 %v1915
      %1919 = vmatprep.subr.bf16.mxu0 0
      %1920 = vmatpush1.bf16.msra.mxu0 0
      %1921 = vmatprep.subr.bf16.mxu0 0
      %1922 = vmatpush1.bf16.msra.mxu0 0
      %1923 = vmatprep.subr.bf16.mxu0 0
      %1924 = vmatpush1.bf16.msra.mxu0 0
      %1925 = vmatprep.subr.bf16.mxu0 0
      %1926 = vmatpush1.bf16.msra.mxu0 0
      %1927 = vmatprep.subr.bf16.mxu0 0
      %1928 = vmatpush1.bf16.msra.mxu0 0
      %1929 = vmatprep.subr.bf16.mxu0 0
      %1930 = vmatpush1.bf16.msra.mxu0 0
      %1931 = vmatprep.subr.bf16.mxu0 0
      %1932 = vmatpush1.bf16.msra.mxu0 0
      %1933 = vmatprep.subr.bf16.mxu0 0
      %1934 = vmatpush1.bf16.msra.mxu0 0
      %1935 = vmatprep.subr.bf16.mxu0 0
      %1936 = vmatpush1.bf16.msra.mxu0 0
      %1937 = vmatprep.subr.bf16.mxu0 0
      %1938 = vmatpush1.bf16.msra.mxu0 0
      %1939 = vmatprep.subr.bf16.mxu0 0
      %1940 = vmatpush1.bf16.msra.mxu0 0
      %1941 = vmatprep.subr.bf16.mxu0 0
      %1942 = vmatpush1.bf16.msra.mxu0 0
      %1943 = vmatprep.subr.bf16.mxu0 0
      %1944 = vmatpush1.bf16.msra.mxu0 0
      %1945 = vmatprep.subr.bf16.mxu0 0
      %1946 = vmatpush1.bf16.msra.mxu0 0
      %1947 = vmatprep.subr.bf16.mxu0 0
      %1948 = vmatpush1.bf16.msra.mxu0 0
      %1949 = vmatprep.mubr.bf16.mxu0 0
      %1950 = vmatmul.mubr.bf16.gmra.mrb[0].mxu0 %v1912
      %v1951 = vpop.f32.mrb[0].mxu0
      %v1952 = vadd.f32 0.0, %v1951
      %v1953 = vpop.f32.mrb[0].mxu0
      %v1954 = vpop.f32.mrb[0].mxu0
      %v1955 = vpop.f32.mrb[0].mxu0
      %1956 = vdwg.mxu0
      %v1957 = vadd.f32 %v1902, %v1952
      %s1958 = scalar_lea.vmem %s10, 6
      %v1959 = vld [vmem:[%s1958] sm:$0x3]
      %1960 = vrot.lane.b32.xlu0 %v1808, 118
      %v1961 = vpop.permute.xlu0 %1960
      %v1963 = vsel %vm529, %v1959, 0
      %v1966 = vsel %vm1255, %v1961, 0
      %1968 = vmatprep.subr.bf16.mxu0 0
      %1969 = vmatpush1.bf16.msra.mxu0 %v1966
      %1970 = vmatprep.subr.bf16.mxu0 0
      %1971 = vmatpush1.bf16.msra.mxu0 0
      %1972 = vmatprep.subr.bf16.mxu0 0
      %1973 = vmatpush1.bf16.msra.mxu0 0
      %1974 = vmatprep.subr.bf16.mxu0 0
      %1975 = vmatpush1.bf16.msra.mxu0 0
      %1976 = vmatprep.subr.bf16.mxu0 0
      %1977 = vmatpush1.bf16.msra.mxu0 0
      %1978 = vmatprep.subr.bf16.mxu0 0
      %1979 = vmatpush1.bf16.msra.mxu0 0
      %1980 = vmatprep.subr.bf16.mxu0 0
      %1981 = vmatpush1.bf16.msra.mxu0 0
      %1982 = vmatprep.subr.bf16.mxu0 0
      %1983 = vmatpush1.bf16.msra.mxu0 0
      %1984 = vmatprep.subr.bf16.mxu0 0
      %1985 = vmatpush1.bf16.msra.mxu0 0
      %1986 = vmatprep.subr.bf16.mxu0 0
      %1987 = vmatpush1.bf16.msra.mxu0 0
      %1988 = vmatprep.subr.bf16.mxu0 0
      %1989 = vmatpush1.bf16.msra.mxu0 0
      %1990 = vmatprep.subr.bf16.mxu0 0
      %1991 = vmatpush1.bf16.msra.mxu0 0
      %1992 = vmatprep.subr.bf16.mxu0 0
      %1993 = vmatpush1.bf16.msra.mxu0 0
      %1994 = vmatprep.subr.bf16.mxu0 0
      %1995 = vmatpush1.bf16.msra.mxu0 0
      %1996 = vmatprep.subr.bf16.mxu0 0
      %1997 = vmatpush1.bf16.msra.mxu0 0
      %1998 = vmatprep.subr.bf16.mxu0 0
      %1999 = vmatpush1.bf16.msra.mxu0 0
      %2000 = vmatprep.mubr.bf16.mxu0 0
      %2001 = vmatmul.mubr.bf16.gmra.mrb[0].mxu0 %v1963
      %v2002 = vpop.f32.mrb[0].mxu0
      %v2003 = vadd.f32 0.0, %v2002
      %v2004 = vpop.f32.mrb[0].mxu0
      %v2005 = vpop.f32.mrb[0].mxu0
      %v2006 = vpop.f32.mrb[0].mxu0
      %2007 = vdwg.mxu0
      %v2008 = vadd.f32 %v1957, %v2003
      %s2009 = scalar_lea.vmem %s10, 8
      %v2010 = vld [vmem:[%s2009] sm:$0x3]
      %2011 = vrot.lane.b32.xlu0 %v1808, 117
      %v2012 = vpop.permute.xlu0 %2011
      %v2014 = vsel %vm529, %v2010, 0
      %v2017 = vsel %vm1255, %v2012, 0
      %2019 = vmatprep.subr.bf16.mxu0 0
      %2020 = vmatpush1.bf16.msra.mxu0 %v2017
      %2021 = vmatprep.subr.bf16.mxu0 0
      %2022 = vmatpush1.bf16.msra.mxu0 0
      %2023 = vmatprep.subr.bf16.mxu0 0
      %2024 = vmatpush1.bf16.msra.mxu0 0
      %2025 = vmatprep.subr.bf16.mxu0 0
      %2026 = vmatpush1.bf16.msra.mxu0 0
      %2027 = vmatprep.subr.bf16.mxu0 0
      %2028 = vmatpush1.bf16.msra.mxu0 0
      %2029 = vmatprep.subr.bf16.mxu0 0
      %2030 = vmatpush1.bf16.msra.mxu0 0
      %2031 = vmatprep.subr.bf16.mxu0 0
      %2032 = vmatpush1.bf16.msra.mxu0 0
      %2033 = vmatprep.subr.bf16.mxu0 0
      %2034 = vmatpush1.bf16.msra.mxu0 0
      %2035 = vmatprep.subr.bf16.mxu0 0
      %2036 = vmatpush1.bf16.msra.mxu0 0
      %2037 = vmatprep.subr.bf16.mxu0 0
      %2038 = vmatpush1.bf16.msra.mxu0 0
      %2039 = vmatprep.subr.bf16.mxu0 0
      %2040 = vmatpush1.bf16.msra.mxu0 0
      %2041 = vmatprep.subr.bf16.mxu0 0
      %2042 = vmatpush1.bf16.msra.mxu0 0
      %2043 = vmatprep.subr.bf16.mxu0 0
      %2044 = vmatpush1.bf16.msra.mxu0 0
      %2045 = vmatprep.subr.bf16.mxu0 0
      %2046 = vmatpush1.bf16.msra.mxu0 0
      %2047 = vmatprep.subr.bf16.mxu0 0
      %2048 = vmatpush1.bf16.msra.mxu0 0
      %2049 = vmatprep.subr.bf16.mxu0 0
      %2050 = vmatpush1.bf16.msra.mxu0 0
      %2051 = vmatprep.mubr.bf16.mxu0 0
      %2052 = vmatmul.mubr.bf16.gmra.mrb[0].mxu0 %v2014
      %v2053 = vpop.f32.mrb[0].mxu0
      %v2054 = vadd.f32 0.0, %v2053
      %v2055 = vpop.f32.mrb[0].mxu0
      %v2056 = vpop.f32.mrb[0].mxu0
      %v2057 = vpop.f32.mrb[0].mxu0
      %2058 = vdwg.mxu0
      %v2059 = vadd.f32 %v2008, %v2054
      %s2060 = scalar_lea.vmem %s10, 10
      %v2061 = vld [vmem:[%s2060] sm:$0x3]
      %2062 = vrot.lane.b32.xlu0 %v1808, 116
      %v2063 = vpop.permute.xlu0 %2062
      %v2065 = vsel %vm529, %v2061, 0
      %v2068 = vsel %vm1255, %v2063, 0
      %2070 = vmatprep.subr.bf16.mxu0 0
      %2071 = vmatpush1.bf16.msra.mxu0 %v2068
      %2072 = vmatprep.subr.bf16.mxu0 0
      %2073 = vmatpush1.bf16.msra.mxu0 0
      %2074 = vmatprep.subr.bf16.mxu0 0
      %2075 = vmatpush1.bf16.msra.mxu0 0
      %2076 = vmatprep.subr.bf16.mxu0 0
      %2077 = vmatpush1.bf16.msra.mxu0 0
      %2078 = vmatprep.subr.bf16.mxu0 0
      %2079 = vmatpush1.bf16.msra.mxu0 0
      %2080 = vmatprep.subr.bf16.mxu0 0
      %2081 = vmatpush1.bf16.msra.mxu0 0
      %2082 = vmatprep.subr.bf16.mxu0 0
      %2083 = vmatpush1.bf16.msra.mxu0 0
      %2084 = vmatprep.subr.bf16.mxu0 0
      %2085 = vmatpush1.bf16.msra.mxu0 0
      %2086 = vmatprep.subr.bf16.mxu0 0
      %2087 = vmatpush1.bf16.msra.mxu0 0
      %2088 = vmatprep.subr.bf16.mxu0 0
      %2089 = vmatpush1.bf16.msra.mxu0 0
      %2090 = vmatprep.subr.bf16.mxu0 0
      %2091 = vmatpush1.bf16.msra.mxu0 0
      %2092 = vmatprep.subr.bf16.mxu0 0
      %2093 = vmatpush1.bf16.msra.mxu0 0
      %2094 = vmatprep.subr.bf16.mxu0 0
      %2095 = vmatpush1.bf16.msra.mxu0 0
      %2096 = vmatprep.subr.bf16.mxu0 0
      %2097 = vmatpush1.bf16.msra.mxu0 0
      %2098 = vmatprep.subr.bf16.mxu0 0
      %2099 = vmatpush1.bf16.msra.mxu0 0
      %2100 = vmatprep.subr.bf16.mxu0 0
      %2101 = vmatpush1.bf16.msra.mxu0 0
      %2102 = vmatprep.mubr.bf16.mxu0 0
      %2103 = vmatmul.mubr.bf16.gmra.mrb[0].mxu0 %v2065
      %v2104 = vpop.f32.mrb[0].mxu0
      %v2105 = vadd.f32 0.0, %v2104
      %v2106 = vpop.f32.mrb[0].mxu0
      %v2107 = vpop.f32.mrb[0].mxu0
      %v2108 = vpop.f32.mrb[0].mxu0
      %2109 = vdwg.mxu0
      %v2110 = vadd.f32 %v2059, %v2105
      %s2111 = scalar_lea.vmem %s10, 12
      %v2112 = vld [vmem:[%s2111] sm:$0x3]
      %2113 = vrot.lane.b32.xlu0 %v1808, 108
      %v2114 = vpop.permute.xlu0 %2113
      %v2116 = vsel %vm529, %v2112, 0
      %v2119 = vsel %vm1255, %v2114, 0
      %2121 = vmatprep.subr.bf16.mxu0 0
      %2122 = vmatpush1.bf16.msra.mxu0 %v2119
      %2123 = vmatprep.subr.bf16.mxu0 0
      %2124 = vmatpush1.bf16.msra.mxu0 0
      %2125 = vmatprep.subr.bf16.mxu0 0
      %2126 = vmatpush1.bf16.msra.mxu0 0
      %2127 = vmatprep.subr.bf16.mxu0 0
      %2128 = vmatpush1.bf16.msra.mxu0 0
      %2129 = vmatprep.subr.bf16.mxu0 0
      %2130 = vmatpush1.bf16.msra.mxu0 0
      %2131 = vmatprep.subr.bf16.mxu0 0
      %2132 = vmatpush1.bf16.msra.mxu0 0
      %2133 = vmatprep.subr.bf16.mxu0 0
      %2134 = vmatpush1.bf16.msra.mxu0 0
      %2135 = vmatprep.subr.bf16.mxu0 0
      %2136 = vmatpush1.bf16.msra.mxu0 0
      %2137 = vmatprep.subr.bf16.mxu0 0
      %2138 = vmatpush1.bf16.msra.mxu0 0
      %2139 = vmatprep.subr.bf16.mxu0 0
      %2140 = vmatpush1.bf16.msra.mxu0 0
      %2141 = vmatprep.subr.bf16.mxu0 0
      %2142 = vmatpush1.bf16.msra.mxu0 0
      %2143 = vmatprep.subr.bf16.mxu0 0
      %2144 = vmatpush1.bf16.msra.mxu0 0
      %2145 = vmatprep.subr.bf16.mxu0 0
      %2146 = vmatpush1.bf16.msra.mxu0 0
      %2147 = vmatprep.subr.bf16.mxu0 0
      %2148 = vmatpush1.bf16.msra.mxu0 0
      %2149 = vmatprep.subr.bf16.mxu0 0
      %2150 = vmatpush1.bf16.msra.mxu0 0
      %2151 = vmatprep.subr.bf16.mxu0 0
      %2152 = vmatpush1.bf16.msra.mxu0 0
      %2153 = vmatprep.mubr.bf16.mxu0 0
      %2154 = vmatmul.mubr.bf16.gmra.mrb[0].mxu0 %v2116
      %v2155 = vpop.f32.mrb[0].mxu0
      %v2156 = vadd.f32 0.0, %v2155
      %v2157 = vpop.f32.mrb[0].mxu0
      %v2158 = vpop.f32.mrb[0].mxu0
      %v2159 = vpop.f32.mrb[0].mxu0
      %2160 = vdwg.mxu0
      %v2161 = vadd.f32 %v2110, %v2156
      %s2162 = scalar_lea.vmem %s10, 14
      %v2163 = vld [vmem:[%s2162] sm:$0x3]
      %2164 = vrot.lane.b32.xlu0 %v1808, 107
      %v2165 = vpop.permute.xlu0 %2164
      %v2167 = vsel %vm529, %v2163, 0
      %v2170 = vsel %vm1255, %v2165, 0
      %2172 = vmatprep.subr.bf16.mxu0 0
      %2173 = vmatpush1.bf16.msra.mxu0 %v2170
      %2174 = vmatprep.subr.bf16.mxu0 0
      %2175 = vmatpush1.bf16.msra.mxu0 0
      %2176 = vmatprep.subr.bf16.mxu0 0
      %2177 = vmatpush1.bf16.msra.mxu0 0
      %2178 = vmatprep.subr.bf16.mxu0 0
      %2179 = vmatpush1.bf16.msra.mxu0 0
      %2180 = vmatprep.subr.bf16.mxu0 0
      %2181 = vmatpush1.bf16.msra.mxu0 0
      %2182 = vmatprep.subr.bf16.mxu0 0
      %2183 = vmatpush1.bf16.msra.mxu0 0
      %2184 = vmatprep.subr.bf16.mxu0 0
      %2185 = vmatpush1.bf16.msra.mxu0 0
      %2186 = vmatprep.subr.bf16.mxu0 0
      %2187 = vmatpush1.bf16.msra.mxu0 0
      %2188 = vmatprep.subr.bf16.mxu0 0
      %2189 = vmatpush1.bf16.msra.mxu0 0
      %2190 = vmatprep.subr.bf16.mxu0 0
      %2191 = vmatpush1.bf16.msra.mxu0 0
      %2192 = vmatprep.subr.bf16.mxu0 0
      %2193 = vmatpush1.bf16.msra.mxu0 0
      %2194 = vmatprep.subr.bf16.mxu0 0
      %2195 = vmatpush1.bf16.msra.mxu0 0
      %2196 = vmatprep.subr.bf16.mxu0 0
      %2197 = vmatpush1.bf16.msra.mxu0 0
      %2198 = vmatprep.subr.bf16.mxu0 0
      %2199 = vmatpush1.bf16.msra.mxu0 0
      %2200 = vmatprep.subr.bf16.mxu0 0
      %2201 = vmatpush1.bf16.msra.mxu0 0
      %2202 = vmatprep.subr.bf16.mxu0 0
      %2203 = vmatpush1.bf16.msra.mxu0 0
      %2204 = vmatprep.mubr.bf16.mxu0 0
      %2205 = vmatmul.mubr.bf16.gmra.mrb[0].mxu0 %v2167
      %v2206 = vpop.f32.mrb[0].mxu0
      %v2207 = vadd.f32 0.0, %v2206
      %v2208 = vpop.f32.mrb[0].mxu0
      %v2209 = vpop.f32.mrb[0].mxu0
      %v2210 = vpop.f32.mrb[0].mxu0
      %2211 = vdwg.mxu0
      %v2212 = vadd.f32 %v2161, %v2207
      %s2213 = scalar_lea.vmem %s10, 16
      %v2214 = vld [vmem:[%s2213] sm:$0x3]
      %2215 = vrot.lane.b32.xlu0 %v1808, 106
      %v2216 = vpop.permute.xlu0 %2215
      %v2218 = vsel %vm529, %v2214, 0
      %v2221 = vsel %vm1255, %v2216, 0
      %2223 = vmatprep.subr.bf16.mxu0 0
      %2224 = vmatpush1.bf16.msra.mxu0 %v2221
      %2225 = vmatprep.subr.bf16.mxu0 0
      %2226 = vmatpush1.bf16.msra.mxu0 0
      %2227 = vmatprep.subr.bf16.mxu0 0
      %2228 = vmatpush1.bf16.msra.mxu0 0
      %2229 = vmatprep.subr.bf16.mxu0 0
      %2230 = vmatpush1.bf16.msra.mxu0 0
      %2231 = vmatprep.subr.bf16.mxu0 0
      %2232 = vmatpush1.bf16.msra.mxu0 0
      %2233 = vmatprep.subr.bf16.mxu0 0
      %2234 = vmatpush1.bf16.msra.mxu0 0
      %2235 = vmatprep.subr.bf16.mxu0 0
      %2236 = vmatpush1.bf16.msra.mxu0 0
      %2237 = vmatprep.subr.bf16.mxu0 0
      %2238 = vmatpush1.bf16.msra.mxu0 0
      %2239 = vmatprep.subr.bf16.mxu0 0
      %2240 = vmatpush1.bf16.msra.mxu0 0
      %2241 = vmatprep.subr.bf16.mxu0 0
      %2242 = vmatpush1.bf16.msra.mxu0 0
      %2243 = vmatprep.subr.bf16.mxu0 0
      %2244 = vmatpush1.bf16.msra.mxu0 0
      %2245 = vmatprep.subr.bf16.mxu0 0
      %2246 = vmatpush1.bf16.msra.mxu0 0
      %2247 = vmatprep.subr.bf16.mxu0 0
      %2248 = vmatpush1.bf16.msra.mxu0 0
      %2249 = vmatprep.subr.bf16.mxu0 0
      %2250 = vmatpush1.bf16.msra.mxu0 0
      %2251 = vmatprep.subr.bf16.mxu0 0
      %2252 = vmatpush1.bf16.msra.mxu0 0
      %2253 = vmatprep.subr.bf16.mxu0 0
      %2254 = vmatpush1.bf16.msra.mxu0 0
      %2255 = vmatprep.mubr.bf16.mxu0 0
      %2256 = vmatmul.mubr.bf16.gmra.mrb[0].mxu0 %v2218
      %v2257 = vpop.f32.mrb[0].mxu0
      %v2258 = vadd.f32 0.0, %v2257
      %v2259 = vpop.f32.mrb[0].mxu0
      %v2260 = vpop.f32.mrb[0].mxu0
      %v2261 = vpop.f32.mrb[0].mxu0
      %2262 = vdwg.mxu0
      %v2263 = vadd.f32 %v2212, %v2258
      %v2264 = vld [vmem:[%s11] sm:$0xf]
      %2266 = vset.pattern.permute.xlu0 0
      %2267 = vperm.xlu0 %2266, %v2264
      %v2268 = vpop.permute.xlu0 %2267
      %v2270 = vadd.f32 %v2263, %v2268
      %vm2271 = vcmp.gt.f32.partialorder %v2270, 0.0
      %v2272 = vmul.f32 %v2270, 0.2
      %v2273 = vsel %vm2271, %v2270, %v2272
      %v2274 = vpack.c.bf16 %v2273, %v2273
      %v2275 = vld [vmem:[%s12] sm:$0xff]
      %v2276 = vld [vmem:[%s12 + $0x8] sm:$0xf]
      %v2277 = vld [vmem:[%s12 + $0xc] sm:$0xff]
      %v2278 = vld [vmem:[%s12 + $0x14] sm:$0xf]
      %v2279 = vld [vmem:[%s12 + $0x18] sm:$0xff]
      %v2280 = vld [vmem:[%s12 + $0x20] sm:$0xf]
      %v2281 = vld [vmem:[%s12 + $0x24] sm:$0xff]
      %v2282 = vld [vmem:[%s12 + $0x2c] sm:$0xf]
      %v2283 = vld [vmem:[%s12 + $0x30] sm:$0xff]
      %v2284 = vld [vmem:[%s12 + $0x38] sm:$0xf]
      %v2285 = vld [vmem:[%s12 + $0x3c] sm:$0xff]
      %v2286 = vld [vmem:[%s12 + $0x44] sm:$0xf]
      %v2287 = vld [vmem:[%s12 + $0x48] sm:$0xff]
      %v2288 = vld [vmem:[%s12 + $0x50] sm:$0xf]
      %v2289 = vld [vmem:[%s12 + $0x54] sm:$0xff]
      %v2290 = vld [vmem:[%s12 + $0x5c] sm:$0xf]
      %v2291 = vld [vmem:[%s12 + $0x60] sm:$0xff]
      %v2292 = vld [vmem:[%s12 + $0x68] sm:$0xf]
      %v2293 = vld [vmem:[%s12 + $0x6c] sm:$0xff]
      %v2294 = vld [vmem:[%s12 + $0x74] sm:$0xf]
      %v2315 = vunpack.c.l.b16 %v2275
      %v2316 = vunpack.c.h.b16 %v2275
      %v2317 = vunpack.c.l.b16 %v2276
      %v2318 = vunpack.c.l.b16 %v2277
      %v2319 = vunpack.c.h.b16 %v2277
      %v2320 = vunpack.c.l.b16 %v2278
      %v2321 = vunpack.c.l.b16 %v2279
      %v2322 = vunpack.c.h.b16 %v2279
      %v2323 = vunpack.c.l.b16 %v2280
      %v2324 = vunpack.c.l.b16 %v2281
      %v2325 = vunpack.c.h.b16 %v2281
      %v2326 = vunpack.c.l.b16 %v2282
      %v2327 = vunpack.c.l.b16 %v2283
      %v2328 = vunpack.c.h.b16 %v2283
      %v2329 = vunpack.c.l.b16 %v2284
      %v2330 = vunpack.c.l.b16 %v2285
      %v2331 = vunpack.c.h.b16 %v2285
      %v2332 = vunpack.c.l.b16 %v2286
      %v2333 = vunpack.c.l.b16 %v2287
      %v2334 = vunpack.c.h.b16 %v2287
      %v2335 = vunpack.c.l.b16 %v2288
      %v2336 = vunpack.c.l.b16 %v2289
      %v2337 = vunpack.c.h.b16 %v2289
      %v2338 = vunpack.c.l.b16 %v2290
      %v2339 = vunpack.c.l.b16 %v2291
      %v2340 = vunpack.c.h.b16 %v2291
      %v2341 = vunpack.c.l.b16 %v2292
      %v2342 = vunpack.c.l.b16 %v2293
      %v2343 = vunpack.c.h.b16 %v2293
      %v2344 = vunpack.c.l.b16 %v2294
      %v2345 = vpack.c.b16 %v2318, %v2315
      %v2346 = vpack.c.b16 %v2319, %v2316
      %v2347 = vpack.c.b16 %v2320, %v2317
      %v2348 = vpack.c.b16 %v2324, %v2321
      %v2349 = vpack.c.b16 %v2325, %v2322
      %v2350 = vpack.c.b16 %v2326, %v2323
      %v2351 = vpack.c.b16 %v2330, %v2327
      %v2352 = vpack.c.b16 %v2331, %v2328
      %v2353 = vpack.c.b16 %v2332, %v2329
      %v2354 = vpack.c.b16 %v2336, %v2333
      %v2355 = vpack.c.b16 %v2337, %v2334
      %v2356 = vpack.c.b16 %v2338, %v2335
      %v2357 = vpack.c.b16 %v2342, %v2339
      %v2358 = vpack.c.b16 %v2343, %v2340
      %v2359 = vpack.c.b16 %v2344, %v2341
      %vm2375 = vcmask 654336
      %v2377 = vsel %vm2375, %v2274, 0
      %2379 = vmatprep.subr.bf16.mxu0 %v2346
      %2380 = vmatpush1.bf16.msra.mxu0 %v2345
      %2381 = vmatprep.subr.bf16.mxu0 %v2349
      %2382 = vmatpush1.bf16.msra.mxu0 %v2348
      %2383 = vmatprep.subr.bf16.mxu0 %v2352
      %2384 = vmatpush1.bf16.msra.mxu0 %v2351
      %2385 = vmatprep.subr.bf16.mxu0 %v2355
      %2386 = vmatpush1.bf16.msra.mxu0 %v2354
      %2387 = vmatprep.subr.bf16.mxu0 %v2358
      %2388 = vmatpush1.bf16.msra.mxu0 %v2357
      %2389 = vmatprep.subr.bf16.mxu0 0
      %2390 = vmatpush1.bf16.msra.mxu0 0
      %2391 = vmatprep.subr.bf16.mxu0 0
      %2392 = vmatpush1.bf16.msra.mxu0 0
      %2393 = vmatprep.subr.bf16.mxu0 0
      %2394 = vmatpush1.bf16.msra.mxu0 0
      %2395 = vmatprep.subr.bf16.mxu0 0
      %2396 = vmatpush1.bf16.msra.mxu0 0
      %2397 = vmatprep.subr.bf16.mxu0 0
      %2398 = vmatpush1.bf16.msra.mxu0 0
      %2399 = vmatprep.subr.bf16.mxu0 0
      %2400 = vmatpush1.bf16.msra.mxu0 0
      %2401 = vmatprep.subr.bf16.mxu0 0
      %2402 = vmatpush1.bf16.msra.mxu0 0
      %2403 = vmatprep.subr.bf16.mxu0 0
      %2404 = vmatpush1.bf16.msra.mxu0 0
      %2405 = vmatprep.subr.bf16.mxu0 0
      %2406 = vmatpush1.bf16.msra.mxu0 0
      %2407 = vmatprep.subr.bf16.mxu0 0
      %2408 = vmatpush1.bf16.msra.mxu0 0
      %2409 = vmatprep.subr.bf16.mxu0 0
      %2410 = vmatpush1.bf16.msra.mxu0 0
      %2411 = vmatprep.mubr.bf16.mxu0 0
      %2412 = vmatmul.mubr.bf16.gmra.mrb[0].mxu0 %v2377
      %v2413 = vpop.f32.mrb[0].mxu0
      %v2414 = vadd.f32 0.0, %v2413
      %v2415 = vpop.f32.mrb[0].mxu0
      %v2416 = vadd.f32 0.0, %v2415
      %v2417 = vpop.f32.mrb[0].mxu0
      %v2418 = vpop.f32.mrb[0].mxu0
      %2419 = vdwg.mxu0
      %2420 = vmatprep.subr.bf16.mxu0 0
      %2421 = vmatpush1.bf16.msra.mxu0 %v2347
      %2422 = vmatprep.subr.bf16.mxu0 0
      %2423 = vmatpush1.bf16.msra.mxu0 %v2350
      %2424 = vmatprep.subr.bf16.mxu0 0
      %2425 = vmatpush1.bf16.msra.mxu0 %v2353
      %2426 = vmatprep.subr.bf16.mxu0 0
      %2427 = vmatpush1.bf16.msra.mxu0 %v2356
      %2428 = vmatprep.subr.bf16.mxu0 0
      %2429 = vmatpush1.bf16.msra.mxu0 %v2359
      %2430 = vmatprep.subr.bf16.mxu0 0
      %2431 = vmatpush1.bf16.msra.mxu0 0
      %2432 = vmatprep.subr.bf16.mxu0 0
      %2433 = vmatpush1.bf16.msra.mxu0 0
      %2434 = vmatprep.subr.bf16.mxu0 0
      %2435 = vmatpush1.bf16.msra.mxu0 0
      %2436 = vmatprep.subr.bf16.mxu0 0
      %2437 = vmatpush1.bf16.msra.mxu0 0
      %2438 = vmatprep.subr.bf16.mxu0 0
      %2439 = vmatpush1.bf16.msra.mxu0 0
      %2440 = vmatprep.subr.bf16.mxu0 0
      %2441 = vmatpush1.bf16.msra.mxu0 0
      %2442 = vmatprep.subr.bf16.mxu0 0
      %2443 = vmatpush1.bf16.msra.mxu0 0
      %2444 = vmatprep.subr.bf16.mxu0 0
      %2445 = vmatpush1.bf16.msra.mxu0 0
      %2446 = vmatprep.subr.bf16.mxu0 0
      %2447 = vmatpush1.bf16.msra.mxu0 0
      %2448 = vmatprep.subr.bf16.mxu0 0
      %2449 = vmatpush1.bf16.msra.mxu0 0
      %2450 = vmatprep.subr.bf16.mxu0 0
      %2451 = vmatpush1.bf16.msra.mxu0 0
      %2452 = vmatprep.mubr.bf16.mxu0 0
      %2453 = vmatmul.mubr.bf16.gmra.mrb[0].mxu0 %v2377
      %v2454 = vpop.f32.mrb[0].mxu0
      %v2455 = vadd.f32 0.0, %v2454
      %v2456 = vpop.f32.mrb[0].mxu0
      %v2457 = vpop.f32.mrb[0].mxu0
      %v2458 = vpop.f32.mrb[0].mxu0
      %2459 = vdwg.mxu0
      %v2460 = vpack.c.bf16 %v2414, %v2414
      %v2461 = vpack.c.bf16 %v2416, %v2416
      %v2462 = vpack.c.bf16 %v2455, %v2455
      %v2463 = vld [vmem:[%s13] sm:$0x1]
      %s2464 = scalar_lea.vmem %s13, 1
      %v2465 = vld [vmem:[%s2464] sm:$0x1]
      %2469 = vrot.lane.b32.xlu0 %v2460, 127
      %v2470 = vpop.permute.xlu0 %2469
      %2471 = vrot.lane.b32.xlu0 %v2461, 127
      %v2472 = vpop.permute.xlu0 %2471
      %2473 = vrot.lane.b32.xlu0 %v2462, 127
      %v2474 = vpop.permute.xlu0 %2473
      %vm2475 = vcmask 1039360
      %v2476 = vsel %vm2475, %v2470, %v2472
      %v2477 = vsel %vm2475, %v2472, %v2474
      %vm2478 = vcmask 31744
      %v2480 = vsel %vm2478, %v2465, 0
      %vm2482 = vcmask 1041408
      %v2484 = vsel %vm2482, %v2476, 0
      %v2487 = vsel %vm2482, %v2477, 0
      %v2490 = vsel %vm2482, %v2474, 0
      %2492 = vmatprep.subr.bf16.mxu0 %v2487
      %2493 = vmatpush1.bf16.msra.mxu0 %v2484
      %2494 = vmatprep.subr.bf16.mxu0 0
      %2495 = vmatpush1.bf16.msra.mxu0 0
      %2496 = vmatprep.subr.bf16.mxu0 0
      %2497 = vmatpush1.bf16.msra.mxu0 0
      %2498 = vmatprep.subr.bf16.mxu0 0
      %2499 = vmatpush1.bf16.msra.mxu0 0
      %2500 = vmatprep.subr.bf16.mxu0 0
      %2501 = vmatpush1.bf16.msra.mxu0 0
      %2502 = vmatprep.subr.bf16.mxu0 0
      %2503 = vmatpush1.bf16.msra.mxu0 0
      %2504 = vmatprep.subr.bf16.mxu0 0
      %2505 = vmatpush1.bf16.msra.mxu0 0
      %2506 = vmatprep.subr.bf16.mxu0 0
      %2507 = vmatpush1.bf16.msra.mxu0 0
      %2508 = vmatprep.subr.bf16.mxu0 0
      %2509 = vmatpush1.bf16.msra.mxu0 0
      %2510 = vmatprep.subr.bf16.mxu0 0
      %2511 = vmatpush1.bf16.msra.mxu0 0
      %2512 = vmatprep.subr.bf16.mxu0 0
      %2513 = vmatpush1.bf16.msra.mxu0 0
      %2514 = vmatprep.subr.bf16.mxu0 0
      %2515 = vmatpush1.bf16.msra.mxu0 0
      %2516 = vmatprep.subr.bf16.mxu0 0
      %2517 = vmatpush1.bf16.msra.mxu0 0
      %2518 = vmatprep.subr.bf16.mxu0 0
      %2519 = vmatpush1.bf16.msra.mxu0 0
      %2520 = vmatprep.subr.bf16.mxu0 0
      %2521 = vmatpush1.bf16.msra.mxu0 0
      %2522 = vmatprep.subr.bf16.mxu0 0
      %2523 = vmatpush1.bf16.msra.mxu0 0
      %2524 = vmatprep.mubr.bf16.mxu0 0
      %2525 = vmatmul.mubr.bf16.gmra.mrb[0].mxu0 %v2480
      %v2526 = vpop.f32.mrb[0].mxu0
      %v2527 = vadd.f32 0.0, %v2526
      %v2528 = vpop.f32.mrb[0].mxu0
      %v2529 = vadd.f32 0.0, %v2528
      %v2530 = vpop.f32.mrb[0].mxu0
      %v2531 = vpop.f32.mrb[0].mxu0
      %2532 = vdwg.mxu0
      %2533 = vmatprep.subr.bf16.mxu0 0
      %2534 = vmatpush1.bf16.msra.mxu0 %v2490
      %2535 = vmatprep.subr.bf16.mxu0 0
      %2536 = vmatpush1.bf16.msra.mxu0 0
      %2537 = vmatprep.subr.bf16.mxu0 0
      %2538 = vmatpush1.bf16.msra.mxu0 0
      %2539 = vmatprep.subr.bf16.mxu0 0
      %2540 = vmatpush1.bf16.msra.mxu0 0
      %2541 = vmatprep.subr.bf16.mxu0 0
      %2542 = vmatpush1.bf16.msra.mxu0 0
      %2543 = vmatprep.subr.bf16.mxu0 0
      %2544 = vmatpush1.bf16.msra.mxu0 0
      %2545 = vmatprep.subr.bf16.mxu0 0
      %2546 = vmatpush1.bf16.msra.mxu0 0
      %2547 = vmatprep.subr.bf16.mxu0 0
      %2548 = vmatpush1.bf16.msra.mxu0 0
      %2549 = vmatprep.subr.bf16.mxu0 0
      %2550 = vmatpush1.bf16.msra.mxu0 0
      %2551 = vmatprep.subr.bf16.mxu0 0
      %2552 = vmatpush1.bf16.msra.mxu0 0
      %2553 = vmatprep.subr.bf16.mxu0 0
      %2554 = vmatpush1.bf16.msra.mxu0 0
      %2555 = vmatprep.subr.bf16.mxu0 0
      %2556 = vmatpush1.bf16.msra.mxu0 0
      %2557 = vmatprep.subr.bf16.mxu0 0
      %2558 = vmatpush1.bf16.msra.mxu0 0
      %2559 = vmatprep.subr.bf16.mxu0 0
      %2560 = vmatpush1.bf16.msra.mxu0 0
      %2561 = vmatprep.subr.bf16.mxu0 0
      %2562 = vmatpush1.bf16.msra.mxu0 0
      %2563 = vmatprep.subr.bf16.mxu0 0
      %2564 = vmatpush1.bf16.msra.mxu0 0
      %2565 = vmatprep.mubr.bf16.mxu0 0
      %2566 = vmatmul.mubr.bf16.gmra.mrb[0].mxu0 %v2480
      %v2567 = vpop.f32.mrb[0].mxu0
      %v2568 = vadd.f32 0.0, %v2567
      %v2569 = vpop.f32.mrb[0].mxu0
      %v2570 = vpop.f32.mrb[0].mxu0
      %v2571 = vpop.f32.mrb[0].mxu0
      %2572 = vdwg.mxu0
      %v2574 = vsel %vm2478, %v2463, 0
      %v2577 = vsel %vm2482, %v2460, 0
      %v2580 = vsel %vm2482, %v2461, 0
      %v2583 = vsel %vm2482, %v2462, 0
      %2585 = vmatprep.subr.bf16.mxu0 %v2580
      %2586 = vmatpush1.bf16.msra.mxu0 %v2577
      %2587 = vmatprep.subr.bf16.mxu0 0
      %2588 = vmatpush1.bf16.msra.mxu0 0
      %2589 = vmatprep.subr.bf16.mxu0 0
      %2590 = vmatpush1.bf16.msra.mxu0 0
      %2591 = vmatprep.subr.bf16.mxu0 0
      %2592 = vmatpush1.bf16.msra.mxu0 0
      %2593 = vmatprep.subr.bf16.mxu0 0
      %2594 = vmatpush1.bf16.msra.mxu0 0
      %2595 = vmatprep.subr.bf16.mxu0 0
      %2596 = vmatpush1.bf16.msra.mxu0 0
      %2597 = vmatprep.subr.bf16.mxu0 0
      %2598 = vmatpush1.bf16.msra.mxu0 0
      %2599 = vmatprep.subr.bf16.mxu0 0
      %2600 = vmatpush1.bf16.msra.mxu0 0
      %2601 = vmatprep.subr.bf16.mxu0 0
      %2602 = vmatpush1.bf16.msra.mxu0 0
      %2603 = vmatprep.subr.bf16.mxu0 0
      %2604 = vmatpush1.bf16.msra.mxu0 0
      %2605 = vmatprep.subr.bf16.mxu0 0
      %2606 = vmatpush1.bf16.msra.mxu0 0
      %2607 = vmatprep.subr.bf16.mxu0 0
      %2608 = vmatpush1.bf16.msra.mxu0 0
      %2609 = vmatprep.subr.bf16.mxu0 0
      %2610 = vmatpush1.bf16.msra.mxu0 0
      %2611 = vmatprep.subr.bf16.mxu0 0
      %2612 = vmatpush1.bf16.msra.mxu0 0
      %2613 = vmatprep.subr.bf16.mxu0 0
      %2614 = vmatpush1.bf16.msra.mxu0 0
      %2615 = vmatprep.subr.bf16.mxu0 0
      %2616 = vmatpush1.bf16.msra.mxu0 0
      %2617 = vmatprep.mubr.bf16.mxu0 0
      %2618 = vmatmul.mubr.bf16.gmra.mrb[0].mxu0 %v2574
      %v2619 = vpop.f32.mrb[0].mxu0
      %v2620 = vadd.f32 %v2527, %v2619
      %v2621 = vpop.f32.mrb[0].mxu0
      %v2622 = vadd.f32 %v2529, %v2621
      %v2623 = vpop.f32.mrb[0].mxu0
      %v2624 = vpop.f32.mrb[0].mxu0
      %2625 = vdwg.mxu0
      %2626 = vmatprep.subr.bf16.mxu0 0
      %2627 = vmatpush1.bf16.msra.mxu0 %v2583
      %2628 = vmatprep.subr.bf16.mxu0 0
      %2629 = vmatpush1.bf16.msra.mxu0 0
      %2630 = vmatprep.subr.bf16.mxu0 0
      %2631 = vmatpush1.bf16.msra.mxu0 0
      %2632 = vmatprep.subr.bf16.mxu0 0
      %2633 = vmatpush1.bf16.msra.mxu0 0
      %2634 = vmatprep.subr.bf16.mxu0 0
      %2635 = vmatpush1.bf16.msra.mxu0 0
      %2636 = vmatprep.subr.bf16.mxu0 0
      %2637 = vmatpush1.bf16.msra.mxu0 0
      %2638 = vmatprep.subr.bf16.mxu0 0
      %2639 = vmatpush1.bf16.msra.mxu0 0
      %2640 = vmatprep.subr.bf16.mxu0 0
      %2641 = vmatpush1.bf16.msra.mxu0 0
      %2642 = vmatprep.subr.bf16.mxu0 0
      %2643 = vmatpush1.bf16.msra.mxu0 0
      %2644 = vmatprep.subr.bf16.mxu0 0
      %2645 = vmatpush1.bf16.msra.mxu0 0
      %2646 = vmatprep.subr.bf16.mxu0 0
      %2647 = vmatpush1.bf16.msra.mxu0 0
      %2648 = vmatprep.subr.bf16.mxu0 0
      %2649 = vmatpush1.bf16.msra.mxu0 0
      %2650 = vmatprep.subr.bf16.mxu0 0
      %2651 = vmatpush1.bf16.msra.mxu0 0
      %2652 = vmatprep.subr.bf16.mxu0 0
      %2653 = vmatpush1.bf16.msra.mxu0 0
      %2654 = vmatprep.subr.bf16.mxu0 0
      %2655 = vmatpush1.bf16.msra.mxu0 0
      %2656 = vmatprep.subr.bf16.mxu0 0
      %2657 = vmatpush1.bf16.msra.mxu0 0
      %2658 = vmatprep.mubr.bf16.mxu0 0
      %2659 = vmatmul.mubr.bf16.gmra.mrb[0].mxu0 %v2574
      %v2660 = vpop.f32.mrb[0].mxu0
      %v2661 = vadd.f32 %v2568, %v2660
      %v2662 = vpop.f32.mrb[0].mxu0
      %v2663 = vpop.f32.mrb[0].mxu0
      %v2664 = vpop.f32.mrb[0].mxu0
      %2665 = vdwg.mxu0
      %s2666 = scalar_lea.vmem %s13, 2
      %v2667 = vld [vmem:[%s2666] sm:$0x1]
      %2668 = vrot.lane.b32.xlu0 %v2460, 126
      %v2669 = vpop.permute.xlu0 %2668
      %2670 = vrot.lane.b32.xlu0 %v2461, 126
      %v2671 = vpop.permute.xlu0 %2670
      %2672 = vrot.lane.b32.xlu0 %v2462, 126
      %v2673 = vpop.permute.xlu0 %2672
      %vm2674 = vcmask 1031168
      %v2675 = vsel %vm2674, %v2669, %v2671
      %v2676 = vsel %vm2674, %v2671, %v2673
      %v2678 = vsel %vm2478, %v2667, 0
      %v2681 = vsel %vm2482, %v2675, 0
      %v2684 = vsel %vm2482, %v2676, 0
      %v2687 = vsel %vm2482, %v2673, 0
      %2689 = vmatprep.subr.bf16.mxu0 %v2684
      %2690 = vmatpush1.bf16.msra.mxu0 %v2681
      %2691 = vmatprep.subr.bf16.mxu0 0
      %2692 = vmatpush1.bf16.msra.mxu0 0
      %2693 = vmatprep.subr.bf16.mxu0 0
      %2694 = vmatpush1.bf16.msra.mxu0 0
      %2695 = vmatprep.subr.bf16.mxu0 0
      %2696 = vmatpush1.bf16.msra.mxu0 0
      %2697 = vmatprep.subr.bf16.mxu0 0
      %2698 = vmatpush1.bf16.msra.mxu0 0
      %2699 = vmatprep.subr.bf16.mxu0 0
      %2700 = vmatpush1.bf16.msra.mxu0 0
      %2701 = vmatprep.subr.bf16.mxu0 0
      %2702 = vmatpush1.bf16.msra.mxu0 0
      %2703 = vmatprep.subr.bf16.mxu0 0
      %2704 = vmatpush1.bf16.msra.mxu0 0
      %2705 = vmatprep.subr.bf16.mxu0 0
      %2706 = vmatpush1.bf16.msra.mxu0 0
      %2707 = vmatprep.subr.bf16.mxu0 0
      %2708 = vmatpush1.bf16.msra.mxu0 0
      %2709 = vmatprep.subr.bf16.mxu0 0
      %2710 = vmatpush1.bf16.msra.mxu0 0
      %2711 = vmatprep.subr.bf16.mxu0 0
      %2712 = vmatpush1.bf16.msra.mxu0 0
      %2713 = vmatprep.subr.bf16.mxu0 0
      %2714 = vmatpush1.bf16.msra.mxu0 0
      %2715 = vmatprep.subr.bf16.mxu0 0
      %2716 = vmatpush1.bf16.msra.mxu0 0
      %2717 = vmatprep.subr.bf16.mxu0 0
      %2718 = vmatpush1.bf16.msra.mxu0 0
      %2719 = vmatprep.subr.bf16.mxu0 0
      %2720 = vmatpush1.bf16.msra.mxu0 0
      %2721 = vmatprep.mubr.bf16.mxu0 0
      %2722 = vmatmul.mubr.bf16.gmra.mrb[0].mxu0 %v2678
      %v2723 = vpop.f32.mrb[0].mxu0
      %v2724 = vadd.f32 0.0, %v2723
      %v2725 = vpop.f32.mrb[0].mxu0
      %v2726 = vadd.f32 0.0, %v2725
      %v2727 = vpop.f32.mrb[0].mxu0
      %v2728 = vpop.f32.mrb[0].mxu0
      %2729 = vdwg.mxu0
      %2730 = vmatprep.subr.bf16.mxu0 0
      %2731 = vmatpush1.bf16.msra.mxu0 %v2687
      %2732 = vmatprep.subr.bf16.mxu0 0
      %2733 = vmatpush1.bf16.msra.mxu0 0
      %2734 = vmatprep.subr.bf16.mxu0 0
      %2735 = vmatpush1.bf16.msra.mxu0 0
      %2736 = vmatprep.subr.bf16.mxu0 0
      %2737 = vmatpush1.bf16.msra.mxu0 0
      %2738 = vmatprep.subr.bf16.mxu0 0
      %2739 = vmatpush1.bf16.msra.mxu0 0
      %2740 = vmatprep.subr.bf16.mxu0 0
      %2741 = vmatpush1.bf16.msra.mxu0 0
      %2742 = vmatprep.subr.bf16.mxu0 0
      %2743 = vmatpush1.bf16.msra.mxu0 0
      %2744 = vmatprep.subr.bf16.mxu0 0
      %2745 = vmatpush1.bf16.msra.mxu0 0
      %2746 = vmatprep.subr.bf16.mxu0 0
      %2747 = vmatpush1.bf16.msra.mxu0 0
      %2748 = vmatprep.subr.bf16.mxu0 0
      %2749 = vmatpush1.bf16.msra.mxu0 0
      %2750 = vmatprep.subr.bf16.mxu0 0
      %2751 = vmatpush1.bf16.msra.mxu0 0
      %2752 = vmatprep.subr.bf16.mxu0 0
      %2753 = vmatpush1.bf16.msra.mxu0 0
      %2754 = vmatprep.subr.bf16.mxu0 0
      %2755 = vmatpush1.bf16.msra.mxu0 0
      %2756 = vmatprep.subr.bf16.mxu0 0
      %2757 = vmatpush1.bf16.msra.mxu0 0
      %2758 = vmatprep.subr.bf16.mxu0 0
      %2759 = vmatpush1.bf16.msra.mxu0 0
      %2760 = vmatprep.subr.bf16.mxu0 0
      %2761 = vmatpush1.bf16.msra.mxu0 0
      %2762 = vmatprep.mubr.bf16.mxu0 0
      %2763 = vmatmul.mubr.bf16.gmra.mrb[0].mxu0 %v2678
      %v2764 = vpop.f32.mrb[0].mxu0
      %v2765 = vadd.f32 0.0, %v2764
      %v2766 = vpop.f32.mrb[0].mxu0
      %v2767 = vpop.f32.mrb[0].mxu0
      %v2768 = vpop.f32.mrb[0].mxu0
      %2769 = vdwg.mxu0
      %v2770 = vadd.f32 %v2620, %v2724
      %v2771 = vadd.f32 %v2622, %v2726
      %v2772 = vadd.f32 %v2661, %v2765
      %s2773 = scalar_lea.vmem %s13, 3
      %v2774 = vld [vmem:[%s2773] sm:$0x1]
      %2775 = vrot.lane.b32.xlu0 %v2460, 110
      %v2776 = vpop.permute.xlu0 %2775
      %2777 = vrot.lane.b32.xlu0 %v2461, 110
      %v2778 = vpop.permute.xlu0 %2777
      %2779 = vrot.lane.b32.xlu0 %v2462, 110
      %v2780 = vpop.permute.xlu0 %2779
      %vm2781 = vcmask 900096
      %v2782 = vsel %vm2781, %v2776, %v2778
      %v2783 = vsel %vm2781, %v2778, %v2780
      %v2785 = vsel %vm2478, %v2774, 0
      %v2788 = vsel %vm2482, %v2782, 0
      %v2791 = vsel %vm2482, %v2783, 0
      %v2794 = vsel %vm2482, %v2780, 0
      %2796 = vmatprep.subr.bf16.mxu0 %v2791
      %2797 = vmatpush1.bf16.msra.mxu0 %v2788
      %2798 = vmatprep.subr.bf16.mxu0 0
      %2799 = vmatpush1.bf16.msra.mxu0 0
      %2800 = vmatprep.subr.bf16.mxu0 0
      %2801 = vmatpush1.bf16.msra.mxu0 0
      %2802 = vmatprep.subr.bf16.mxu0 0
      %2803 = vmatpush1.bf16.msra.mxu0 0
      %2804 = vmatprep.subr.bf16.mxu0 0
      %2805 = vmatpush1.bf16.msra.mxu0 0
      %2806 = vmatprep.subr.bf16.mxu0 0
      %2807 = vmatpush1.bf16.msra.mxu0 0
      %2808 = vmatprep.subr.bf16.mxu0 0
      %2809 = vmatpush1.bf16.msra.mxu0 0
      %2810 = vmatprep.subr.bf16.mxu0 0
      %2811 = vmatpush1.bf16.msra.mxu0 0
      %2812 = vmatprep.subr.bf16.mxu0 0
      %2813 = vmatpush1.bf16.msra.mxu0 0
      %2814 = vmatprep.subr.bf16.mxu0 0
      %2815 = vmatpush1.bf16.msra.mxu0 0
      %2816 = vmatprep.subr.bf16.mxu0 0
      %2817 = vmatpush1.bf16.msra.mxu0 0
      %2818 = vmatprep.subr.bf16.mxu0 0
      %2819 = vmatpush1.bf16.msra.mxu0 0
      %2820 = vmatprep.subr.bf16.mxu0 0
      %2821 = vmatpush1.bf16.msra.mxu0 0
      %2822 = vmatprep.subr.bf16.mxu0 0
      %2823 = vmatpush1.bf16.msra.mxu0 0
      %2824 = vmatprep.subr.bf16.mxu0 0
      %2825 = vmatpush1.bf16.msra.mxu0 0
      %2826 = vmatprep.subr.bf16.mxu0 0
      %2827 = vmatpush1.bf16.msra.mxu0 0
      %2828 = vmatprep.mubr.bf16.mxu0 0
      %2829 = vmatmul.mubr.bf16.gmra.mrb[0].mxu0 %v2785
      %v2830 = vpop.f32.mrb[0].mxu0
      %v2831 = vadd.f32 0.0, %v2830
      %v2832 = vpop.f32.mrb[0].mxu0
      %v2833 = vadd.f32 0.0, %v2832
      %v2834 = vpop.f32.mrb[0].mxu0
      %v2835 = vpop.f32.mrb[0].mxu0
      %2836 = vdwg.mxu0
      %2837 = vmatprep.subr.bf16.mxu0 0
      %2838 = vmatpush1.bf16.msra.mxu0 %v2794
      %2839 = vmatprep.subr.bf16.mxu0 0
      %2840 = vmatpush1.bf16.msra.mxu0 0
      %2841 = vmatprep.subr.bf16.mxu0 0
      %2842 = vmatpush1.bf16.msra.mxu0 0
      %2843 = vmatprep.subr.bf16.mxu0 0
      %2844 = vmatpush1.bf16.msra.mxu0 0
      %2845 = vmatprep.subr.bf16.mxu0 0
      %2846 = vmatpush1.bf16.msra.mxu0 0
      %2847 = vmatprep.subr.bf16.mxu0 0
      %2848 = vmatpush1.bf16.msra.mxu0 0
      %2849 = vmatprep.subr.bf16.mxu0 0
      %2850 = vmatpush1.bf16.msra.mxu0 0
      %2851 = vmatprep.subr.bf16.mxu0 0
      %2852 = vmatpush1.bf16.msra.mxu0 0
      %2853 = vmatprep.subr.bf16.mxu0 0
      %2854 = vmatpush1.bf16.msra.mxu0 0
      %2855 = vmatprep.subr.bf16.mxu0 0
      %2856 = vmatpush1.bf16.msra.mxu0 0
      %2857 = vmatprep.subr.bf16.mxu0 0
      %2858 = vmatpush1.bf16.msra.mxu0 0
      %2859 = vmatprep.subr.bf16.mxu0 0
      %2860 = vmatpush1.bf16.msra.mxu0 0
      %2861 = vmatprep.subr.bf16.mxu0 0
      %2862 = vmatpush1.bf16.msra.mxu0 0
      %2863 = vmatprep.subr.bf16.mxu0 0
      %2864 = vmatpush1.bf16.msra.mxu0 0
      %2865 = vmatprep.subr.bf16.mxu0 0
      %2866 = vmatpush1.bf16.msra.mxu0 0
      %2867 = vmatprep.subr.bf16.mxu0 0
      %2868 = vmatpush1.bf16.msra.mxu0 0
      %2869 = vmatprep.mubr.bf16.mxu0 0
      %2870 = vmatmul.mubr.bf16.gmra.mrb[0].mxu0 %v2785
      %v2871 = vpop.f32.mrb[0].mxu0
      %v2872 = vadd.f32 0.0, %v2871
      %v2873 = vpop.f32.mrb[0].mxu0
      %v2874 = vpop.f32.mrb[0].mxu0
      %v2875 = vpop.f32.mrb[0].mxu0
      %2876 = vdwg.mxu0
      %v2877 = vadd.f32 %v2770, %v2831
      %v2878 = vadd.f32 %v2771, %v2833
      %v2879 = vadd.f32 %v2772, %v2872
      %s2880 = scalar_lea.vmem %s13, 4
      %v2881 = vld [vmem:[%s2880] sm:$0x1]
      %2882 = vrot.lane.b32.xlu0 %v2460, 109
      %v2883 = vpop.permute.xlu0 %2882
      %2884 = vrot.lane.b32.xlu0 %v2461, 109
      %v2885 = vpop.permute.xlu0 %2884
      %2886 = vrot.lane.b32.xlu0 %v2462, 109
      %v2887 = vpop.permute.xlu0 %2886
      %vm2888 = vcmask 891904
      %v2889 = vsel %vm2888, %v2883, %v2885
      %v2890 = vsel %vm2888, %v2885, %v2887
      %v2892 = vsel %vm2478, %v2881, 0
      %v2895 = vsel %vm2482, %v2889, 0
      %v2898 = vsel %vm2482, %v2890, 0
      %v2901 = vsel %vm2482, %v2887, 0
      %2903 = vmatprep.subr.bf16.mxu0 %v2898
      %2904 = vmatpush1.bf16.msra.mxu0 %v2895
      %2905 = vmatprep.subr.bf16.mxu0 0
      %2906 = vmatpush1.bf16.msra.mxu0 0
      %2907 = vmatprep.subr.bf16.mxu0 0
      %2908 = vmatpush1.bf16.msra.mxu0 0
      %2909 = vmatprep.subr.bf16.mxu0 0
      %2910 = vmatpush1.bf16.msra.mxu0 0
      %2911 = vmatprep.subr.bf16.mxu0 0
      %2912 = vmatpush1.bf16.msra.mxu0 0
      %2913 = vmatprep.subr.bf16.mxu0 0
      %2914 = vmatpush1.bf16.msra.mxu0 0
      %2915 = vmatprep.subr.bf16.mxu0 0
      %2916 = vmatpush1.bf16.msra.mxu0 0
      %2917 = vmatprep.subr.bf16.mxu0 0
      %2918 = vmatpush1.bf16.msra.mxu0 0
      %2919 = vmatprep.subr.bf16.mxu0 0
      %2920 = vmatpush1.bf16.msra.mxu0 0
      %2921 = vmatprep.subr.bf16.mxu0 0
      %2922 = vmatpush1.bf16.msra.mxu0 0
      %2923 = vmatprep.subr.bf16.mxu0 0
      %2924 = vmatpush1.bf16.msra.mxu0 0
      %2925 = vmatprep.subr.bf16.mxu0 0
      %2926 = vmatpush1.bf16.msra.mxu0 0
      %2927 = vmatprep.subr.bf16.mxu0 0
      %2928 = vmatpush1.bf16.msra.mxu0 0
      %2929 = vmatprep.subr.bf16.mxu0 0
      %2930 = vmatpush1.bf16.msra.mxu0 0
      %2931 = vmatprep.subr.bf16.mxu0 0
      %2932 = vmatpush1.bf16.msra.mxu0 0
      %2933 = vmatprep.subr.bf16.mxu0 0
      %2934 = vmatpush1.bf16.msra.mxu0 0
      %2935 = vmatprep.mubr.bf16.mxu0 0
      %2936 = vmatmul.mubr.bf16.gmra.mrb[0].mxu0 %v2892
      %v2937 = vpop.f32.mrb[0].mxu0
      %v2938 = vadd.f32 0.0, %v2937
      %v2939 = vpop.f32.mrb[0].mxu0
      %v2940 = vadd.f32 0.0, %v2939
      %v2941 = vpop.f32.mrb[0].mxu0
      %v2942 = vpop.f32.mrb[0].mxu0
      %2943 = vdwg.mxu0
      %2944 = vmatprep.subr.bf16.mxu0 0
      %2945 = vmatpush1.bf16.msra.mxu0 %v2901
      %2946 = vmatprep.subr.bf16.mxu0 0
      %2947 = vmatpush1.bf16.msra.mxu0 0
      %2948 = vmatprep.subr.bf16.mxu0 0
      %2949 = vmatpush1.bf16.msra.mxu0 0
      %2950 = vmatprep.subr.bf16.mxu0 0
      %2951 = vmatpush1.bf16.msra.mxu0 0
      %2952 = vmatprep.subr.bf16.mxu0 0
      %2953 = vmatpush1.bf16.msra.mxu0 0
      %2954 = vmatprep.subr.bf16.mxu0 0
      %2955 = vmatpush1.bf16.msra.mxu0 0
      %2956 = vmatprep.subr.bf16.mxu0 0
      %2957 = vmatpush1.bf16.msra.mxu0 0
      %2958 = vmatprep.subr.bf16.mxu0 0
      %2959 = vmatpush1.bf16.msra.mxu0 0
      %2960 = vmatprep.subr.bf16.mxu0 0
      %2961 = vmatpush1.bf16.msra.mxu0 0
      %2962 = vmatprep.subr.bf16.mxu0 0
      %2963 = vmatpush1.bf16.msra.mxu0 0
      %2964 = vmatprep.subr.bf16.mxu0 0
      %2965 = vmatpush1.bf16.msra.mxu0 0
      %2966 = vmatprep.subr.bf16.mxu0 0
      %2967 = vmatpush1.bf16.msra.mxu0 0
      %2968 = vmatprep.subr.bf16.mxu0 0
      %2969 = vmatpush1.bf16.msra.mxu0 0
      %2970 = vmatprep.subr.bf16.mxu0 0
      %2971 = vmatpush1.bf16.msra.mxu0 0
      %2972 = vmatprep.subr.bf16.mxu0 0
      %2973 = vmatpush1.bf16.msra.mxu0 0
      %2974 = vmatprep.subr.bf16.mxu0 0
      %2975 = vmatpush1.bf16.msra.mxu0 0
      %2976 = vmatprep.mubr.bf16.mxu0 0
      %2977 = vmatmul.mubr.bf16.gmra.mrb[0].mxu0 %v2892
      %v2978 = vpop.f32.mrb[0].mxu0
      %v2979 = vadd.f32 0.0, %v2978
      %v2980 = vpop.f32.mrb[0].mxu0
      %v2981 = vpop.f32.mrb[0].mxu0
      %v2982 = vpop.f32.mrb[0].mxu0
      %2983 = vdwg.mxu0
      %v2984 = vadd.f32 %v2877, %v2938
      %v2985 = vadd.f32 %v2878, %v2940
      %v2986 = vadd.f32 %v2879, %v2979
      %s2987 = scalar_lea.vmem %s13, 5
      %v2988 = vld [vmem:[%s2987] sm:$0x1]
      %2989 = vrot.lane.b32.xlu0 %v2460, 108
      %v2990 = vpop.permute.xlu0 %2989
      %2991 = vrot.lane.b32.xlu0 %v2461, 108
      %v2992 = vpop.permute.xlu0 %2991
      %2993 = vrot.lane.b32.xlu0 %v2462, 108
      %v2994 = vpop.permute.xlu0 %2993
      %vm2995 = vcmask 883712
      %v2996 = vsel %vm2995, %v2990, %v2992
      %v2997 = vsel %vm2995, %v2992, %v2994
      %v2999 = vsel %vm2478, %v2988, 0
      %v3002 = vsel %vm2482, %v2996, 0
      %v3005 = vsel %vm2482, %v2997, 0
      %v3008 = vsel %vm2482, %v2994, 0
      %3010 = vmatprep.subr.bf16.mxu0 %v3005
      %3011 = vmatpush1.bf16.msra.mxu0 %v3002
      %3012 = vmatprep.subr.bf16.mxu0 0
      %3013 = vmatpush1.bf16.msra.mxu0 0
      %3014 = vmatprep.subr.bf16.mxu0 0
      %3015 = vmatpush1.bf16.msra.mxu0 0
      %3016 = vmatprep.subr.bf16.mxu0 0
      %3017 = vmatpush1.bf16.msra.mxu0 0
      %3018 = vmatprep.subr.bf16.mxu0 0
      %3019 = vmatpush1.bf16.msra.mxu0 0
      %3020 = vmatprep.subr.bf16.mxu0 0
      %3021 = vmatpush1.bf16.msra.mxu0 0
      %3022 = vmatprep.subr.bf16.mxu0 0
      %3023 = vmatpush1.bf16.msra.mxu0 0
      %3024 = vmatprep.subr.bf16.mxu0 0
      %3025 = vmatpush1.bf16.msra.mxu0 0
      %3026 = vmatprep.subr.bf16.mxu0 0
      %3027 = vmatpush1.bf16.msra.mxu0 0
      %3028 = vmatprep.subr.bf16.mxu0 0
      %3029 = vmatpush1.bf16.msra.mxu0 0
      %3030 = vmatprep.subr.bf16.mxu0 0
      %3031 = vmatpush1.bf16.msra.mxu0 0
      %3032 = vmatprep.subr.bf16.mxu0 0
      %3033 = vmatpush1.bf16.msra.mxu0 0
      %3034 = vmatprep.subr.bf16.mxu0 0
      %3035 = vmatpush1.bf16.msra.mxu0 0
      %3036 = vmatprep.subr.bf16.mxu0 0
      %3037 = vmatpush1.bf16.msra.mxu0 0
      %3038 = vmatprep.subr.bf16.mxu0 0
      %3039 = vmatpush1.bf16.msra.mxu0 0
      %3040 = vmatprep.subr.bf16.mxu0 0
      %3041 = vmatpush1.bf16.msra.mxu0 0
      %3042 = vmatprep.mubr.bf16.mxu0 0
      %3043 = vmatmul.mubr.bf16.gmra.mrb[0].mxu0 %v2999
      %v3044 = vpop.f32.mrb[0].mxu0
      %v3045 = vadd.f32 0.0, %v3044
      %v3046 = vpop.f32.mrb[0].mxu0
      %v3047 = vadd.f32 0.0, %v3046
      %v3048 = vpop.f32.mrb[0].mxu0
      %v3049 = vpop.f32.mrb[0].mxu0
      %3050 = vdwg.mxu0
      %3051 = vmatprep.subr.bf16.mxu0 0
      %3052 = vmatpush1.bf16.msra.mxu0 %v3008
      %3053 = vmatprep.subr.bf16.mxu0 0
      %3054 = vmatpush1.bf16.msra.mxu0 0
      %3055 = vmatprep.subr.bf16.mxu0 0
      %3056 = vmatpush1.bf16.msra.mxu0 0
      %3057 = vmatprep.subr.bf16.mxu0 0
      %3058 = vmatpush1.bf16.msra.mxu0 0
      %3059 = vmatprep.subr.bf16.mxu0 0
      %3060 = vmatpush1.bf16.msra.mxu0 0
      %3061 = vmatprep.subr.bf16.mxu0 0
      %3062 = vmatpush1.bf16.msra.mxu0 0
      %3063 = vmatprep.subr.bf16.mxu0 0
      %3064 = vmatpush1.bf16.msra.mxu0 0
      %3065 = vmatprep.subr.bf16.mxu0 0
      %3066 = vmatpush1.bf16.msra.mxu0 0
      %3067 = vmatprep.subr.bf16.mxu0 0
      %3068 = vmatpush1.bf16.msra.mxu0 0
      %3069 = vmatprep.subr.bf16.mxu0 0
      %3070 = vmatpush1.bf16.msra.mxu0 0
      %3071 = vmatprep.subr.bf16.mxu0 0
      %3072 = vmatpush1.bf16.msra.mxu0 0
      %3073 = vmatprep.subr.bf16.mxu0 0
      %3074 = vmatpush1.bf16.msra.mxu0 0
      %3075 = vmatprep.subr.bf16.mxu0 0
      %3076 = vmatpush1.bf16.msra.mxu0 0
      %3077 = vmatprep.subr.bf16.mxu0 0
      %3078 = vmatpush1.bf16.msra.mxu0 0
      %3079 = vmatprep.subr.bf16.mxu0 0
      %3080 = vmatpush1.bf16.msra.mxu0 0
      %3081 = vmatprep.subr.bf16.mxu0 0
      %3082 = vmatpush1.bf16.msra.mxu0 0
      %3083 = vmatprep.mubr.bf16.mxu0 0
      %3084 = vmatmul.mubr.bf16.gmra.mrb[0].mxu0 %v2999
      %v3085 = vpop.f32.mrb[0].mxu0
      %v3086 = vadd.f32 0.0, %v3085
      %v3087 = vpop.f32.mrb[0].mxu0
      %v3088 = vpop.f32.mrb[0].mxu0
      %v3089 = vpop.f32.mrb[0].mxu0
      %3090 = vdwg.mxu0
      %v3091 = vadd.f32 %v2984, %v3045
      %v3092 = vadd.f32 %v2985, %v3047
      %v3093 = vadd.f32 %v2986, %v3086
      %s3094 = scalar_lea.vmem %s13, 6
      %v3095 = vld [vmem:[%s3094] sm:$0x1]
      %3096 = vrot.lane.b32.xlu0 %v2460, 92
      %v3097 = vpop.permute.xlu0 %3096
      %3098 = vrot.lane.b32.xlu0 %v2461, 92
      %v3099 = vpop.permute.xlu0 %3098
      %3100 = vrot.lane.b32.xlu0 %v2462, 92
      %v3101 = vpop.permute.xlu0 %3100
      %vm3102 = vcmask 752640
      %v3103 = vsel %vm3102, %v3097, %v3099
      %v3104 = vsel %vm3102, %v3099, %v3101
      %v3106 = vsel %vm2478, %v3095, 0
      %v3109 = vsel %vm2482, %v3103, 0
      %v3112 = vsel %vm2482, %v3104, 0
      %v3115 = vsel %vm2482, %v3101, 0
      %3117 = vmatprep.subr.bf16.mxu0 %v3112
      %3118 = vmatpush1.bf16.msra.mxu0 %v3109
      %3119 = vmatprep.subr.bf16.mxu0 0
      %3120 = vmatpush1.bf16.msra.mxu0 0
      %3121 = vmatprep.subr.bf16.mxu0 0
      %3122 = vmatpush1.bf16.msra.mxu0 0
      %3123 = vmatprep.subr.bf16.mxu0 0
      %3124 = vmatpush1.bf16.msra.mxu0 0
      %3125 = vmatprep.subr.bf16.mxu0 0
      %3126 = vmatpush1.bf16.msra.mxu0 0
      %3127 = vmatprep.subr.bf16.mxu0 0
      %3128 = vmatpush1.bf16.msra.mxu0 0
      %3129 = vmatprep.subr.bf16.mxu0 0
      %3130 = vmatpush1.bf16.msra.mxu0 0
      %3131 = vmatprep.subr.bf16.mxu0 0
      %3132 = vmatpush1.bf16.msra.mxu0 0
      %3133 = vmatprep.subr.bf16.mxu0 0
      %3134 = vmatpush1.bf16.msra.mxu0 0
      %3135 = vmatprep.subr.bf16.mxu0 0
      %3136 = vmatpush1.bf16.msra.mxu0 0
      %3137 = vmatprep.subr.bf16.mxu0 0
      %3138 = vmatpush1.bf16.msra.mxu0 0
      %3139 = vmatprep.subr.bf16.mxu0 0
      %3140 = vmatpush1.bf16.msra.mxu0 0
      %3141 = vmatprep.subr.bf16.mxu0 0
      %3142 = vmatpush1.bf16.msra.mxu0 0
      %3143 = vmatprep.subr.bf16.mxu0 0
      %3144 = vmatpush1.bf16.msra.mxu0 0
      %3145 = vmatprep.subr.bf16.mxu0 0
      %3146 = vmatpush1.bf16.msra.mxu0 0
      %3147 = vmatprep.subr.bf16.mxu0 0
      %3148 = vmatpush1.bf16.msra.mxu0 0
      %3149 = vmatprep.mubr.bf16.mxu0 0
      %3150 = vmatmul.mubr.bf16.gmra.mrb[0].mxu0 %v3106
      %v3151 = vpop.f32.mrb[0].mxu0
      %v3152 = vadd.f32 0.0, %v3151
      %v3153 = vpop.f32.mrb[0].mxu0
      %v3154 = vadd.f32 0.0, %v3153
      %v3155 = vpop.f32.mrb[0].mxu0
      %v3156 = vpop.f32.mrb[0].mxu0
      %3157 = vdwg.mxu0
      %3158 = vmatprep.subr.bf16.mxu0 0
      %3159 = vmatpush1.bf16.msra.mxu0 %v3115
      %3160 = vmatprep.subr.bf16.mxu0 0
      %3161 = vmatpush1.bf16.msra.mxu0 0
      %3162 = vmatprep.subr.bf16.mxu0 0
      %3163 = vmatpush1.bf16.msra.mxu0 0
      %3164 = vmatprep.subr.bf16.mxu0 0
      %3165 = vmatpush1.bf16.msra.mxu0 0
      %3166 = vmatprep.subr.bf16.mxu0 0
      %3167 = vmatpush1.bf16.msra.mxu0 0
      %3168 = vmatprep.subr.bf16.mxu0 0
      %3169 = vmatpush1.bf16.msra.mxu0 0
      %3170 = vmatprep.subr.bf16.mxu0 0
      %3171 = vmatpush1.bf16.msra.mxu0 0
      %3172 = vmatprep.subr.bf16.mxu0 0
      %3173 = vmatpush1.bf16.msra.mxu0 0
      %3174 = vmatprep.subr.bf16.mxu0 0
      %3175 = vmatpush1.bf16.msra.mxu0 0
      %3176 = vmatprep.subr.bf16.mxu0 0
      %3177 = vmatpush1.bf16.msra.mxu0 0
      %3178 = vmatprep.subr.bf16.mxu0 0
      %3179 = vmatpush1.bf16.msra.mxu0 0
      %3180 = vmatprep.subr.bf16.mxu0 0
      %3181 = vmatpush1.bf16.msra.mxu0 0
      %3182 = vmatprep.subr.bf16.mxu0 0
      %3183 = vmatpush1.bf16.msra.mxu0 0
      %3184 = vmatprep.subr.bf16.mxu0 0
      %3185 = vmatpush1.bf16.msra.mxu0 0
      %3186 = vmatprep.subr.bf16.mxu0 0
      %3187 = vmatpush1.bf16.msra.mxu0 0
      %3188 = vmatprep.subr.bf16.mxu0 0
      %3189 = vmatpush1.bf16.msra.mxu0 0
      %3190 = vmatprep.mubr.bf16.mxu0 0
      %3191 = vmatmul.mubr.bf16.gmra.mrb[0].mxu0 %v3106
      %v3192 = vpop.f32.mrb[0].mxu0
      %v3193 = vadd.f32 0.0, %v3192
      %v3194 = vpop.f32.mrb[0].mxu0
      %v3195 = vpop.f32.mrb[0].mxu0
      %v3196 = vpop.f32.mrb[0].mxu0
      %3197 = vdwg.mxu0
      %v3198 = vadd.f32 %v3091, %v3152
      %v3199 = vadd.f32 %v3092, %v3154
      %v3200 = vadd.f32 %v3093, %v3193
      %s3201 = scalar_lea.vmem %s13, 7
      %v3202 = vld [vmem:[%s3201] sm:$0x1]
      %3203 = vrot.lane.b32.xlu0 %v2460, 91
      %v3204 = vpop.permute.xlu0 %3203
      %3205 = vrot.lane.b32.xlu0 %v2461, 91
      %v3206 = vpop.permute.xlu0 %3205
      %3207 = vrot.lane.b32.xlu0 %v2462, 91
      %v3208 = vpop.permute.xlu0 %3207
      %vm3209 = vcmask 744448
      %v3210 = vsel %vm3209, %v3204, %v3206
      %v3211 = vsel %vm3209, %v3206, %v3208
      %v3213 = vsel %vm2478, %v3202, 0
      %v3216 = vsel %vm2482, %v3210, 0
      %v3219 = vsel %vm2482, %v3211, 0
      %v3222 = vsel %vm2482, %v3208, 0
      %3224 = vmatprep.subr.bf16.mxu0 %v3219
      %3225 = vmatpush1.bf16.msra.mxu0 %v3216
      %3226 = vmatprep.subr.bf16.mxu0 0
      %3227 = vmatpush1.bf16.msra.mxu0 0
      %3228 = vmatprep.subr.bf16.mxu0 0
      %3229 = vmatpush1.bf16.msra.mxu0 0
      %3230 = vmatprep.subr.bf16.mxu0 0
      %3231 = vmatpush1.bf16.msra.mxu0 0
      %3232 = vmatprep.subr.bf16.mxu0 0
      %3233 = vmatpush1.bf16.msra.mxu0 0
      %3234 = vmatprep.subr.bf16.mxu0 0
      %3235 = vmatpush1.bf16.msra.mxu0 0
      %3236 = vmatprep.subr.bf16.mxu0 0
      %3237 = vmatpush1.bf16.msra.mxu0 0
      %3238 = vmatprep.subr.bf16.mxu0 0
      %3239 = vmatpush1.bf16.msra.mxu0 0
      %3240 = vmatprep.subr.bf16.mxu0 0
      %3241 = vmatpush1.bf16.msra.mxu0 0
      %3242 = vmatprep.subr.bf16.mxu0 0
      %3243 = vmatpush1.bf16.msra.mxu0 0
      %3244 = vmatprep.subr.bf16.mxu0 0
      %3245 = vmatpush1.bf16.msra.mxu0 0
      %3246 = vmatprep.subr.bf16.mxu0 0
      %3247 = vmatpush1.bf16.msra.mxu0 0
      %3248 = vmatprep.subr.bf16.mxu0 0
      %3249 = vmatpush1.bf16.msra.mxu0 0
      %3250 = vmatprep.subr.bf16.mxu0 0
      %3251 = vmatpush1.bf16.msra.mxu0 0
      %3252 = vmatprep.subr.bf16.mxu0 0
      %3253 = vmatpush1.bf16.msra.mxu0 0
      %3254 = vmatprep.subr.bf16.mxu0 0
      %3255 = vmatpush1.bf16.msra.mxu0 0
      %3256 = vmatprep.mubr.bf16.mxu0 0
      %3257 = vmatmul.mubr.bf16.gmra.mrb[0].mxu0 %v3213
      %v3258 = vpop.f32.mrb[0].mxu0
      %v3259 = vadd.f32 0.0, %v3258
      %v3260 = vpop.f32.mrb[0].mxu0
      %v3261 = vadd.f32 0.0, %v3260
      %v3262 = vpop.f32.mrb[0].mxu0
      %v3263 = vpop.f32.mrb[0].mxu0
      %3264 = vdwg.mxu0
      %3265 = vmatprep.subr.bf16.mxu0 0
      %3266 = vmatpush1.bf16.msra.mxu0 %v3222
      %3267 = vmatprep.subr.bf16.mxu0 0
      %3268 = vmatpush1.bf16.msra.mxu0 0
      %3269 = vmatprep.subr.bf16.mxu0 0
      %3270 = vmatpush1.bf16.msra.mxu0 0
      %3271 = vmatprep.subr.bf16.mxu0 0
      %3272 = vmatpush1.bf16.msra.mxu0 0
      %3273 = vmatprep.subr.bf16.mxu0 0
      %3274 = vmatpush1.bf16.msra.mxu0 0
      %3275 = vmatprep.subr.bf16.mxu0 0
      %3276 = vmatpush1.bf16.msra.mxu0 0
      %3277 = vmatprep.subr.bf16.mxu0 0
      %3278 = vmatpush1.bf16.msra.mxu0 0
      %3279 = vmatprep.subr.bf16.mxu0 0
      %3280 = vmatpush1.bf16.msra.mxu0 0
      %3281 = vmatprep.subr.bf16.mxu0 0
      %3282 = vmatpush1.bf16.msra.mxu0 0
      %3283 = vmatprep.subr.bf16.mxu0 0
      %3284 = vmatpush1.bf16.msra.mxu0 0
      %3285 = vmatprep.subr.bf16.mxu0 0
      %3286 = vmatpush1.bf16.msra.mxu0 0
      %3287 = vmatprep.subr.bf16.mxu0 0
      %3288 = vmatpush1.bf16.msra.mxu0 0
      %3289 = vmatprep.subr.bf16.mxu0 0
      %3290 = vmatpush1.bf16.msra.mxu0 0
      %3291 = vmatprep.subr.bf16.mxu0 0
      %3292 = vmatpush1.bf16.msra.mxu0 0
      %3293 = vmatprep.subr.bf16.mxu0 0
      %3294 = vmatpush1.bf16.msra.mxu0 0
      %3295 = vmatprep.subr.bf16.mxu0 0
      %3296 = vmatpush1.bf16.msra.mxu0 0
      %3297 = vmatprep.mubr.bf16.mxu0 0
      %3298 = vmatmul.mubr.bf16.gmra.mrb[0].mxu0 %v3213
      %v3299 = vpop.f32.mrb[0].mxu0
      %v3300 = vadd.f32 0.0, %v3299
      %v3301 = vpop.f32.mrb[0].mxu0
      %v3302 = vpop.f32.mrb[0].mxu0
      %v3303 = vpop.f32.mrb[0].mxu0
      %3304 = vdwg.mxu0
      %v3305 = vadd.f32 %v3198, %v3259
      %v3306 = vadd.f32 %v3199, %v3261
      %v3307 = vadd.f32 %v3200, %v3300
      %s3308 = scalar_lea.vmem %s13, 8
      %v3309 = vld [vmem:[%s3308] sm:$0x1]
      %3310 = vrot.lane.b32.xlu0 %v2460, 90
      %v3311 = vpop.permute.xlu0 %3310
      %3312 = vrot.lane.b32.xlu0 %v2461, 90
      %v3313 = vpop.permute.xlu0 %3312
      %3314 = vrot.lane.b32.xlu0 %v2462, 90
      %v3315 = vpop.permute.xlu0 %3314
      %vm3316 = vcmask 736256
      %v3317 = vsel %vm3316, %v3311, %v3313
      %v3318 = vsel %vm3316, %v3313, %v3315
      %v3320 = vsel %vm2478, %v3309, 0
      %v3323 = vsel %vm2482, %v3317, 0
      %v3326 = vsel %vm2482, %v3318, 0
      %v3329 = vsel %vm2482, %v3315, 0
      %3331 = vmatprep.subr.bf16.mxu0 %v3326
      %3332 = vmatpush1.bf16.msra.mxu0 %v3323
      %3333 = vmatprep.subr.bf16.mxu0 0
      %3334 = vmatpush1.bf16.msra.mxu0 0
      %3335 = vmatprep.subr.bf16.mxu0 0
      %3336 = vmatpush1.bf16.msra.mxu0 0
      %3337 = vmatprep.subr.bf16.mxu0 0
      %3338 = vmatpush1.bf16.msra.mxu0 0
      %3339 = vmatprep.subr.bf16.mxu0 0
      %3340 = vmatpush1.bf16.msra.mxu0 0
      %3341 = vmatprep.subr.bf16.mxu0 0
      %3342 = vmatpush1.bf16.msra.mxu0 0
      %3343 = vmatprep.subr.bf16.mxu0 0
      %3344 = vmatpush1.bf16.msra.mxu0 0
      %3345 = vmatprep.subr.bf16.mxu0 0
      %3346 = vmatpush1.bf16.msra.mxu0 0
      %3347 = vmatprep.subr.bf16.mxu0 0
      %3348 = vmatpush1.bf16.msra.mxu0 0
      %3349 = vmatprep.subr.bf16.mxu0 0
      %3350 = vmatpush1.bf16.msra.mxu0 0
      %3351 = vmatprep.subr.bf16.mxu0 0
      %3352 = vmatpush1.bf16.msra.mxu0 0
      %3353 = vmatprep.subr.bf16.mxu0 0
      %3354 = vmatpush1.bf16.msra.mxu0 0
      %3355 = vmatprep.subr.bf16.mxu0 0
      %3356 = vmatpush1.bf16.msra.mxu0 0
      %3357 = vmatprep.subr.bf16.mxu0 0
      %3358 = vmatpush1.bf16.msra.mxu0 0
      %3359 = vmatprep.subr.bf16.mxu0 0
      %3360 = vmatpush1.bf16.msra.mxu0 0
      %3361 = vmatprep.subr.bf16.mxu0 0
      %3362 = vmatpush1.bf16.msra.mxu0 0
      %3363 = vmatprep.mubr.bf16.mxu0 0
      %3364 = vmatmul.mubr.bf16.gmra.mrb[0].mxu0 %v3320
      %v3365 = vpop.f32.mrb[0].mxu0
      %v3366 = vadd.f32 0.0, %v3365
      %v3367 = vpop.f32.mrb[0].mxu0
      %v3368 = vadd.f32 0.0, %v3367
      %v3369 = vpop.f32.mrb[0].mxu0
      %v3370 = vpop.f32.mrb[0].mxu0
      %3371 = vdwg.mxu0
      %3372 = vmatprep.subr.bf16.mxu0 0
      %3373 = vmatpush1.bf16.msra.mxu0 %v3329
      %3374 = vmatprep.subr.bf16.mxu0 0
      %3375 = vmatpush1.bf16.msra.mxu0 0
      %3376 = vmatprep.subr.bf16.mxu0 0
      %3377 = vmatpush1.bf16.msra.mxu0 0
      %3378 = vmatprep.subr.bf16.mxu0 0
      %3379 = vmatpush1.bf16.msra.mxu0 0
      %3380 = vmatprep.subr.bf16.mxu0 0
      %3381 = vmatpush1.bf16.msra.mxu0 0
      %3382 = vmatprep.subr.bf16.mxu0 0
      %3383 = vmatpush1.bf16.msra.mxu0 0
      %3384 = vmatprep.subr.bf16.mxu0 0
      %3385 = vmatpush1.bf16.msra.mxu0 0
      %3386 = vmatprep.subr.bf16.mxu0 0
      %3387 = vmatpush1.bf16.msra.mxu0 0
      %3388 = vmatprep.subr.bf16.mxu0 0
      %3389 = vmatpush1.bf16.msra.mxu0 0
      %3390 = vmatprep.subr.bf16.mxu0 0
      %3391 = vmatpush1.bf16.msra.mxu0 0
      %3392 = vmatprep.subr.bf16.mxu0 0
      %3393 = vmatpush1.bf16.msra.mxu0 0
      %3394 = vmatprep.subr.bf16.mxu0 0
      %3395 = vmatpush1.bf16.msra.mxu0 0
      %3396 = vmatprep.subr.bf16.mxu0 0
      %3397 = vmatpush1.bf16.msra.mxu0 0
      %3398 = vmatprep.subr.bf16.mxu0 0
      %3399 = vmatpush1.bf16.msra.mxu0 0
      %3400 = vmatprep.subr.bf16.mxu0 0
      %3401 = vmatpush1.bf16.msra.mxu0 0
      %3402 = vmatprep.subr.bf16.mxu0 0
      %3403 = vmatpush1.bf16.msra.mxu0 0
      %3404 = vmatprep.mubr.bf16.mxu0 0
      %3405 = vmatmul.mubr.bf16.gmra.mrb[0].mxu0 %v3320
      %v3406 = vpop.f32.mrb[0].mxu0
      %v3407 = vadd.f32 0.0, %v3406
      %v3408 = vpop.f32.mrb[0].mxu0
      %v3409 = vpop.f32.mrb[0].mxu0
      %v3410 = vpop.f32.mrb[0].mxu0
      %3411 = vdwg.mxu0
      %v3412 = vadd.f32 %v3305, %v3366
      %v3413 = vadd.f32 %v3306, %v3368
      %v3414 = vadd.f32 %v3307, %v3407
      %v3415 = vld [vmem:[#allocation2] sm:$0x1]
      %3417 = vset.pattern.permute.xlu0 0
      %3418 = vperm.xlu0 %3417, %v3415
      %v3419 = vpop.permute.xlu0 %3418
      %v3421 = vlaneseq
      %v3422 = vshrl.u32 %v3421, 7
      %v3423 = vsub.s32 0, %v3422
      %v3424 = vrot.slane %v3419, %v3423
      %v3425 = vadd.f32 %v3412, %v3424
      %v3426 = vadd.f32 %v3413, %v3424
      %v3427 = vadd.f32 %v3414, %v3424
      %v3428 = vld [vmem:[%s15] sm:$0xff]
      %v3429 = vld [vmem:[%s15 + $0x8] sm:$0xff]
      %v3430 = vld [vmem:[%s15 + $0x10] sm:$0xff]
      %v3431 = vld [vmem:[%s15 + $0x18] sm:$0xff]
      %v3432 = vld [vmem:[%s15 + $0x20] sm:$0xff]
      %v3433 = vld [vmem:[%s15 + $0x28] sm:$0xff]
      %v3434 = vld [vmem:[%s15 + $0x30] sm:$0xff]
      %v3435 = vld [vmem:[%s15 + $0x38] sm:$0xff]
      %v3436 = vld [vmem:[%s15 + $0x40] sm:$0xff]
      %v3437 = vld [vmem:[%s15 + $0x48] sm:$0xff]
      %v3438 = vld [vmem:[%s15 + $0x50] sm:$0xff]
      %v3439 = vld [vmem:[%s15 + $0x58] sm:$0xff]
      %v3440 = vld [vmem:[%s15 + $0x60] sm:$0xff]
      %v3441 = vld [vmem:[%s15 + $0x68] sm:$0xff]
      %v3442 = vld [vmem:[%s15 + $0x70] sm:$0xff]
      %v3443 = vld [vmem:[%s15 + $0x78] sm:$0xff]
      %v3444 = vld [vmem:[%s15 + $0x80] sm:$0xff]
      %v3445 = vld [vmem:[%s15 + $0x88] sm:$0xff]
      %v3446 = vld [vmem:[%s15 + $0x90] sm:$0xff]
      %v3447 = vld [vmem:[%s15 + $0x98] sm:$0xff]
      %v3448 = vld [vmem:[%s15 + $0xa0] sm:$0xff]
      %v3449 = vld [vmem:[%s15 + $0xa8] sm:$0xff]
      %v3450 = vld [vmem:[%s15 + $0xb0] sm:$0xff]
      %v3451 = vld [vmem:[%s15 + $0xb8] sm:$0xff]
      %v3452 = vld [vmem:[%s15 + $0xc0] sm:$0xff]
      %v3453 = vld [vmem:[%s15 + $0xc8] sm:$0xff]
      %v3454 = vld [vmem:[%s15 + $0xd0] sm:$0xff]
      %v3455 = vld [vmem:[%s15 + $0xd8] sm:$0xff]
      %v3456 = vld [vmem:[%s15 + $0xe0] sm:$0xff]
      %v3457 = vld [vmem:[%s15 + $0xe8] sm:$0xff]
      %v3458 = vld [vmem:[%s15 + $0xf0] sm:$0xff]
      %v3459 = vld [vmem:[%s15 + $0xf8] sm:$0xff]
      %v3460 = vld [vmem:[%s15 + $0x100] sm:$0xff]
      %v3461 = vld [vmem:[%s15 + $0x108] sm:$0xff]
      %v3462 = vld [vmem:[%s15 + $0x110] sm:$0xff]
      %v3463 = vld [vmem:[%s15 + $0x118] sm:$0xff]
      %v3464 = vld [vmem:[%s15 + $0x120] sm:$0xff]
      %v3465 = vld [vmem:[%s15 + $0x128] sm:$0xff]
      %v3466 = vld [vmem:[%s15 + $0x130] sm:$0xff]
      %v3467 = vld [vmem:[%s15 + $0x138] sm:$0xff]
      %v3468 = vld [vmem:[%s15 + $0x140] sm:$0xff]
      %v3469 = vld [vmem:[%s15 + $0x148] sm:$0xff]
      %v3470 = vld [vmem:[%s15 + $0x150] sm:$0xff]
      %v3471 = vld [vmem:[%s15 + $0x158] sm:$0xff]
      %v3472 = vld [vmem:[%s15 + $0x160] sm:$0xff]
      %v3473 = vld [vmem:[%s15 + $0x168] sm:$0xff]
      %v3474 = vld [vmem:[%s15 + $0x170] sm:$0xff]
      %v3475 = vld [vmem:[%s15 + $0x178] sm:$0xff]
      %v3476 = vld [vmem:[%s15 + $0x180] sm:$0xff]
      %v3477 = vld [vmem:[%s15 + $0x188] sm:$0xff]
      %v3478 = vld [vmem:[%s15 + $0x190] sm:$0xff]
      %v3479 = vld [vmem:[%s15 + $0x198] sm:$0xff]
      %v3480 = vld [vmem:[%s15 + $0x1a0] sm:$0xff]
      %v3481 = vld [vmem:[%s15 + $0x1a8] sm:$0xff]
      %v3482 = vld [vmem:[%s15 + $0x1b0] sm:$0xff]
      %v3483 = vld [vmem:[%s15 + $0x1b8] sm:$0xff]
      %v3484 = vld [vmem:[%s15 + $0x1c0] sm:$0xff]
      %v3485 = vld [vmem:[%s15 + $0x1c8] sm:$0xff]
      %v3486 = vld [vmem:[%s15 + $0x1d0] sm:$0xff]
      %v3487 = vld [vmem:[%s15 + $0x1d8] sm:$0xff]
      %v3488 = vld [vmem:[%s15 + $0x1e0] sm:$0xff]
      %v3489 = vld [vmem:[%s15 + $0x1e8] sm:$0xff]
      %v3490 = vld [vmem:[%s15 + $0x1f0] sm:$0xff]
      %v3491 = vld [vmem:[%s15 + $0x1f8] sm:$0xff]
      %v3492 = vld [vmem:[%s15 + $0x200] sm:$0xff]
      %v3493 = vld [vmem:[%s15 + $0x208] sm:$0xff]
      %v3494 = vld [vmem:[%s15 + $0x210] sm:$0xff]
      %v3495 = vld [vmem:[%s15 + $0x218] sm:$0xff]
      %v3496 = vld [vmem:[%s15 + $0x220] sm:$0xff]
      %v3497 = vld [vmem:[%s15 + $0x228] sm:$0xff]
      %v3498 = vld [vmem:[%s15 + $0x230] sm:$0xff]
      %v3499 = vld [vmem:[%s15 + $0x238] sm:$0xff]
      %v3501 = vsel %vm716, %v3427, 0
      %3503 = vmatprep.subr.mxu0 %v3429
      %3504 = vmatpush1.msra.mxu0 %v3428
      %3505 = vmatprep.subr.mxu0 %v3431
      %3506 = vmatpush1.msra.mxu0 %v3430
      %3507 = vmatprep.subr.mxu0 %v3433
      %3508 = vmatpush1.msra.mxu0 %v3432
      %3509 = vmatprep.subr.mxu0 %v3435
      %3510 = vmatpush1.msra.mxu0 %v3434
      %3511 = vmatprep.subr.mxu0 %v3437
      %3512 = vmatpush1.msra.mxu0 %v3436
      %3513 = vmatprep.subr.mxu0 %v3439
      %3514 = vmatpush1.msra.mxu0 %v3438
      %3515 = vmatprep.subr.mxu0 %v3441
      %3516 = vmatpush1.msra.mxu0 %v3440
      %3517 = vmatprep.subr.mxu0 %v3443
      %3518 = vmatpush1.msra.mxu0 %v3442
      %3519 = vmatprep.subr.mxu0 %v3445
      %3520 = vmatpush1.msra.mxu0 %v3444
      %3521 = vmatprep.subr.mxu0 %v3447
      %3522 = vmatpush1.msra.mxu0 %v3446
      %3523 = vmatprep.subr.mxu0 %v3449
      %3524 = vmatpush1.msra.mxu0 %v3448
      %3525 = vmatprep.subr.mxu0 %v3451
      %3526 = vmatpush1.msra.mxu0 %v3450
      %3527 = vmatprep.subr.mxu0 %v3453
      %3528 = vmatpush1.msra.mxu0 %v3452
      %3529 = vmatprep.subr.mxu0 %v3455
      %3530 = vmatpush1.msra.mxu0 %v3454
      %3531 = vmatprep.subr.mxu0 %v3457
      %3532 = vmatpush1.msra.mxu0 %v3456
      %3533 = vmatprep.subr.mxu0 %v3459
      %3534 = vmatpush1.msra.mxu0 %v3458
      %3535 = vmatprep.subr.mxu0 %v3461
      %3536 = vmatpush1.msra.mxu0 %v3460
      %3537 = vmatprep.subr.mxu0 %v3463
      %3538 = vmatpush1.msra.mxu0 %v3462
      %3539 = vmatprep.subr.mxu0 %v3465
      %3540 = vmatpush1.msra.mxu0 %v3464
      %3541 = vmatprep.subr.mxu0 %v3467
      %3542 = vmatpush1.msra.mxu0 %v3466
      %3543 = vmatprep.subr.mxu0 %v3469
      %3544 = vmatpush1.msra.mxu0 %v3468
      %3545 = vmatprep.subr.mxu0 %v3471
      %3546 = vmatpush1.msra.mxu0 %v3470
      %3547 = vmatprep.subr.mxu0 %v3473
      %3548 = vmatpush1.msra.mxu0 %v3472
      %3549 = vmatprep.subr.mxu0 %v3475
      %3550 = vmatpush1.msra.mxu0 %v3474
      %3551 = vmatprep.subr.mxu0 %v3477
      %3552 = vmatpush1.msra.mxu0 %v3476
      %3553 = vmatprep.subr.mxu0 %v3479
      %3554 = vmatpush1.msra.mxu0 %v3478
      %3555 = vmatprep.subr.mxu0 %v3481
      %3556 = vmatpush1.msra.mxu0 %v3480
      %3557 = vmatprep.subr.mxu0 %v3483
      %3558 = vmatpush1.msra.mxu0 %v3482
      %3559 = vmatprep.subr.mxu0 %v3485
      %3560 = vmatpush1.msra.mxu0 %v3484
      %3561 = vmatprep.subr.mxu0 %v3487
      %3562 = vmatpush1.msra.mxu0 %v3486
      %3563 = vmatprep.subr.mxu0 %v3489
      %3564 = vmatpush1.msra.mxu0 %v3488
      %3565 = vmatprep.subr.mxu0 %v3491
      %3566 = vmatpush1.msra.mxu0 %v3490
      %3567 = vmatprep.mubr.f32.mxu0 %v3426
      %3568 = vmatmul.mubr.f32.gmra.mrb[0].mxu0 %v3425
      %v3569 = vpop.f32.mrb[0].mxu0
      %v3570 = vadd.f32 0.0, %v3569
      %v3571 = vpop.f32.mrb[0].mxu0
      %v3572 = vadd.f32 0.0, %v3571
      %3573 = vdwg.mxu0
      %3574 = vmatprep.subr.mxu0 %v3493
      %3575 = vmatpush1.msra.mxu0 %v3492
      %3576 = vmatprep.subr.mxu0 %v3495
      %3577 = vmatpush1.msra.mxu0 %v3494
      %3578 = vmatprep.subr.mxu0 %v3497
      %3579 = vmatpush1.msra.mxu0 %v3496
      %3580 = vmatprep.subr.mxu0 %v3499
      %3581 = vmatpush1.msra.mxu0 %v3498
      %3582 = vmatprep.subr.mxu0 0.0
      %3583 = vmatpush1.msra.mxu0 0.0
      %3584 = vmatprep.subr.mxu0 0.0
      %3585 = vmatpush1.msra.mxu0 0.0
      %3586 = vmatprep.subr.mxu0 0.0
      %3587 = vmatpush1.msra.mxu0 0.0
      %3588 = vmatprep.subr.mxu0 0.0
      %3589 = vmatpush1.msra.mxu0 0.0
      %3590 = vmatprep.subr.mxu0 0.0
      %3591 = vmatpush1.msra.mxu0 0.0
      %3592 = vmatprep.subr.mxu0 0.0
      %3593 = vmatpush1.msra.mxu0 0.0
      %3594 = vmatprep.subr.mxu0 0.0
      %3595 = vmatpush1.msra.mxu0 0.0
      %3596 = vmatprep.subr.mxu0 0.0
      %3597 = vmatpush1.msra.mxu0 0.0
      %3598 = vmatprep.subr.mxu0 0.0
      %3599 = vmatpush1.msra.mxu0 0.0
      %3600 = vmatprep.subr.mxu0 0.0
      %3601 = vmatpush1.msra.mxu0 0.0
      %3602 = vmatprep.subr.mxu0 0.0
      %3603 = vmatpush1.msra.mxu0 0.0
      %3604 = vmatprep.subr.mxu0 0.0
      %3605 = vmatpush1.msra.mxu0 0.0
      %3606 = vmatprep.subr.mxu0 0.0
      %3607 = vmatpush1.msra.mxu0 0.0
      %3608 = vmatprep.subr.mxu0 0.0
      %3609 = vmatpush1.msra.mxu0 0.0
      %3610 = vmatprep.subr.mxu0 0.0
      %3611 = vmatpush1.msra.mxu0 0.0
      %3612 = vmatprep.subr.mxu0 0.0
      %3613 = vmatpush1.msra.mxu0 0.0
      %3614 = vmatprep.subr.mxu0 0.0
      %3615 = vmatpush1.msra.mxu0 0.0
      %3616 = vmatprep.subr.mxu0 0.0
      %3617 = vmatpush1.msra.mxu0 0.0
      %3618 = vmatprep.subr.mxu0 0.0
      %3619 = vmatpush1.msra.mxu0 0.0
      %3620 = vmatprep.subr.mxu0 0.0
      %3621 = vmatpush1.msra.mxu0 0.0
      %3622 = vmatprep.subr.mxu0 0.0
      %3623 = vmatpush1.msra.mxu0 0.0
      %3624 = vmatprep.subr.mxu0 0.0
      %3625 = vmatpush1.msra.mxu0 0.0
      %3626 = vmatprep.subr.mxu0 0.0
      %3627 = vmatpush1.msra.mxu0 0.0
      %3628 = vmatprep.subr.mxu0 0.0
      %3629 = vmatpush1.msra.mxu0 0.0
      %3630 = vmatprep.subr.mxu0 0.0
      %3631 = vmatpush1.msra.mxu0 0.0
      %3632 = vmatprep.subr.mxu0 0.0
      %3633 = vmatpush1.msra.mxu0 0.0
      %3634 = vmatprep.subr.mxu0 0.0
      %3635 = vmatpush1.msra.mxu0 0.0
      %3636 = vmatprep.subr.mxu0 0.0
      %3637 = vmatpush1.msra.mxu0 0.0
      %3638 = vmatprep.mubr.f32.mxu0 0.0
      %3639 = vmatmul.mubr.f32.gmra.mrb[0].mxu0 %v3501
      %v3640 = vpop.f32.mrb[0].mxu0
      %v3641 = vadd.f32 %v3570, %v3640
      %v3642 = vpop.f32.mrb[0].mxu0
      %v3643 = vadd.f32 %v3572, %v3642
      %3644 = vdwg.mxu0
      %v3647 = vcombine.low %v3641, %v3643
      %v3649 = vunpack.c.l.s4 1966171168
      %v3650 = vunpack.c.0.s8 %v3649
      %v3651 = vlaneseq
      %v3652 = vshrl.u32 %v3651, 7
      %v3653 = vsub.s32 %v3650, %v3652
      %v3654 = vrot.slane %v3647, %v3653
      %v3656 = vunpack.c.l.s4 1966171168
      %v3657 = vunpack.c.0.s8 %v3656
      %v3658 = vlaneseq
      %v3659 = vshrl.u32 %v3658, 7
      %v3660 = vsub.s32 %v3657, %v3659
      %v3661 = vrot.slane %v3654, %v3660
      %v3663 = vlaneseq
      %vm3664 = vcmp.ge.s32.totalorder %v3663, 0
      %vm3665 = vcmp.lt.s32.totalorder %v3663, 256
      %vm3666 = vmand %vm3664, %vm3665
      %3667 = vst.msk [vmem:[%s518] sm:$0x3] %vm3666, %v3661
      %p3668 = scmp.lt.s32.totalorder %s29, 1
      %s3669 = scalar_select %p3668, %s29, 1
      %s3670 = smul.addr %s3669, 2
      %s3671 = scalar_lea.vmem %s16, %s3670
      // Predicated region
      $region85: #{decoder_forward.1} parent=83 // pred_check
        %p3672 = pneg %p388
      $region86: #{decoder_forward.1} parent=83 // pred_check_branch
        %3674 = sbr.rel (%p3672) target = $region88
      $region87: #{decoder_forward.1} parent=83 // pred_region
        _
      $region88: #{decoder_forward.1} parent=83 // pred_fallthru
        _
    $region84: #{decoder_forward.1} parent=5 // pred_fallthru
      _
    %p3675 = scmp.le.s32.totalorder 2, %s24
    // Predicated region
    $region89: #{decoder_forward.1} parent=5 // pred_check
      %p3676 = pneg %p3675
    $region90: #{decoder_forward.1} parent=5 // pred_check_branch
      %3678 = sbr.rel (%p3676) target = $region92
    $region91: #{decoder_forward.1} parent=5 // pred_region
      %s3679 = ssub.s32 %s24, 2
      // Predicated region
      $region93: #{decoder_forward.1} parent=91 // pred_check
        %p3680 = pneg %p394
      $region94: #{decoder_forward.1} parent=91 // pred_check_branch
        %3682 = sbr.rel (%p3680) target = $region96
      $region95: #{decoder_forward.1} parent=91 // pred_region
        %p3683 = scmp.lt.s32.totalorder %s30, 1
        %s3684 = scalar_select %p3683, %s30, 1
        %s3685 = smul.addr %s3684, 2
        %s3686 = scalar_lea.vmem %s16, %s3685
      $region96: #{decoder_forward.1} parent=91 // pred_fallthru
        _
    $region92: #{decoder_forward.1} parent=5 // pred_fallthru
      _
  $region6: #{decoder_forward.1} parent=0 // loop_footer
    %s28 = sadd.s32 1, %s24
  $region7: #{decoder_forward.1} parent=0 // loop_footer_branch
    %23 = sbr.rel target = $region3
  $region8: #{decoder_forward.1} parent=0 // loop_exit
    _

</llo_original>
